<compile_context>
chip_gen: v7x
topology: tpu7x:2x2x1
jax: 0.10.0
libtpu: 0.0.40
codegen_flags: <defaults>
</compile_context>

<pallas_src>
import functools

import jax
import jax.numpy as jnp
from jax import lax
from jax.experimental import pallas as pl
from jax.experimental.pallas import tpu as pltpu

NUM_GROUPS = 32
EPS = 1e-6


def _attn_block_kernel(x_ref, wqkv_ref, wp_ref, b_ref, g_ref, gt_ref, o_ref,
                       *, group_n, defer_norm):
    # x_ref block: (batch_block, W, C), model dtype (f32 or bf16).
    x = x_ref[...].astype(jnp.float32)
    bblk, w, c = x.shape
    cd = wqkv_ref.dtype                # MXU compute dtype (bf16 default, f32 opt-in)

    # ---- GroupNorm(32 groups); affine folded into the q/k/v weights ---------
    # Per-(batch, channel) stats, aggregated to groups with the 0/1 membership
    # matrix G (C, NG) / its pre-transposed form (NG, C): no in-kernel reshapes
    # or transposes.  Two-pass variance (no cancellation).
    g_mat = g_ref[...]                 # (C, NG) f32
    g_mat_t = gt_ref[...]              # (NG, C) f32
    inv_n = 1.0 / group_n

    sum_c = jnp.sum(x, axis=1)                                              # (Bblk, C)
    mean_g = jnp.dot(sum_c, g_mat, preferred_element_type=jnp.float32) * inv_n
    mean_c = jnp.dot(mean_g, g_mat_t, preferred_element_type=jnp.float32)   # (Bblk, C)
    xc = x - mean_c[:, None, :]
    sq_c = jnp.sum(xc * xc, axis=1)                                         # (Bblk, C)
    var_g = jnp.dot(sq_c, g_mat, preferred_element_type=jnp.float32) * inv_n
    var_c = jnp.dot(var_g, g_mat_t, preferred_element_type=jnp.float32)     # (Bblk, C)
    h = xc * lax.rsqrt(var_c + EPS)[:, None, :]                             # (Bblk, W, C) f32

    # ---- fused q/k/v 1x1 conv: one (Bblk*W, C) @ (C, 3C) MXU pass -----------
    # gamma/beta and the C**-0.5 scale are already folded into wqkv and the
    # packed biases (done once in the wrapper at trace time).
    b_all = b_ref[...]                                                      # (4, C) f32
    h2 = h.reshape(bblk * w, c).astype(cd)
    qkv = jnp.dot(h2, wqkv_ref[...], preferred_element_type=jnp.float32)    # (Bblk*W, 3C)
    q3 = (qkv[:, 0 * c:1 * c] + b_all[0:1, :]).reshape(bblk, w, c)
    k3 = (qkv[:, 1 * c:2 * c] + b_all[1:2, :]).reshape(bblk, w, c)
    v3 = (qkv[:, 2 * c:3 * c] + b_all[2:3, :]).reshape(bblk, w, c)

    # ---- attention over width (batched dot_general, no in-kernel .T) --------
    # s[b, i, j] = sum_c q[b, i, c] * k[b, j, c]   (== torch.bmm(q^T, k) * C^-0.5)
    s = lax.dot_general(q3.astype(cd), k3.astype(cd),
                        dimension_numbers=(((2,), (2,)), ((0,), (0,))),
                        preferred_element_type=jnp.float32)                 # (Bblk, W, W)
    s_max = jnp.max(s, axis=-1, keepdims=True)
    p = jnp.exp(s - s_max)
    inv_denom = pl.reciprocal(jnp.sum(p, axis=-1, keepdims=True), approx=True)

    if not defer_norm:
        # small W: normalize the (W, W) probabilities directly.
        p = p * inv_denom

    # out[b, i, c] = sum_j p[b, i, j] * v[b, j, c]   (== torch.bmm(v, p^T))
    out3 = lax.dot_general(p.astype(cd), v3.astype(cd),
                           dimension_numbers=(((2,), (1,)), ((0,), (0,))),
                           preferred_element_type=jnp.float32)              # (Bblk, W, C)
    if defer_norm:
        # large W (W >= C): row scaling commutes with P@V; scale (W, C) not (W, W).
        out3 = out3 * inv_denom

    # ---- output projection + residual (residual stays in f32) ---------------
    out2 = out3.reshape(bblk * w, c).astype(cd)
    proj = jnp.dot(out2, wp_ref[...], preferred_element_type=jnp.float32) + b_all[3:4, :]
    o_ref[...] = (x + proj.reshape(bblk, w, c)).astype(o_ref.dtype)


def _fold_params(params, C, compute_dtype):
    """Trace-time constant folding: Conv1d weights -> matmul weights with the GroupNorm
    affine and the C**-0.5 attention scale baked in; q/k/v fused into one (C, 3C)."""
    f32 = jnp.float32
    gamma = params["gamma"].astype(f32)
    beta = params["beta"].astype(f32)
    scale = float(C) ** -0.5

    def w_t(name):  # Conv1d weight (out, in, 1) -> matmul weight (in, out)
        return jnp.transpose(params[name][:, :, 0], (1, 0)).astype(f32)

    wq_t, wk_t, wv_t, wp_t = w_t("wq"), w_t("wk"), w_t("wv"), w_t("wp")

    wq = (gamma[:, None] * wq_t) * scale
    wk = gamma[:, None] * wk_t
    wv = gamma[:, None] * wv_t
    bq = (beta @ wq_t + params["bq"].astype(f32)) * scale
    bk = beta @ wk_t + params["bk"].astype(f32)
    bv = beta @ wv_t + params["bv"].astype(f32)
    bp = params["bp"].astype(f32)

    w_qkv = jnp.concatenate([wq, wk, wv], axis=1).astype(compute_dtype)   # (C, 3C)
    biases = jnp.stack([bq, bk, bv, bp], axis=0)                          # (4, C), f32
    return w_qkv, wp_t.astype(compute_dtype), biases


def _vmem_capacity_bytes():
    try:
        return int(pltpu.get_tpu_info().vmem_capacity_bytes)
    except Exception:
        return 128 << 20   # assume a 128-MiB part if the query is unavailable


def _pick_batch_block(B, W, C, *, x_itemsize, const_bytes, vmem_bytes=None):
    """Largest divisor of B whose fused M-dim (Bblk*W) reaches the per-generation row
    target without blowing the per-step VMEM budget (constants included); keeps >= 2
    grid steps per TensorCore where possible (v7x has 2 TCs and only 64 MiB VMEM)."""
    if vmem_bytes is None:
        vmem_bytes = _vmem_capacity_bytes()
    small_vmem = vmem_bytes <= (64 << 20)                    # v7x
    budget = ((16 << 20) if small_vmem else (32 << 20)) - const_bytes
    target_rows = 256 if small_vmem else 512
    min_rows = 128
    min_steps = 4 if small_vmem else 2                       # >= 2 per TC on v7x
    best = 1
    for d in range(1, B + 1):
        if B % d:
            continue
        work = (4 * d * W * C * x_itemsize        # x / out blocks, double-buffered
                + 9 * d * W * C * 4               # f32 intermediates (h, q, k, v, out, proj)
                + 2 * d * W * W * 4)              # score + prob matrices
        if work > budget:
            break
        if (B // d) < min_steps and best * W >= min_rows:
            break
        best = d
        if d * W >= target_rows:
            break
    return best


def attn_block_pallas_nwc(x_nwc, params, *, compute_dtype=jnp.bfloat16,
                          batch_block=None):
    """Transpose-free path: x_nwc is (B, W, C) in the model dtype (f32 or bf16).
    The output keeps that dtype; GroupNorm stats / softmax / residual are f32 inside."""
    B, W, C = x_nwc.shape
    assert C % NUM_GROUPS == 0, "channels must be divisible by 32 (GroupNorm)"
    gs = C // NUM_GROUPS

    w_qkv, wp, biases = _fold_params(params, C, compute_dtype)

    # Group membership matrix and its transpose, built once at trace time.
    g_mat = (jnp.arange(C)[:, None] // gs == jnp.arange(NUM_GROUPS)[None, :]
             ).astype(jnp.float32)                          # (C, NG)
    g_mat_t = jnp.transpose(g_mat)                          # (NG, C)

    x_itemsize = jnp.dtype(x_nwc.dtype).itemsize
    w_itemsize = jnp.dtype(compute_dtype).itemsize
    # Conservative: constants counted double-buffered even when Buffered(1) applies.
    const_bytes = 2 * (4 * C * C * w_itemsize + (4 * C + 2 * NUM_GROUPS * C) * 4)
    vmem_bytes = _vmem_capacity_bytes()
    if batch_block is None:
        batch_block = _pick_batch_block(B, W, C, x_itemsize=x_itemsize,
                                        const_bytes=const_bytes,
                                        vmem_bytes=vmem_bytes)
    assert B % batch_block == 0

    kernel = functools.partial(_attn_block_kernel,
                               group_n=float(W * gs),
                               defer_norm=bool(W >= C))

    def build(single_buffer_consts):
        def const(shape):
            idx = lambda b: (0,) * len(shape)
            if single_buffer_consts:
                # Constants are revisited every grid step; double-buffering them is
                # pure VMEM waste (matters most on v7x's 64 MiB at large C).
                return pl.BlockSpec(shape, idx, pipeline_mode=pl.Buffered(1))
            return pl.BlockSpec(shape, idx)

        return pl.pallas_call(
            kernel,
            out_shape=jax.ShapeDtypeStruct((B, W, C), x_nwc.dtype),
            grid_spec=pltpu.PrefetchScalarGridSpec(
                num_scalar_prefetch=0,
                grid=(B // batch_block,),
                in_specs=[
                    pl.BlockSpec((batch_block, W, C), lambda b: (b, 0, 0)),   # x
                    const((C, 3 * C)),                                        # fused wq|wk|wv
                    const((C, C)),                                            # w_proj
                    const((4, C)),                                            # packed biases
                    const((C, NUM_GROUPS)),                                   # group matrix
                    const((NUM_GROUPS, C)),                                   # its transpose
                ],
                out_specs=pl.BlockSpec((batch_block, W, C), lambda b: (b, 0, 0)),
            ),
            compiler_params=pltpu.CompilerParams(
                dimension_semantics=("parallel",),
                vmem_limit_bytes=(32 << 20) if vmem_bytes <= (64 << 20) else (64 << 20)),
        )

    args = (x_nwc, w_qkv, wp, biases, g_mat, g_mat_t)
    # Eager call: fall back to default double-buffered constants if this JAX build
    # rejects BlockSpec(pipeline_mode=pl.Buffered(1)).
    try:
        return build(True)(*args)
    except Exception:
        return build(False)(*args)


def attn_block_pallas(x_ncw, params, **kwargs):
    """PyTorch-compatible NCW path: x_ncw is (B, C, W), matching the module."""
    out_nwc = attn_block_pallas_nwc(jnp.transpose(x_ncw, (0, 2, 1)), params, **kwargs)
    return jnp.transpose(out_nwc, (0, 2, 1))                # back to (B, C, W)


def attn_block_reference(x, params):
    """Pure-JAX reference mirroring the PyTorch forward, for verification."""
    B, C, W = x.shape
    gs = C // NUM_GROUPS
    xg = x.reshape(B, NUM_GROUPS, gs * W)
    mean = xg.mean(axis=-1, keepdims=True)
    var = xg.var(axis=-1, keepdims=True)
    h = ((xg - mean) / jnp.sqrt(var + EPS)).reshape(B, C, W)
    h = h * params["gamma"][None, :, None] + params["beta"][None, :, None]

    def conv1(w, b, t):
        return jnp.einsum("oi,biw->bow", w[:, :, 0], t) + b[None, :, None]

    q = conv1(params["wq"], params["bq"], h)
    k = conv1(params["wk"], params["bk"], h)
    v = conv1(params["wv"], params["bv"], h)
    w_ = jnp.einsum("bci,bcj->bij", q, k) * (float(C) ** -0.5)
    w_ = jax.nn.softmax(w_, axis=2)
    h_ = jnp.einsum("bcj,bij->bci", v, w_)
    h_ = conv1(params["wp"], params["bp"], h_)
    return x + h_


def _make_params(key, C):
    keys = jax.random.split(key, 9)
    return {
        "wq": 0.05 * jax.random.normal(keys[0], (C, C, 1), dtype=jnp.float32),
        "wk": 0.05 * jax.random.normal(keys[1], (C, C, 1), dtype=jnp.float32),
        "wv": 0.05 * jax.random.normal(keys[2], (C, C, 1), dtype=jnp.float32),
        "wp": 0.05 * jax.random.normal(keys[3], (C, C, 1), dtype=jnp.float32),
        "bq": 0.01 * jax.random.normal(keys[4], (C,), dtype=jnp.float32),
        "bk": 0.01 * jax.random.normal(keys[5], (C,), dtype=jnp.float32),
        "bv": 0.01 * jax.random.normal(keys[6], (C,), dtype=jnp.float32),
        "bp": 0.01 * jax.random.normal(keys[7], (C,), dtype=jnp.float32),
        "gamma": 1.0 + 0.1 * jax.random.normal(keys[8], (C,), dtype=jnp.float32),
        "beta": 0.05 * jnp.ones((C,), dtype=jnp.float32),
    }


if __name__ == "__main__":
    root = jax.random.PRNGKey(0)
    k_a, k_b, k_xa, k_xb = jax.random.split(root, 4)

    # ---- Case 1: W < C (normalized-probabilities path), lane-dense C=128 ------
    B, C, W = 16, 128, 16
    params = _make_params(k_a, C)
    x = jax.random.normal(k_xa, (B, C, W), dtype=jnp.float32)
    ref = jax.block_until_ready(attn_block_reference(x, params))

    # Default bf16 MXU path.
    out_bf16 = jax.block_until_ready(attn_block_pallas(x, params))
    assert out_bf16.shape == (B, C, W) and out_bf16.dtype == jnp.float32
    err = float(jnp.max(jnp.abs(out_bf16 - ref)))
    assert jnp.allclose(out_bf16, ref, atol=5e-2, rtol=5e-2), err

    # Opt-in f32 MXU path (tight tolerance).
    out_f32 = jax.block_until_ready(
        attn_block_pallas(x, params, compute_dtype=jnp.float32))
    err = float(jnp.max(jnp.abs(out_f32 - ref)))
    assert jnp.allclose(out_f32, ref, atol=2e-3, rtol=2e-3), err

    # bf16 activations in HBM (streamed operands stay bf16; stats/residual in f32).
    x_bf16 = x.astype(jnp.bfloat16)
    ref_bf = jax.block_until_ready(
        attn_block_reference(x_bf16.astype(jnp.float32), params))
    out_io_bf16 = jax.block_until_ready(attn_block_pallas(x_bf16, params))
    assert out_io_bf16.dtype == jnp.bfloat16
    err = float(jnp.max(jnp.abs(out_io_bf16.astype(jnp.float32) - ref_bf)))
    assert jnp.allclose(out_io_bf16.astype(jnp.float32), ref_bf,
                        atol=7.5e-2, rtol=7.5e-2), err

    # ---- Case 2: W >= C (deferred softmax-normalization path) -----------------
    B2, C2, W2 = 4, 64, 128
    params2 = _make_params(k_b, C2)
    x2 = jax.random.normal(k_xb, (B2, C2, W2), dtype=jnp.float32)
    ref2 = jax.block_until_ready(attn_block_reference(x2, params2))

    out2_f32 = jax.block_until_ready(
        attn_block_pallas(x2, params2, compute_dtype=jnp.float32))
    err = float(jnp.max(jnp.abs(out2_f32 - ref2)))
    assert jnp.allclose(out2_f32, ref2, atol=5e-3, rtol=5e-3), err

    out2_bf16 = jax.block_until_ready(attn_block_pallas(x2, params2))
    err = float(jnp.max(jnp.abs(out2_bf16 - ref2)))
    assert jnp.allclose(out2_bf16, ref2, atol=5e-2, rtol=5e-2), err

    print("KERNEL_OK")
</pallas_src>

<mosaic_0001>
module attributes {stable_mosaic.version = 11 : i64} {
  func.func @_attn_block_kernel(%arg0: i32, %arg1: memref<8x16x128xf32, #tpu.memory_space<vmem>>, %arg2: memref<128x384xbf16, #tpu.memory_space<vmem>>, %arg3: memref<128x128xbf16, #tpu.memory_space<vmem>>, %arg4: memref<4x128xf32, #tpu.memory_space<vmem>>, %arg5: memref<128x32xf32, #tpu.memory_space<vmem>>, %arg6: memref<32x128xf32, #tpu.memory_space<vmem>>, %arg7: memref<8x16x128xf32, #tpu.memory_space<vmem>>) attributes {dimension_semantics = [#tpu.dimension_semantics<parallel>], iteration_bounds = array<i64: 2>, scalar_prefetch = 0 : i64, scratch_operands = 0 : i64, tpu.core_type = #tpu.core_type<tc>, window_params = [{transform_indices = @transform_0, window_bounds = array<i64: 8, 16, 128>}, {pipeline_mode = #tpu.pipeline_mode<synchronous>, transform_indices = @transform_1, window_bounds = array<i64: 128, 384>}, {pipeline_mode = #tpu.pipeline_mode<synchronous>, transform_indices = @transform_2, window_bounds = array<i64: 128, 128>}, {pipeline_mode = #tpu.pipeline_mode<synchronous>, transform_indices = @transform_3, window_bounds = array<i64: 4, 128>}, {pipeline_mode = #tpu.pipeline_mode<synchronous>, transform_indices = @transform_4, window_bounds = array<i64: 128, 32>}, {pipeline_mode = #tpu.pipeline_mode<synchronous>, transform_indices = @transform_5, window_bounds = array<i64: 32, 128>}, {transform_indices = @transform_6, window_bounds = array<i64: 8, 16, 128>}]} {
    %c0 = arith.constant 0 : index
    %c0_0 = arith.constant 0 : index
    %c0_1 = arith.constant 0 : index
    %0 = vector.load %arg1[%c0, %c0_0, %c0_1] : memref<8x16x128xf32, #tpu.memory_space<vmem>>, vector<8x16x128xf32>
    %c0_2 = arith.constant 0 : index
    %c0_3 = arith.constant 0 : index
    %1 = vector.load %arg5[%c0_2, %c0_3] : memref<128x32xf32, #tpu.memory_space<vmem>>, vector<128x32xf32>
    %c0_4 = arith.constant 0 : index
    %c0_5 = arith.constant 0 : index
    %2 = vector.load %arg6[%c0_4, %c0_5] : memref<32x128xf32, #tpu.memory_space<vmem>>, vector<32x128xf32>
    %cst = arith.constant dense<0.000000e+00> : vector<8x128xf32>
    %3 = vector.multi_reduction <add>, %0, %cst [1] : vector<8x16x128xf32> to vector<8x128xf32>
    %cst_6 = arith.constant dense<0.000000e+00> : vector<8x32xf32>
    %4 = tpu.matmul %3, %1, %cst_6 {dimension_numbers = #tpu.dot_dimension_numbers<[1], [0], [0], [1], [0, 0, 1, 1], [], []>} : vector<8x128xf32>, vector<128x32xf32>, vector<8x32xf32> -> vector<8x32xf32>
    %cst_7 = arith.constant 1.562500e-02 : f32
    %5 = vector.broadcast %cst_7 : f32 to vector<8x32xf32>
    %6 = arith.mulf %4, %5 : vector<8x32xf32>
    %cst_8 = arith.constant dense<0.000000e+00> : vector<8x128xf32>
    %7 = tpu.matmul %6, %2, %cst_8 {dimension_numbers = #tpu.dot_dimension_numbers<[1], [0], [0], [1], [0, 0, 1, 1], [], []>} : vector<8x32xf32>, vector<32x128xf32>, vector<8x128xf32> -> vector<8x128xf32>
    %8 = vector.shape_cast %7 : vector<8x128xf32> to vector<8x1x128xf32>
    %9 = vector.broadcast %8 : vector<8x1x128xf32> to vector<8x16x128xf32>
    %10 = arith.subf %0, %9 : vector<8x16x128xf32>
    %11 = arith.mulf %10, %10 : vector<8x16x128xf32>
    %cst_9 = arith.constant dense<0.000000e+00> : vector<8x128xf32>
    %12 = vector.multi_reduction <add>, %11, %cst_9 [1] : vector<8x16x128xf32> to vector<8x128xf32>
    %cst_10 = arith.constant dense<0.000000e+00> : vector<8x32xf32>
    %13 = tpu.matmul %12, %1, %cst_10 {dimension_numbers = #tpu.dot_dimension_numbers<[1], [0], [0], [1], [0, 0, 1, 1], [], []>} : vector<8x128xf32>, vector<128x32xf32>, vector<8x32xf32> -> vector<8x32xf32>
    %cst_11 = arith.constant 1.562500e-02 : f32
    %14 = vector.broadcast %cst_11 : f32 to vector<8x32xf32>
    %15 = arith.mulf %13, %14 : vector<8x32xf32>
    %cst_12 = arith.constant dense<0.000000e+00> : vector<8x128xf32>
    %16 = tpu.matmul %15, %2, %cst_12 {dimension_numbers = #tpu.dot_dimension_numbers<[1], [0], [0], [1], [0, 0, 1, 1], [], []>} : vector<8x32xf32>, vector<32x128xf32>, vector<8x128xf32> -> vector<8x128xf32>
    %cst_13 = arith.constant 9.99999997E-7 : f32
    %17 = vector.broadcast %cst_13 : f32 to vector<8x128xf32>
    %18 = arith.addf %16, %17 : vector<8x128xf32>
    %19 = math.rsqrt %18 : vector<8x128xf32>
    %20 = vector.shape_cast %19 : vector<8x128xf32> to vector<8x1x128xf32>
    %21 = vector.broadcast %20 : vector<8x1x128xf32> to vector<8x16x128xf32>
    %22 = arith.mulf %10, %21 : vector<8x16x128xf32>
    %c0_14 = arith.constant 0 : index
    %c0_15 = arith.constant 0 : index
    %23 = vector.load %arg4[%c0_14, %c0_15] : memref<4x128xf32, #tpu.memory_space<vmem>>, vector<4x128xf32>
    %24 = vector.shape_cast %22 : vector<8x16x128xf32> to vector<128x128xf32>
    %25 = arith.truncf %24 : vector<128x128xf32> to vector<128x128xbf16>
    %c0_16 = arith.constant 0 : index
    %c0_17 = arith.constant 0 : index
    %26 = vector.load %arg2[%c0_16, %c0_17] : memref<128x384xbf16, #tpu.memory_space<vmem>>, vector<128x384xbf16>
    %cst_18 = arith.constant dense<0.000000e+00> : vector<128x384xf32>
    %27 = tpu.matmul %25, %26, %cst_18 {dimension_numbers = #tpu.dot_dimension_numbers<[1], [0], [0], [1], [0, 0, 1, 1], [], []>} : vector<128x128xbf16>, vector<128x384xbf16>, vector<128x384xf32> -> vector<128x384xf32>
    %28 = vector.extract_strided_slice %27 {offsets = [0, 0], sizes = [128, 128], strides = [1, 1]} : vector<128x384xf32> to vector<128x128xf32>
    %29 = vector.extract_strided_slice %23 {offsets = [0, 0], sizes = [1, 128], strides = [1, 1]} : vector<4x128xf32> to vector<1x128xf32>
    %30 = vector.broadcast %29 : vector<1x128xf32> to vector<128x128xf32>
    %31 = arith.addf %28, %30 : vector<128x128xf32>
    %32 = vector.shape_cast %31 : vector<128x128xf32> to vector<8x16x128xf32>
    %33 = vector.extract_strided_slice %27 {offsets = [0, 128], sizes = [128, 128], strides = [1, 1]} : vector<128x384xf32> to vector<128x128xf32>
    %34 = vector.extract_strided_slice %23 {offsets = [1, 0], sizes = [1, 128], strides = [1, 1]} : vector<4x128xf32> to vector<1x128xf32>
    %35 = vector.broadcast %34 : vector<1x128xf32> to vector<128x128xf32>
    %36 = arith.addf %33, %35 : vector<128x128xf32>
    %37 = vector.shape_cast %36 : vector<128x128xf32> to vector<8x16x128xf32>
    %38 = vector.extract_strided_slice %27 {offsets = [0, 256], sizes = [128, 128], strides = [1, 1]} : vector<128x384xf32> to vector<128x128xf32>
    %39 = vector.extract_strided_slice %23 {offsets = [2, 0], sizes = [1, 128], strides = [1, 1]} : vector<4x128xf32> to vector<1x128xf32>
    %40 = vector.broadcast %39 : vector<1x128xf32> to vector<128x128xf32>
    %41 = arith.addf %38, %40 : vector<128x128xf32>
    %42 = vector.shape_cast %41 : vector<128x128xf32> to vector<8x16x128xf32>
    %43 = arith.truncf %32 : vector<8x16x128xf32> to vector<8x16x128xbf16>
    %44 = arith.truncf %37 : vector<8x16x128xf32> to vector<8x16x128xbf16>
    %cst_19 = arith.constant dense<0.000000e+00> : vector<8x16x16xf32>
    %45 = tpu.matmul %43, %44, %cst_19 {dimension_numbers = #tpu.dot_dimension_numbers<[2], [2], [1], [1], [0, 0, 0, 1, 1, 1], [0], [0]>} : vector<8x16x128xbf16>, vector<8x16x128xbf16>, vector<8x16x16xf32> -> vector<8x16x16xf32>
    %cst_20 = arith.constant dense<0xFF800000> : vector<8x16xf32>
    %46 = vector.multi_reduction <maximumf>, %45, %cst_20 [2] : vector<8x16x16xf32> to vector<8x16xf32>
    %47 = vector.shape_cast %46 : vector<8x16xf32> to vector<8x16x1xf32>
    %48 = vector.broadcast %47 : vector<8x16x1xf32> to vector<8x16x16xf32>
    %49 = arith.subf %45, %48 : vector<8x16x16xf32>
    %50 = math.exp %49 : vector<8x16x16xf32>
    %cst_21 = arith.constant dense<0.000000e+00> : vector<8x16xf32>
    %51 = vector.multi_reduction <add>, %50, %cst_21 [2] : vector<8x16x16xf32> to vector<8x16xf32>
    %52 = vector.shape_cast %51 : vector<8x16xf32> to vector<8x16x1xf32>
    %53 = tpu.reciprocal %52 {approx = true} : vector<8x16x1xf32> -> vector<8x16x1xf32>
    %54 = vector.broadcast %53 : vector<8x16x1xf32> to vector<8x16x16xf32>
    %55 = arith.mulf %50, %54 : vector<8x16x16xf32>
    %56 = arith.truncf %55 : vector<8x16x16xf32> to vector<8x16x16xbf16>
    %57 = arith.truncf %42 : vector<8x16x128xf32> to vector<8x16x128xbf16>
    %cst_22 = arith.constant dense<0.000000e+00> : vector<8x16x128xf32>
    %58 = tpu.matmul %56, %57, %cst_22 {dimension_numbers = #tpu.dot_dimension_numbers<[2], [1], [1], [2], [0, 0, 0, 1, 1, 2], [0], [0]>} : vector<8x16x16xbf16>, vector<8x16x128xbf16>, vector<8x16x128xf32> -> vector<8x16x128xf32>
    %59 = vector.shape_cast %58 : vector<8x16x128xf32> to vector<128x128xf32>
    %60 = arith.truncf %59 : vector<128x128xf32> to vector<128x128xbf16>
    %c0_23 = arith.constant 0 : index
    %c0_24 = arith.constant 0 : index
    %61 = vector.load %arg3[%c0_23, %c0_24] : memref<128x128xbf16, #tpu.memory_space<vmem>>, vector<128x128xbf16>
    %cst_25 = arith.constant dense<0.000000e+00> : vector<128x128xf32>
    %62 = tpu.matmul %60, %61, %cst_25 {dimension_numbers = #tpu.dot_dimension_numbers<[1], [0], [0], [1], [0, 0, 1, 1], [], []>} : vector<128x128xbf16>, vector<128x128xbf16>, vector<128x128xf32> -> vector<128x128xf32>
    %63 = vector.extract_strided_slice %23 {offsets = [3, 0], sizes = [1, 128], strides = [1, 1]} : vector<4x128xf32> to vector<1x128xf32>
    %64 = vector.broadcast %63 : vector<1x128xf32> to vector<128x128xf32>
    %65 = arith.addf %62, %64 : vector<128x128xf32>
    %66 = vector.shape_cast %65 : vector<128x128xf32> to vector<8x16x128xf32>
    %67 = arith.addf %0, %66 : vector<8x16x128xf32>
    %c0_26 = arith.constant 0 : index
    %c0_27 = arith.constant 0 : index
    %c0_28 = arith.constant 0 : index
    %68 = vector.load %arg7[%c0_26, %c0_27, %c0_28] : memref<8x16x128xf32, #tpu.memory_space<vmem>>, vector<8x16x128xf32>
    tpu.vector_store %arg7[%c0_26, %c0_27, %c0_28], %67 {strides = array<i32>} : memref<8x16x128xf32, #tpu.memory_space<vmem>>, vector<8x16x128xf32>,
    return
  }
  func.func @transform_0(%arg0: i32) -> (i32, i32, i32) {
    %c0_i32 = arith.constant 0 : i32
    %c0_i32_0 = arith.constant 0 : i32
    %c0_i32_1 = arith.constant 0 : i32
    return %arg0, %c0_i32, %c0_i32_0 : i32, i32, i32
  }
  func.func @transform_1(%arg0: i32) -> (i32, i32) {
    %c0_i32 = arith.constant 0 : i32
    %c0_i32_0 = arith.constant 0 : i32
    %c0_i32_1 = arith.constant 0 : i32
    return %c0_i32, %c0_i32_0 : i32, i32
  }
  func.func @transform_2(%arg0: i32) -> (i32, i32) {
    %c0_i32 = arith.constant 0 : i32
    %c0_i32_0 = arith.constant 0 : i32
    %c0_i32_1 = arith.constant 0 : i32
    return %c0_i32, %c0_i32_0 : i32, i32
  }
  func.func @transform_3(%arg0: i32) -> (i32, i32) {
    %c0_i32 = arith.constant 0 : i32
    %c0_i32_0 = arith.constant 0 : i32
    %c0_i32_1 = arith.constant 0 : i32
    return %c0_i32, %c0_i32_0 : i32, i32
  }
  func.func @transform_4(%arg0: i32) -> (i32, i32) {
    %c0_i32 = arith.constant 0 : i32
    %c0_i32_0 = arith.constant 0 : i32
    %c0_i32_1 = arith.constant 0 : i32
    return %c0_i32, %c0_i32_0 : i32, i32
  }
  func.func @transform_5(%arg0: i32) -> (i32, i32) {
    %c0_i32 = arith.constant 0 : i32
    %c0_i32_0 = arith.constant 0 : i32
    %c0_i32_1 = arith.constant 0 : i32
    return %c0_i32, %c0_i32_0 : i32, i32
  }
  func.func @transform_6(%arg0: i32) -> (i32, i32, i32) {
    %c0_i32 = arith.constant 0 : i32
    %c0_i32_0 = arith.constant 0 : i32
    %c0_i32_1 = arith.constant 0 : i32
    return %arg0, %c0_i32, %c0_i32_0 : i32, i32, i32
  }
}

module attributes {stable_mosaic.version = 11 : i64} {
  func.func @_attn_block_kernel(%arg0: i32, %arg1: memref<8x16x128xf32, #tpu.memory_space<vmem>>, %arg2: memref<128x384xbf16, #tpu.memory_space<vmem>>, %arg3: memref<128x128xbf16, #tpu.memory_space<vmem>>, %arg4: memref<4x128xf32, #tpu.memory_space<vmem>>, %arg5: memref<128x32xf32, #tpu.memory_space<vmem>>, %arg6: memref<32x128xf32, #tpu.memory_space<vmem>>, %arg7: memref<8x16x128xf32, #tpu.memory_space<vmem>>) attributes {dimension_semantics = [#tpu.dimension_semantics<parallel>], iteration_bounds = array<i64: 2>, scalar_prefetch = 0 : i64, scratch_operands = 0 : i64, tpu.core_type = #tpu.core_type<tc>, window_params = [{transform_indices = @transform_0, window_bounds = array<i64: 8, 16, 128>}, {pipeline_mode = #tpu.pipeline_mode<synchronous>, transform_indices = @transform_1, window_bounds = array<i64: 128, 384>}, {pipeline_mode = #tpu.pipeline_mode<synchronous>, transform_indices = @transform_2, window_bounds = array<i64: 128, 128>}, {pipeline_mode = #tpu.pipeline_mode<synchronous>, transform_indices = @transform_3, window_bounds = array<i64: 4, 128>}, {pipeline_mode = #tpu.pipeline_mode<synchronous>, transform_indices = @transform_4, window_bounds = array<i64: 128, 32>}, {pipeline_mode = #tpu.pipeline_mode<synchronous>, transform_indices = @transform_5, window_bounds = array<i64: 32, 128>}, {transform_indices = @transform_6, window_bounds = array<i64: 8, 16, 128>}]} {
    %c0 = arith.constant 0 : index
    %c0_0 = arith.constant 0 : index
    %c0_1 = arith.constant 0 : index
    %0 = vector.load %arg1[%c0, %c0_0, %c0_1] : memref<8x16x128xf32, #tpu.memory_space<vmem>>, vector<8x16x128xf32>
    %c0_2 = arith.constant 0 : index
    %c0_3 = arith.constant 0 : index
    %1 = vector.load %arg5[%c0_2, %c0_3] : memref<128x32xf32, #tpu.memory_space<vmem>>, vector<128x32xf32>
    %c0_4 = arith.constant 0 : index
    %c0_5 = arith.constant 0 : index
    %2 = vector.load %arg6[%c0_4, %c0_5] : memref<32x128xf32, #tpu.memory_space<vmem>>, vector<32x128xf32>
    %cst = arith.constant dense<0.000000e+00> : vector<8x128xf32>
    %3 = vector.multi_reduction <add>, %0, %cst [1] : vector<8x16x128xf32> to vector<8x128xf32>
    %cst_6 = arith.constant dense<0.000000e+00> : vector<8x32xf32>
    %4 = tpu.matmul %3, %1, %cst_6 {dimension_numbers = #tpu.dot_dimension_numbers<[1], [0], [0], [1], [0, 0, 1, 1], [], []>} : vector<8x128xf32>, vector<128x32xf32>, vector<8x32xf32> -> vector<8x32xf32>
    %cst_7 = arith.constant 1.562500e-02 : f32
    %5 = vector.broadcast %cst_7 : f32 to vector<8x32xf32>
    %6 = arith.mulf %4, %5 : vector<8x32xf32>
    %cst_8 = arith.constant dense<0.000000e+00> : vector<8x128xf32>
    %7 = tpu.matmul %6, %2, %cst_8 {dimension_numbers = #tpu.dot_dimension_numbers<[1], [0], [0], [1], [0, 0, 1, 1], [], []>} : vector<8x32xf32>, vector<32x128xf32>, vector<8x128xf32> -> vector<8x128xf32>
    %8 = vector.shape_cast %7 : vector<8x128xf32> to vector<8x1x128xf32>
    %9 = vector.broadcast %8 : vector<8x1x128xf32> to vector<8x16x128xf32>
    %10 = arith.subf %0, %9 : vector<8x16x128xf32>
    %11 = arith.mulf %10, %10 : vector<8x16x128xf32>
    %cst_9 = arith.constant dense<0.000000e+00> : vector<8x128xf32>
    %12 = vector.multi_reduction <add>, %11, %cst_9 [1] : vector<8x16x128xf32> to vector<8x128xf32>
    %cst_10 = arith.constant dense<0.000000e+00> : vector<8x32xf32>
    %13 = tpu.matmul %12, %1, %cst_10 {dimension_numbers = #tpu.dot_dimension_numbers<[1], [0], [0], [1], [0, 0, 1, 1], [], []>} : vector<8x128xf32>, vector<128x32xf32>, vector<8x32xf32> -> vector<8x32xf32>
    %cst_11 = arith.constant 1.562500e-02 : f32
    %14 = vector.broadcast %cst_11 : f32 to vector<8x32xf32>
    %15 = arith.mulf %13, %14 : vector<8x32xf32>
    %cst_12 = arith.constant dense<0.000000e+00> : vector<8x128xf32>
    %16 = tpu.matmul %15, %2, %cst_12 {dimension_numbers = #tpu.dot_dimension_numbers<[1], [0], [0], [1], [0, 0, 1, 1], [], []>} : vector<8x32xf32>, vector<32x128xf32>, vector<8x128xf32> -> vector<8x128xf32>
    %cst_13 = arith.constant 9.99999997E-7 : f32
    %17 = vector.broadcast %cst_13 : f32 to vector<8x128xf32>
    %18 = arith.addf %16, %17 : vector<8x128xf32>
    %19 = math.rsqrt %18 : vector<8x128xf32>
    %20 = vector.shape_cast %19 : vector<8x128xf32> to vector<8x1x128xf32>
    %21 = vector.broadcast %20 : vector<8x1x128xf32> to vector<8x16x128xf32>
    %22 = arith.mulf %10, %21 : vector<8x16x128xf32>
    %c0_14 = arith.constant 0 : index
    %c0_15 = arith.constant 0 : index
    %23 = vector.load %arg4[%c0_14, %c0_15] : memref<4x128xf32, #tpu.memory_space<vmem>>, vector<4x128xf32>
    %24 = vector.shape_cast %22 : vector<8x16x128xf32> to vector<128x128xf32>
    %25 = arith.truncf %24 : vector<128x128xf32> to vector<128x128xbf16>
    %c0_16 = arith.constant 0 : index
    %c0_17 = arith.constant 0 : index
    %26 = vector.load %arg2[%c0_16, %c0_17] : memref<128x384xbf16, #tpu.memory_space<vmem>>, vector<128x384xbf16>
    %cst_18 = arith.constant dense<0.000000e+00> : vector<128x384xf32>
    %27 = tpu.matmul %25, %26, %cst_18 {dimension_numbers = #tpu.dot_dimension_numbers<[1], [0], [0], [1], [0, 0, 1, 1], [], []>} : vector<128x128xbf16>, vector<128x384xbf16>, vector<128x384xf32> -> vector<128x384xf32>
    %28 = vector.extract_strided_slice %27 {offsets = [0, 0], sizes = [128, 128], strides = [1, 1]} : vector<128x384xf32> to vector<128x128xf32>
    %29 = vector.extract_strided_slice %23 {offsets = [0, 0], sizes = [1, 128], strides = [1, 1]} : vector<4x128xf32> to vector<1x128xf32>
    %30 = vector.broadcast %29 : vector<1x128xf32> to vector<128x128xf32>
    %31 = arith.addf %28, %30 : vector<128x128xf32>
    %32 = vector.shape_cast %31 : vector<128x128xf32> to vector<8x16x128xf32>
    %33 = vector.extract_strided_slice %27 {offsets = [0, 128], sizes = [128, 128], strides = [1, 1]} : vector<128x384xf32> to vector<128x128xf32>
    %34 = vector.extract_strided_slice %23 {offsets = [1, 0], sizes = [1, 128], strides = [1, 1]} : vector<4x128xf32> to vector<1x128xf32>
    %35 = vector.broadcast %34 : vector<1x128xf32> to vector<128x128xf32>
    %36 = arith.addf %33, %35 : vector<128x128xf32>
    %37 = vector.shape_cast %36 : vector<128x128xf32> to vector<8x16x128xf32>
    %38 = vector.extract_strided_slice %27 {offsets = [0, 256], sizes = [128, 128], strides = [1, 1]} : vector<128x384xf32> to vector<128x128xf32>
    %39 = vector.extract_strided_slice %23 {offsets = [2, 0], sizes = [1, 128], strides = [1, 1]} : vector<4x128xf32> to vector<1x128xf32>
    %40 = vector.broadcast %39 : vector<1x128xf32> to vector<128x128xf32>
    %41 = arith.addf %38, %40 : vector<128x128xf32>
    %42 = vector.shape_cast %41 : vector<128x128xf32> to vector<8x16x128xf32>
    %43 = arith.truncf %32 : vector<8x16x128xf32> to vector<8x16x128xbf16>
    %44 = arith.truncf %37 : vector<8x16x128xf32> to vector<8x16x128xbf16>
    %cst_19 = arith.constant dense<0.000000e+00> : vector<8x16x16xf32>
    %45 = tpu.matmul %43, %44, %cst_19 {dimension_numbers = #tpu.dot_dimension_numbers<[2], [2], [1], [1], [0, 0, 0, 1, 1, 1], [0], [0]>} : vector<8x16x128xbf16>, vector<8x16x128xbf16>, vector<8x16x16xf32> -> vector<8x16x16xf32>
    %cst_20 = arith.constant dense<0xFF800000> : vector<8x16xf32>
    %46 = vector.multi_reduction <maximumf>, %45, %cst_20 [2] : vector<8x16x16xf32> to vector<8x16xf32>
    %47 = vector.shape_cast %46 : vector<8x16xf32> to vector<8x16x1xf32>
    %48 = vector.broadcast %47 : vector<8x16x1xf32> to vector<8x16x16xf32>
    %49 = arith.subf %45, %48 : vector<8x16x16xf32>
    %50 = math.exp %49 : vector<8x16x16xf32>
    %cst_21 = arith.constant dense<0.000000e+00> : vector<8x16xf32>
    %51 = vector.multi_reduction <add>, %50, %cst_21 [2] : vector<8x16x16xf32> to vector<8x16xf32>
    %52 = vector.shape_cast %51 : vector<8x16xf32> to vector<8x16x1xf32>
    %53 = tpu.reciprocal %52 {approx = true} : vector<8x16x1xf32> -> vector<8x16x1xf32>
    %54 = vector.broadcast %53 : vector<8x16x1xf32> to vector<8x16x16xf32>
    %55 = arith.mulf %50, %54 : vector<8x16x16xf32>
    %56 = arith.truncf %55 : vector<8x16x16xf32> to vector<8x16x16xbf16>
    %57 = arith.truncf %42 : vector<8x16x128xf32> to vector<8x16x128xbf16>
    %cst_22 = arith.constant dense<0.000000e+00> : vector<8x16x128xf32>
    %58 = tpu.matmul %56, %57, %cst_22 {dimension_numbers = #tpu.dot_dimension_numbers<[2], [1], [1], [2], [0, 0, 0, 1, 1, 2], [0], [0]>} : vector<8x16x16xbf16>, vector<8x16x128xbf16>, vector<8x16x128xf32> -> vector<8x16x128xf32>
    %59 = vector.shape_cast %58 : vector<8x16x128xf32> to vector<128x128xf32>
    %60 = arith.truncf %59 : vector<128x128xf32> to vector<128x128xbf16>
    %c0_23 = arith.constant 0 : index
    %c0_24 = arith.constant 0 : index
    %61 = vector.load %arg3[%c0_23, %c0_24] : memref<128x128xbf16, #tpu.memory_space<vmem>>, vector<128x128xbf16>
    %cst_25 = arith.constant dense<0.000000e+00> : vector<128x128xf32>
    %62 = tpu.matmul %60, %61, %cst_25 {dimension_numbers = #tpu.dot_dimension_numbers<[1], [0], [0], [1], [0, 0, 1, 1], [], []>} : vector<128x128xbf16>, vector<128x128xbf16>, vector<128x128xf32> -> vector<128x128xf32>
    %63 = vector.extract_strided_slice %23 {offsets = [3, 0], sizes = [1, 128], strides = [1, 1]} : vector<4x128xf32> to vector<1x128xf32>
    %64 = vector.broadcast %63 : vector<1x128xf32> to vector<128x128xf32>
    %65 = arith.addf %62, %64 : vector<128x128xf32>
    %66 = vector.shape_cast %65 : vector<128x128xf32> to vector<8x16x128xf32>
    %67 = arith.addf %0, %66 : vector<8x16x128xf32>
    %c0_26 = arith.constant 0 : index
    %c0_27 = arith.constant 0 : index
    %c0_28 = arith.constant 0 : index
    %68 = vector.load %arg7[%c0_26, %c0_27, %c0_28] : memref<8x16x128xf32, #tpu.memory_space<vmem>>, vector<8x16x128xf32>
    tpu.vector_store %arg7[%c0_26, %c0_27, %c0_28], %67 {strides = array<i32>} : memref<8x16x128xf32, #tpu.memory_space<vmem>>, vector<8x16x128xf32>,
    return
  }
  func.func @transform_0(%arg0: i32) -> (i32, i32, i32) {
    %c0_i32 = arith.constant 0 : i32
    %c0_i32_0 = arith.constant 0 : i32
    %c0_i32_1 = arith.constant 0 : i32
    return %arg0, %c0_i32, %c0_i32_0 : i32, i32, i32
  }
  func.func @transform_1(%arg0: i32) -> (i32, i32) {
    %c0_i32 = arith.constant 0 : i32
    %c0_i32_0 = arith.constant 0 : i32
    %c0_i32_1 = arith.constant 0 : i32
    return %c0_i32, %c0_i32_0 : i32, i32
  }
  func.func @transform_2(%arg0: i32) -> (i32, i32) {
    %c0_i32 = arith.constant 0 : i32
    %c0_i32_0 = arith.constant 0 : i32
    %c0_i32_1 = arith.constant 0 : i32
    return %c0_i32, %c0_i32_0 : i32, i32
  }
  func.func @transform_3(%arg0: i32) -> (i32, i32) {
    %c0_i32 = arith.constant 0 : i32
    %c0_i32_0 = arith.constant 0 : i32
    %c0_i32_1 = arith.constant 0 : i32
    return %c0_i32, %c0_i32_0 : i32, i32
  }
  func.func @transform_4(%arg0: i32) -> (i32, i32) {
    %c0_i32 = arith.constant 0 : i32
    %c0_i32_0 = arith.constant 0 : i32
    %c0_i32_1 = arith.constant 0 : i32
    return %c0_i32, %c0_i32_0 : i32, i32
  }
  func.func @transform_5(%arg0: i32) -> (i32, i32) {
    %c0_i32 = arith.constant 0 : i32
    %c0_i32_0 = arith.constant 0 : i32
    %c0_i32_1 = arith.constant 0 : i32
    return %c0_i32, %c0_i32_0 : i32, i32
  }
  func.func @transform_6(%arg0: i32) -> (i32, i32, i32) {
    %c0_i32 = arith.constant 0 : i32
    %c0_i32_0 = arith.constant 0 : i32
    %c0_i32_1 = arith.constant 0 : i32
    return %arg0, %c0_i32, %c0_i32_0 : i32, i32, i32
  }
}

</mosaic_0001>

<llo_original>
// kernel: tpu_custom_call.1
$region0: #{tpu_custom_call.1}
  #allocation0 [shape = 'u32[]', space=smem, size = 0x4, offset = 0x4, fixed_abs, tag = 'smem constant byte address 0x4 - core index']
  #allocation1 [shape = 'u32[144,128]{1,0:T(1,128)}', space=vmem, size = 0x12000, scoped, tag = 'internal scratch']
  %s0 = inlined_call_operand.hbm [shape: f32[16,16,128], index: 0, kind: input, shape index: {}]
  %s1 = inlined_call_operand.hbm [shape: bf16[128,384], index: 1, kind: input, shape index: {}]
  %s2 = inlined_call_operand.hbm [shape: bf16[128,128], index: 2, kind: input, shape index: {}]
  %s3 = inlined_call_operand.hbm [shape: f32[4,128], index: 3, kind: input, shape index: {}]
  %s4 = inlined_call_operand.hbm [shape: f32[128,32], index: 4, kind: input, shape index: {}]
  %s5 = inlined_call_operand.hbm [shape: f32[32,128], index: 5, kind: input, shape index: {}]
  %s6 = inlined_call_operand.hbm [shape: f32[16,16,128], index: 6, kind: output, shape index: {}]
  %s7 = sld [smem:[#allocation0]]
  $region81: #{tpu_custom_call.1} parent=0
    _
  %s9 = ssub.s32 1, %s7
  %s10 = scalar_select 0, %s9, %s7
  $region1: #{tpu_custom_call.1} parent=0
    #allocation2 [shape = 'u8[131072]{0}', space=vmem, size = 0x20000, scoped, tag = 'input window, operand 0']
    #allocation3 [shape = 's32[2]{0}', space=sflag, size = 0x8, scoped, tag = 'scoped memory for tpu_custom_call.1']
    #allocation4 [shape = 's32[2]{0}', space=sflag, size = 0x8, scoped, tag = 'scoped memory for tpu_custom_call.1']
    #allocation5 [shape = 'u8[98304]{0}', space=vmem, size = 0x18000, scoped, tag = 'input window, operand 1, single buffered']
    #allocation6 [shape = 's32[1]{0}', space=sflag, size = 0x4, scoped, tag = 'scoped memory for tpu_custom_call.1']
    #allocation7 [shape = 'u8[32768]{0}', space=vmem, size = 0x8000, scoped, tag = 'input window, operand 2, single buffered']
    #allocation8 [shape = 'u8[2048]{0}', space=vmem, size = 0x800, scoped, tag = 'input window, operand 3, single buffered']
    #allocation9 [shape = 's32[1]{0}', space=sflag, size = 0x4, scoped, tag = 'scoped memory for tpu_custom_call.1']
    #allocation10 [shape = 'u8[65536]{0}', space=vmem, size = 0x10000, scoped, tag = 'input window, operand 4, single buffered']
    #allocation11 [shape = 'u8[16384]{0}', space=vmem, size = 0x4000, scoped, tag = 'input window, operand 5, single buffered']
    #allocation12 [shape = 's32[1]{0}', space=sflag, size = 0x4, scoped, tag = 'scoped memory for tpu_custom_call.1']
    #allocation13 [shape = 'u8[131072]{0}', space=vmem, size = 0x20000, scoped, tag = 'output window, operand 0']
    %11 = vsyncpa [#allocation3], 0
    %s12 = scalar_lea.sflag [#allocation3], 1
    %13 = vsyncpa %s12, 0
    %14 = vsyncpa [#allocation6], 0
    %15 = vsyncpa [#allocation9], 0
    %16 = vsyncpa [#allocation12], 0
    %17 = vsyncpa [#allocation4], 0
    %s18 = scalar_lea.sflag [#allocation4], 1
    %19 = vsyncpa %s18, 0
    loop: start=0, step=1, limit=4
    $region2: #{tpu_custom_call.1} parent=1 // loop_pre_header
      _
    $region3: #{tpu_custom_call.1} parent=1 // loop_header
      %s21 = sphi 0, %s25
      %p22 = scmp.ge.s32.totalorder %s21, 4
      %s31 = sphi 0, %s33
      %s34 = sphi 0, %s31
      %s35 = sphi 0, %s34
      %s51 = sphi 0, %s35
      %s55 = sphi 0, %s55
      %s57 = sphi 0, %s55
      %s58 = sphi 0, %s57
      %s72 = sphi 0, %s58
      %s76 = sphi 0, %s76
      %s78 = sphi 0, %s76
      %s79 = sphi 0, %s78
      %s93 = sphi 0, %s79
      %s97 = sphi 0, %s97
      %s99 = sphi 0, %s97
      %s100 = sphi 0, %s99
      %s114 = sphi 0, %s100
      %s118 = sphi 0, %s118
      %s120 = sphi 0, %s118
      %s121 = sphi 0, %s120
      %s135 = sphi 0, %s121
      %s139 = sphi 0, %s139
      %s141 = sphi 0, %s139
      %s142 = sphi 0, %s141
      %s156 = sphi 0, %s142
      %s162 = sphi 0, %s164
      %s165 = sphi 0, %s162
      %s166 = sphi 0, %s165
      %s182 = sphi 0, %s166
    $region4: #{tpu_custom_call.1} parent=1 // loop_header_branch
      %24 = sbr.rel (%p22) target = $region8
    $region5: #{tpu_custom_call.1} parent=1 // loop_body
      %s26 = ssub.s32 %s21, 1
      %s27 = ssub.s32 %s21, 2
      %s28 = sadd.s32 %s21, 1
      %s29 = ssub.s32 %s21, %s28
      %p30 = scmp.eq.s32.totalorder %s29, 0
      %s32 = sadd.s32 %s31, 1
      %s33 = scalar_select %p30, %s31, %s32
      %p36 = pneg %p30
      %p37 = scmp.eq.s32.totalorder %s21, 1
      %p38 = por %p36, %p37
      %p39 = scmp.ne.s32.totalorder %s31, %s34
      %p40 = scmp.eq.s32.totalorder %s21, 0
      %p41 = por %p39, %p40
      %p42 = scmp.ne.s32.totalorder %s31, %s34
      %p43 = scmp.eq.s32.totalorder %s26, 1
      %p44 = por %p42, %p43
      %p45 = scmp.ne.s32.totalorder %s34, %s35
      %p46 = scmp.eq.s32.totalorder %s26, 0
      %p47 = por %p45, %p46
      %p48 = scmp.ne.s32.totalorder %s34, %s35
      %p49 = scmp.eq.s32.totalorder %s27, 1
      %p50 = por %p48, %p49
      %p52 = scmp.ne.s32.totalorder %s35, %s51
      %p53 = scmp.eq.s32.totalorder %s27, 0
      %p54 = por %p52, %p53
      %s56 = sadd.s32 %s55, 1
      %p59 = scmp.eq.s32.totalorder %s21, 1
      %p60 = scmp.ne.s32.totalorder %s55, %s57
      %p61 = scmp.eq.s32.totalorder %s21, 0
      %p62 = por %p60, %p61
      %p63 = scmp.ne.s32.totalorder %s55, %s57
      %p64 = scmp.eq.s32.totalorder %s26, 1
      %p65 = por %p63, %p64
      %p66 = scmp.ne.s32.totalorder %s57, %s58
      %p67 = scmp.eq.s32.totalorder %s26, 0
      %p68 = por %p66, %p67
      %p69 = scmp.ne.s32.totalorder %s57, %s58
      %p70 = scmp.eq.s32.totalorder %s27, 1
      %p71 = por %p69, %p70
      %p73 = scmp.ne.s32.totalorder %s58, %s72
      %p74 = scmp.eq.s32.totalorder %s27, 0
      %p75 = por %p73, %p74
      %s77 = sadd.s32 %s76, 1
      %p80 = scmp.eq.s32.totalorder %s21, 1
      %p81 = scmp.ne.s32.totalorder %s76, %s78
      %p82 = scmp.eq.s32.totalorder %s21, 0
      %p83 = por %p81, %p82
      %p84 = scmp.ne.s32.totalorder %s76, %s78
      %p85 = scmp.eq.s32.totalorder %s26, 1
      %p86 = por %p84, %p85
      %p87 = scmp.ne.s32.totalorder %s78, %s79
      %p88 = scmp.eq.s32.totalorder %s26, 0
      %p89 = por %p87, %p88
      %p90 = scmp.ne.s32.totalorder %s78, %s79
      %p91 = scmp.eq.s32.totalorder %s27, 1
      %p92 = por %p90, %p91
      %p94 = scmp.ne.s32.totalorder %s79, %s93
      %p95 = scmp.eq.s32.totalorder %s27, 0
      %p96 = por %p94, %p95
      %s98 = sadd.s32 %s97, 1
      %p101 = scmp.eq.s32.totalorder %s21, 1
      %p102 = scmp.ne.s32.totalorder %s97, %s99
      %p103 = scmp.eq.s32.totalorder %s21, 0
      %p104 = por %p102, %p103
      %p105 = scmp.ne.s32.totalorder %s97, %s99
      %p106 = scmp.eq.s32.totalorder %s26, 1
      %p107 = por %p105, %p106
      %p108 = scmp.ne.s32.totalorder %s99, %s100
      %p109 = scmp.eq.s32.totalorder %s26, 0
      %p110 = por %p108, %p109
      %p111 = scmp.ne.s32.totalorder %s99, %s100
      %p112 = scmp.eq.s32.totalorder %s27, 1
      %p113 = por %p111, %p112
      %p115 = scmp.ne.s32.totalorder %s100, %s114
      %p116 = scmp.eq.s32.totalorder %s27, 0
      %p117 = por %p115, %p116
      %s119 = sadd.s32 %s118, 1
      %p122 = scmp.eq.s32.totalorder %s21, 1
      %p123 = scmp.ne.s32.totalorder %s118, %s120
      %p124 = scmp.eq.s32.totalorder %s21, 0
      %p125 = por %p123, %p124
      %p126 = scmp.ne.s32.totalorder %s118, %s120
      %p127 = scmp.eq.s32.totalorder %s26, 1
      %p128 = por %p126, %p127
      %p129 = scmp.ne.s32.totalorder %s120, %s121
      %p130 = scmp.eq.s32.totalorder %s26, 0
      %p131 = por %p129, %p130
      %p132 = scmp.ne.s32.totalorder %s120, %s121
      %p133 = scmp.eq.s32.totalorder %s27, 1
      %p134 = por %p132, %p133
      %p136 = scmp.ne.s32.totalorder %s121, %s135
      %p137 = scmp.eq.s32.totalorder %s27, 0
      %p138 = por %p136, %p137
      %s140 = sadd.s32 %s139, 1
      %p143 = scmp.eq.s32.totalorder %s21, 1
      %p144 = scmp.ne.s32.totalorder %s139, %s141
      %p145 = scmp.eq.s32.totalorder %s21, 0
      %p146 = por %p144, %p145
      %p147 = scmp.ne.s32.totalorder %s139, %s141
      %p148 = scmp.eq.s32.totalorder %s26, 1
      %p149 = por %p147, %p148
      %p150 = scmp.ne.s32.totalorder %s141, %s142
      %p151 = scmp.eq.s32.totalorder %s26, 0
      %p152 = por %p150, %p151
      %p153 = scmp.ne.s32.totalorder %s141, %s142
      %p154 = scmp.eq.s32.totalorder %s27, 1
      %p155 = por %p153, %p154
      %p157 = scmp.ne.s32.totalorder %s142, %s156
      %p158 = scmp.eq.s32.totalorder %s27, 0
      %p159 = por %p157, %p158
      %s160 = ssub.s32 %s21, %s28
      %p161 = scmp.eq.s32.totalorder %s160, 0
      %s163 = sadd.s32 %s162, 1
      %s164 = scalar_select %p161, %s162, %s163
      %p167 = pneg %p161
      %p168 = scmp.eq.s32.totalorder %s21, 1
      %p169 = por %p167, %p168
      %p170 = scmp.ne.s32.totalorder %s162, %s165
      %p171 = scmp.eq.s32.totalorder %s21, 0
      %p172 = por %p170, %p171
      %p173 = scmp.ne.s32.totalorder %s162, %s165
      %p174 = scmp.eq.s32.totalorder %s26, 1
      %p175 = por %p173, %p174
      %p176 = scmp.ne.s32.totalorder %s165, %s166
      %p177 = scmp.eq.s32.totalorder %s26, 0
      %p178 = por %p176, %p177
      %p179 = scmp.ne.s32.totalorder %s165, %s166
      %p180 = scmp.eq.s32.totalorder %s27, 1
      %p181 = por %p179, %p180
      %p183 = scmp.ne.s32.totalorder %s166, %s182
      %p184 = scmp.eq.s32.totalorder %s27, 0
      %p185 = por %p183, %p184
      %p186 = scmp.le.s32.totalorder 1, %s21
      %p187 = scmp.lt.s32.totalorder %s21, 3
      %p188 = pnand %p186, %p187
      %p189 = pneg %p188
      // Predicated region
      $region9: #{tpu_custom_call.1} parent=5 // pred_check
        _
      $region10: #{tpu_custom_call.1} parent=5 // pred_check_branch
        %191 = sbr.rel (%p188) target = $region12
      $region11: #{tpu_custom_call.1} parent=5 // pred_region
        %s192 = ssub.s32 %s21, 1
        // Predicated region
        $region13: #{tpu_custom_call.1} parent=11 // pred_check
          %p193 = pneg %p68
        $region14: #{tpu_custom_call.1} parent=11 // pred_check_branch
          %195 = sbr.rel (%p193) target = $region16
        $region15: #{tpu_custom_call.1} parent=11 // pred_region
          %s197 = ssub.s32 3072, 3072
          %198 = vsyncadd [#allocation6], %s197
          %s199 = sshll.u32 [#allocation5], 4
          %s200 = int_to_ptr.vmem [resolvable:$true] %s199
          %205 = dma.hbm_to_vmem [thread:$0]  %s1, 3072, %s200, [#allocation6], 192, 192, 12
        $region16: #{tpu_custom_call.1} parent=11 // pred_fallthru
          _
        // Predicated region
        $region17: #{tpu_custom_call.1} parent=11 // pred_check
          %p206 = pneg %p89
        $region18: #{tpu_custom_call.1} parent=11 // pred_check_branch
          %208 = sbr.rel (%p206) target = $region20
        $region19: #{tpu_custom_call.1} parent=11 // pred_region
          %s210 = ssub.s32 1024, 1024
          %211 = vsyncadd [#allocation6], %s210
          %s212 = sshll.u32 [#allocation7], 4
          %s213 = int_to_ptr.vmem [resolvable:$true] %s212
          %218 = dma.hbm_to_vmem [thread:$0]  %s2, 1024, %s213, [#allocation6], 64, 64, 4
        $region20: #{tpu_custom_call.1} parent=11 // pred_fallthru
          _
        // Predicated region
        $region21: #{tpu_custom_call.1} parent=11 // pred_check
          %p219 = pneg %p110
        $region22: #{tpu_custom_call.1} parent=11 // pred_check_branch
          %221 = sbr.rel (%p219) target = $region24
        $region23: #{tpu_custom_call.1} parent=11 // pred_region
          %s223 = ssub.s32 64, 64
          %224 = vsyncadd [#allocation9], %s223
          %s226 = sshll.u32 [#allocation8], 4
          %s227 = int_to_ptr.vmem [resolvable:$true] %s226
          %229 = dma.hbm_to_vmem [thread:$0]  %s3, 64, %s227, [#allocation9]
        $region24: #{tpu_custom_call.1} parent=11 // pred_fallthru
          _
        // Predicated region
        $region25: #{tpu_custom_call.1} parent=11 // pred_check
          %p230 = pneg %p131
        $region26: #{tpu_custom_call.1} parent=11 // pred_check_branch
          %232 = sbr.rel (%p230) target = $region28
        $region27: #{tpu_custom_call.1} parent=11 // pred_region
          %s234 = ssub.s32 2048, 2048
          %235 = vsyncadd [#allocation9], %s234
          %s236 = sshll.u32 [#allocation10], 4
          %s237 = int_to_ptr.vmem [resolvable:$true] %s236
          %242 = dma.hbm_to_vmem [thread:$0]  %s4, 2048, %s237, [#allocation9], 128, 128, 8
        $region28: #{tpu_custom_call.1} parent=11 // pred_fallthru
          _
        // Predicated region
        $region29: #{tpu_custom_call.1} parent=11 // pred_check
          %p243 = pneg %p152
        $region30: #{tpu_custom_call.1} parent=11 // pred_check_branch
          %245 = sbr.rel (%p243) target = $region32
        $region31: #{tpu_custom_call.1} parent=11 // pred_region
          %s247 = ssub.s32 512, 512
          %248 = vsyncadd [#allocation12], %s247
          %s249 = sshll.u32 [#allocation11], 4
          %s250 = int_to_ptr.vmem [resolvable:$true] %s249
          %255 = dma.hbm_to_vmem [thread:$0]  %s5, 512, %s250, [#allocation12], 128, 128, 8
        $region32: #{tpu_custom_call.1} parent=11 // pred_fallthru
          _
      $region12: #{tpu_custom_call.1} parent=5 // pred_fallthru
        _
      %p256 = scmp.lt.s32.totalorder %s21, 2
      // Predicated region
      $region33: #{tpu_custom_call.1} parent=5 // pred_check
        %p257 = pneg %p256
      $region34: #{tpu_custom_call.1} parent=5 // pred_check_branch
        %259 = sbr.rel (%p257) target = $region36
      $region35: #{tpu_custom_call.1} parent=5 // pred_region
        // Predicated region
        $region37: #{tpu_custom_call.1} parent=35 // pred_check
          %p260 = pneg %p41
        $region38: #{tpu_custom_call.1} parent=35 // pred_check_branch
          %262 = sbr.rel (%p260) target = $region40
        $region39: #{tpu_custom_call.1} parent=35 // pred_region
          %s263 = sand.u32 %s31, 1
          %s264 = scalar_lea.sflag [#allocation3], %s263
          %s265 = sand.u32 %s31, 1
          %s266 = smul.addr %s265, 128
          %s267 = scalar_lea.vmem [#allocation2], %s266
          %s268 = smul.u32 8, %s21
          %s270 = ssub.s32 2048, 2048
          %271 = vsyncadd %s264, %s270
          %s272 = smul.addr %s268, 2
          %s273 = smul.addr %s272, 128
          %s274 = scalar_lea.hbm %s0, %s273
          %s275 = sshll.u32 %s267, 4
          %s276 = int_to_ptr.vmem [resolvable:$true] %s275
          %281 = dma.hbm_to_vmem [thread:$0]  %s274, 2048, %s276, %s264, 128, 128, 8
        $region40: #{tpu_custom_call.1} parent=35 // pred_fallthru
          _
      $region36: #{tpu_custom_call.1} parent=5 // pred_fallthru
        _
      %p282 = scmp.le.s32.totalorder 1, %s21
      %p283 = scmp.lt.s32.totalorder %s21, 3
      %p284 = pnand %p282, %p283
      %p285 = pneg %p284
      // Predicated region
      $region41: #{tpu_custom_call.1} parent=5 // pred_check
        _
      $region42: #{tpu_custom_call.1} parent=5 // pred_check_branch
        %287 = sbr.rel (%p284) target = $region44
      $region43: #{tpu_custom_call.1} parent=5 // pred_region
        %s288 = ssub.s32 %s21, 1
        %s289 = sand.u32 %s34, 1
        %s290 = scalar_lea.sflag [#allocation3], %s289
        %s291 = sand.u32 %s34, 1
        %s292 = smul.addr %s291, 128
        %s293 = scalar_lea.vmem [#allocation2], %s292
        // Predicated region
        $region45: #{tpu_custom_call.1} parent=43 // pred_check
          %p294 = pneg %p47
        $region46: #{tpu_custom_call.1} parent=43 // pred_check_branch
          %296 = sbr.rel (%p294) target = $region48
        $region47: #{tpu_custom_call.1} parent=43 // pred_region
          %297 = dma.done %s290, 2048
        $region48: #{tpu_custom_call.1} parent=43 // pred_fallthru
          _
        // Predicated region
        $region49: #{tpu_custom_call.1} parent=43 // pred_check
          %p298 = pneg %p68
        $region50: #{tpu_custom_call.1} parent=43 // pred_check_branch
          %300 = sbr.rel (%p298) target = $region52
        $region51: #{tpu_custom_call.1} parent=43 // pred_region
          %301 = dma.done [#allocation6], 3072
        $region52: #{tpu_custom_call.1} parent=43 // pred_fallthru
          _
        // Predicated region
        $region53: #{tpu_custom_call.1} parent=43 // pred_check
          %p302 = pneg %p89
        $region54: #{tpu_custom_call.1} parent=43 // pred_check_branch
          %304 = sbr.rel (%p302) target = $region56
        $region55: #{tpu_custom_call.1} parent=43 // pred_region
          %305 = dma.done [#allocation6], 1024
        $region56: #{tpu_custom_call.1} parent=43 // pred_fallthru
          _
        // Predicated region
        $region57: #{tpu_custom_call.1} parent=43 // pred_check
          %p306 = pneg %p110
        $region58: #{tpu_custom_call.1} parent=43 // pred_check_branch
          %308 = sbr.rel (%p306) target = $region60
        $region59: #{tpu_custom_call.1} parent=43 // pred_region
          %309 = dma.done [#allocation9], 64
        $region60: #{tpu_custom_call.1} parent=43 // pred_fallthru
          _
        // Predicated region
        $region61: #{tpu_custom_call.1} parent=43 // pred_check
          %p310 = pneg %p131
        $region62: #{tpu_custom_call.1} parent=43 // pred_check_branch
          %312 = sbr.rel (%p310) target = $region64
        $region63: #{tpu_custom_call.1} parent=43 // pred_region
          %313 = dma.done [#allocation9], 2048
        $region64: #{tpu_custom_call.1} parent=43 // pred_fallthru
          _
        // Predicated region
        $region65: #{tpu_custom_call.1} parent=43 // pred_check
          %p314 = pneg %p152
        $region66: #{tpu_custom_call.1} parent=43 // pred_check_branch
          %316 = sbr.rel (%p314) target = $region68
        $region67: #{tpu_custom_call.1} parent=43 // pred_region
          %317 = dma.done [#allocation12], 512
        $region68: #{tpu_custom_call.1} parent=43 // pred_fallthru
          _
        %s318 = sand.u32 %s34, 1
        %s319 = scalar_lea.sflag [#allocation3], %s318
        %s320 = sand.u32 %s34, 1
        %s321 = smul.addr %s320, 128
        %s322 = scalar_lea.vmem [#allocation2], %s321
        %p323 = pneg %p47
        %p324 = pneg %p44
        %p325 = pneg %p68
        %p326 = pneg %p65
        %p327 = pneg %p89
        %p328 = pneg %p86
        %p329 = pneg %p110
        %p330 = pneg %p107
        %p331 = pneg %p131
        %p332 = pneg %p128
        %p333 = pneg %p152
        %p334 = pneg %p149
        %p335 = pneg %p178
        %p336 = pneg %p175
        %s337 = sand.u32 %s165, 1
        %s338 = scalar_lea.sflag [#allocation4], %s337
        %s339 = sand.u32 %s165, 1
        %s340 = smul.addr %s339, 128
        %s341 = scalar_lea.vmem [#allocation13], %s340
        %s342 = smul.u32 8, %s26
        %s343 = smul.u32 8, %s26
        %v345 = vld [vmem:[%s293] sm:$0xff]
        %v346 = vld [vmem:[%s293 + $0x8] sm:$0xff]
        %v347 = vld [vmem:[%s293 + $0x10] sm:$0xff]
        %v348 = vld [vmem:[%s293 + $0x18] sm:$0xff]
        %v349 = vld [vmem:[%s293 + $0x20] sm:$0xff]
        %v350 = vld [vmem:[%s293 + $0x28] sm:$0xff]
        %v351 = vld [vmem:[%s293 + $0x30] sm:$0xff]
        %v352 = vld [vmem:[%s293 + $0x38] sm:$0xff]
        %v353 = vld [vmem:[%s293 + $0x40] sm:$0xff]
        %v354 = vld [vmem:[%s293 + $0x48] sm:$0xff]
        %v355 = vld [vmem:[%s293 + $0x50] sm:$0xff]
        %v356 = vld [vmem:[%s293 + $0x58] sm:$0xff]
        %v357 = vld [vmem:[%s293 + $0x60] sm:$0xff]
        %v358 = vld [vmem:[%s293 + $0x68] sm:$0xff]
        %v359 = vld [vmem:[%s293 + $0x70] sm:$0xff]
        %v360 = vld [vmem:[%s293 + $0x78] sm:$0xff]
        %v361 = vld [vmem:[#allocation10] sm:$0xff]
        %v362 = vld [vmem:[#allocation10 + $0x8] sm:$0xff]
        %v363 = vld [vmem:[#allocation10 + $0x10] sm:$0xff]
        %v364 = vld [vmem:[#allocation10 + $0x18] sm:$0xff]
        %v365 = vld [vmem:[#allocation10 + $0x20] sm:$0xff]
        %v366 = vld [vmem:[#allocation10 + $0x28] sm:$0xff]
        %v367 = vld [vmem:[#allocation10 + $0x30] sm:$0xff]
        %v368 = vld [vmem:[#allocation10 + $0x38] sm:$0xff]
        %v369 = vld [vmem:[#allocation10 + $0x40] sm:$0xff]
        %v370 = vld [vmem:[#allocation10 + $0x48] sm:$0xff]
        %v371 = vld [vmem:[#allocation10 + $0x50] sm:$0xff]
        %v372 = vld [vmem:[#allocation10 + $0x58] sm:$0xff]
        %v373 = vld [vmem:[#allocation10 + $0x60] sm:$0xff]
        %v374 = vld [vmem:[#allocation10 + $0x68] sm:$0xff]
        %v375 = vld [vmem:[#allocation10 + $0x70] sm:$0xff]
        %v376 = vld [vmem:[#allocation10 + $0x78] sm:$0xff]
        %v377 = vld [vmem:[#allocation11] sm:$0xff]
        %v378 = vld [vmem:[#allocation11 + $0x8] sm:$0xff]
        %v379 = vld [vmem:[#allocation11 + $0x10] sm:$0xff]
        %v380 = vld [vmem:[#allocation11 + $0x18] sm:$0xff]
        %v381 = vadd.f32 %v345, %v346
        %v382 = vrot.slane %v381, 4
        %v383 = vadd.f32 %v381, %v382
        %v384 = vrot.slane %v383, 2
        %v385 = vadd.f32 %v383, %v384
        %v386 = vrot.slane %v385, 1
        %v387 = vadd.f32 %v385, %v386
        %v388 = vadd.f32 %v347, %v348
        %v389 = vrot.slane %v388, 4
        %v390 = vadd.f32 %v388, %v389
        %v391 = vrot.slane %v390, 2
        %v392 = vadd.f32 %v390, %v391
        %v393 = vrot.slane %v392, 1
        %v394 = vadd.f32 %v392, %v393
        %v395 = vadd.f32 %v349, %v350
        %v396 = vrot.slane %v395, 4
        %v397 = vadd.f32 %v395, %v396
        %v398 = vrot.slane %v397, 2
        %v399 = vadd.f32 %v397, %v398
        %v400 = vrot.slane %v399, 1
        %v401 = vadd.f32 %v399, %v400
        %v402 = vadd.f32 %v351, %v352
        %v403 = vrot.slane %v402, 4
        %v404 = vadd.f32 %v402, %v403
        %v405 = vrot.slane %v404, 2
        %v406 = vadd.f32 %v404, %v405
        %v407 = vrot.slane %v406, 1
        %v408 = vadd.f32 %v406, %v407
        %v409 = vadd.f32 %v353, %v354
        %v410 = vrot.slane %v409, 4
        %v411 = vadd.f32 %v409, %v410
        %v412 = vrot.slane %v411, 2
        %v413 = vadd.f32 %v411, %v412
        %v414 = vrot.slane %v413, 1
        %v415 = vadd.f32 %v413, %v414
        %v416 = vadd.f32 %v355, %v356
        %v417 = vrot.slane %v416, 4
        %v418 = vadd.f32 %v416, %v417
        %v419 = vrot.slane %v418, 2
        %v420 = vadd.f32 %v418, %v419
        %v421 = vrot.slane %v420, 1
        %v422 = vadd.f32 %v420, %v421
        %v423 = vadd.f32 %v357, %v358
        %v424 = vrot.slane %v423, 4
        %v425 = vadd.f32 %v423, %v424
        %v426 = vrot.slane %v425, 2
        %v427 = vadd.f32 %v425, %v426
        %v428 = vrot.slane %v427, 1
        %v429 = vadd.f32 %v427, %v428
        %v430 = vadd.f32 %v359, %v360
        %v431 = vrot.slane %v430, 4
        %v432 = vadd.f32 %v430, %v431
        %v433 = vrot.slane %v432, 2
        %v434 = vadd.f32 %v432, %v433
        %v435 = vrot.slane %v434, 1
        %v436 = vadd.f32 %v434, %v435
        %vm445 = vcmask 1041409
        %v446 = vsel %vm445, %v394, %v387
        %vm447 = vcmask 1042434
        %v448 = vsel %vm447, %v401, %v446
        %vm449 = vcmask 1043459
        %v450 = vsel %vm449, %v408, %v448
        %vm451 = vcmask 1044484
        %v452 = vsel %vm451, %v415, %v450
        %vm453 = vcmask 1045509
        %v454 = vsel %vm453, %v422, %v452
        %vm455 = vcmask 1046534
        %v456 = vsel %vm455, %v429, %v454
        %vm457 = vcmask 1047559
        %v458 = vsel %vm457, %v436, %v456
        %460 = vmatprep.subr.mxu0 0.0
        %461 = vmatpush1.msra.mxu0 %v361
        %462 = vmatprep.subr.mxu0 0.0
        %463 = vmatpush1.msra.mxu0 %v362
        %464 = vmatprep.subr.mxu0 0.0
        %465 = vmatpush1.msra.mxu0 %v363
        %466 = vmatprep.subr.mxu0 0.0
        %467 = vmatpush1.msra.mxu0 %v364
        %468 = vmatprep.subr.mxu0 0.0
        %469 = vmatpush1.msra.mxu0 %v365
        %470 = vmatprep.subr.mxu0 0.0
        %471 = vmatpush1.msra.mxu0 %v366
        %472 = vmatprep.subr.mxu0 0.0
        %473 = vmatpush1.msra.mxu0 %v367
        %474 = vmatprep.subr.mxu0 0.0
        %475 = vmatpush1.msra.mxu0 %v368
        %476 = vmatprep.subr.mxu0 0.0
        %477 = vmatpush1.msra.mxu0 %v369
        %478 = vmatprep.subr.mxu0 0.0
        %479 = vmatpush1.msra.mxu0 %v370
        %480 = vmatprep.subr.mxu0 0.0
        %481 = vmatpush1.msra.mxu0 %v371
        %482 = vmatprep.subr.mxu0 0.0
        %483 = vmatpush1.msra.mxu0 %v372
        %484 = vmatprep.subr.mxu0 0.0
        %485 = vmatpush1.msra.mxu0 %v373
        %486 = vmatprep.subr.mxu0 0.0
        %487 = vmatpush1.msra.mxu0 %v374
        %488 = vmatprep.subr.mxu0 0.0
        %489 = vmatpush1.msra.mxu0 %v375
        %490 = vmatprep.subr.mxu0 0.0
        %491 = vmatpush1.msra.mxu0 %v376
        %492 = vmatprep.subr.mxu0 0.0
        %493 = vmatpush1.msra.mxu0 0.0
        %494 = vmatprep.subr.mxu0 0.0
        %495 = vmatpush1.msra.mxu0 0.0
        %496 = vmatprep.subr.mxu0 0.0
        %497 = vmatpush1.msra.mxu0 0.0
        %498 = vmatprep.subr.mxu0 0.0
        %499 = vmatpush1.msra.mxu0 0.0
        %500 = vmatprep.subr.mxu0 0.0
        %501 = vmatpush1.msra.mxu0 0.0
        %502 = vmatprep.subr.mxu0 0.0
        %503 = vmatpush1.msra.mxu0 0.0
        %504 = vmatprep.subr.mxu0 0.0
        %505 = vmatpush1.msra.mxu0 0.0
        %506 = vmatprep.subr.mxu0 0.0
        %507 = vmatpush1.msra.mxu0 0.0
        %508 = vmatprep.subr.mxu0 0.0
        %509 = vmatpush1.msra.mxu0 0.0
        %510 = vmatprep.subr.mxu0 0.0
        %511 = vmatpush1.msra.mxu0 0.0
        %512 = vmatprep.subr.mxu0 0.0
        %513 = vmatpush1.msra.mxu0 0.0
        %514 = vmatprep.subr.mxu0 0.0
        %515 = vmatpush1.msra.mxu0 0.0
        %516 = vmatprep.subr.mxu0 0.0
        %517 = vmatpush1.msra.mxu0 0.0
        %518 = vmatprep.subr.mxu0 0.0
        %519 = vmatpush1.msra.mxu0 0.0
        %520 = vmatprep.subr.mxu0 0.0
        %521 = vmatpush1.msra.mxu0 0.0
        %522 = vmatprep.subr.mxu0 0.0
        %523 = vmatpush1.msra.mxu0 0.0
        %524 = vmatprep.mubr.f32.mxu0 0.0
        %525 = vmatmul.mubr.f32.gmra.mrb[0].mxu0 %v458
        %v526 = vpop.f32.mrb[0].mxu0
        %v527 = vadd.f32 0.0, %v526
        %v528 = vpop.f32.mrb[0].mxu0
        %529 = vdwg.mxu0
        %v530 = vmul.f32 %v527, 0.015625
        %vm531 = vcmask 261120
        %v533 = vsel %vm531, %v530, 0
        %535 = vmatprep.subr.mxu0 0.0
        %536 = vmatpush1.msra.mxu0 %v377
        %537 = vmatprep.subr.mxu0 0.0
        %538 = vmatpush1.msra.mxu0 %v378
        %539 = vmatprep.subr.mxu0 0.0
        %540 = vmatpush1.msra.mxu0 %v379
        %541 = vmatprep.subr.mxu0 0.0
        %542 = vmatpush1.msra.mxu0 %v380
        %543 = vmatprep.subr.mxu0 0.0
        %544 = vmatpush1.msra.mxu0 0.0
        %545 = vmatprep.subr.mxu0 0.0
        %546 = vmatpush1.msra.mxu0 0.0
        %547 = vmatprep.subr.mxu0 0.0
        %548 = vmatpush1.msra.mxu0 0.0
        %549 = vmatprep.subr.mxu0 0.0
        %550 = vmatpush1.msra.mxu0 0.0
        %551 = vmatprep.subr.mxu0 0.0
        %552 = vmatpush1.msra.mxu0 0.0
        %553 = vmatprep.subr.mxu0 0.0
        %554 = vmatpush1.msra.mxu0 0.0
        %555 = vmatprep.subr.mxu0 0.0
        %556 = vmatpush1.msra.mxu0 0.0
        %557 = vmatprep.subr.mxu0 0.0
        %558 = vmatpush1.msra.mxu0 0.0
        %559 = vmatprep.subr.mxu0 0.0
        %560 = vmatpush1.msra.mxu0 0.0
        %561 = vmatprep.subr.mxu0 0.0
        %562 = vmatpush1.msra.mxu0 0.0
        %563 = vmatprep.subr.mxu0 0.0
        %564 = vmatpush1.msra.mxu0 0.0
        %565 = vmatprep.subr.mxu0 0.0
        %566 = vmatpush1.msra.mxu0 0.0
        %567 = vmatprep.subr.mxu0 0.0
        %568 = vmatpush1.msra.mxu0 0.0
        %569 = vmatprep.subr.mxu0 0.0
        %570 = vmatpush1.msra.mxu0 0.0
        %571 = vmatprep.subr.mxu0 0.0
        %572 = vmatpush1.msra.mxu0 0.0
        %573 = vmatprep.subr.mxu0 0.0
        %574 = vmatpush1.msra.mxu0 0.0
        %575 = vmatprep.subr.mxu0 0.0
        %576 = vmatpush1.msra.mxu0 0.0
        %577 = vmatprep.subr.mxu0 0.0
        %578 = vmatpush1.msra.mxu0 0.0
        %579 = vmatprep.subr.mxu0 0.0
        %580 = vmatpush1.msra.mxu0 0.0
        %581 = vmatprep.subr.mxu0 0.0
        %582 = vmatpush1.msra.mxu0 0.0
        %583 = vmatprep.subr.mxu0 0.0
        %584 = vmatpush1.msra.mxu0 0.0
        %585 = vmatprep.subr.mxu0 0.0
        %586 = vmatpush1.msra.mxu0 0.0
        %587 = vmatprep.subr.mxu0 0.0
        %588 = vmatpush1.msra.mxu0 0.0
        %589 = vmatprep.subr.mxu0 0.0
        %590 = vmatpush1.msra.mxu0 0.0
        %591 = vmatprep.subr.mxu0 0.0
        %592 = vmatpush1.msra.mxu0 0.0
        %593 = vmatprep.subr.mxu0 0.0
        %594 = vmatpush1.msra.mxu0 0.0
        %595 = vmatprep.subr.mxu0 0.0
        %596 = vmatpush1.msra.mxu0 0.0
        %597 = vmatprep.subr.mxu0 0.0
        %598 = vmatpush1.msra.mxu0 0.0
        %599 = vmatprep.mubr.f32.mxu0 0.0
        %600 = vmatmul.mubr.f32.gmra.mrb[0].mxu0 %v533
        %v601 = vpop.f32.mrb[0].mxu0
        %v602 = vadd.f32 0.0, %v601
        %v603 = vpop.f32.mrb[0].mxu0
        %604 = vdwg.mxu0
        %v606 = vcombine.high %v602, %v602
        %v608 = vunpack.c.l.s4 1966171168
        %v609 = vunpack.c.0.s8 %v608
        %v610 = vlaneseq
        %v611 = vshrl.u32 %v610, 7
        %v612 = vsub.s32 %v609, %v611
        %v613 = vrot.slane %v602, %v612
        %v615 = vunpack.c.l.s4 1966171168
        %v616 = vunpack.c.0.s8 %v615
        %v617 = vlaneseq
        %v618 = vshrl.u32 %v617, 7
        %v619 = vsub.s32 %v616, %v618
        %v620 = vrot.slane %v606, %v619
        %v621 = vcombine.high %v613, %v613
        %v622 = vcombine.high %v620, %v620
        %v624 = vunpack.c.l.s4 1966171168
        %v625 = vunpack.c.0.s8 %v624
        %v626 = vlaneseq
        %v627 = vshrl.u32 %v626, 7
        %v628 = vsub.s32 %v625, %v627
        %v629 = vrot.slane %v613, %v628
        %v631 = vunpack.c.l.s4 1966171168
        %v632 = vunpack.c.0.s8 %v631
        %v633 = vlaneseq
        %v634 = vshrl.u32 %v633, 7
        %v635 = vsub.s32 %v632, %v634
        %v636 = vrot.slane %v620, %v635
        %v638 = vunpack.c.l.s4 1966171168
        %v639 = vunpack.c.0.s8 %v638
        %v640 = vlaneseq
        %v641 = vshrl.u32 %v640, 7
        %v642 = vsub.s32 %v639, %v641
        %v643 = vrot.slane %v621, %v642
        %v645 = vunpack.c.l.s4 1966171168
        %v646 = vunpack.c.0.s8 %v645
        %v647 = vlaneseq
        %v648 = vshrl.u32 %v647, 7
        %v649 = vsub.s32 %v646, %v648
        %v650 = vrot.slane %v622, %v649
        %v651 = vcombine.high %v629, %v629
        %v652 = vcombine.high %v636, %v636
        %v653 = vcombine.high %v643, %v643
        %v654 = vcombine.high %v650, %v650
        %v655 = vlaneseq
        %v656 = vshrl.u32 %v655, 7
        %v657 = vsub.s32 0, %v656
        %v658 = vrot.slane %v629, %v657
        %v659 = vlaneseq
        %v660 = vshrl.u32 %v659, 7
        %v661 = vsub.s32 0, %v660
        %v662 = vrot.slane %v643, %v661
        %v663 = vlaneseq
        %v664 = vshrl.u32 %v663, 7
        %v665 = vsub.s32 0, %v664
        %v666 = vrot.slane %v651, %v665
        %v667 = vlaneseq
        %v668 = vshrl.u32 %v667, 7
        %v669 = vsub.s32 0, %v668
        %v670 = vrot.slane %v653, %v669
        %v671 = vlaneseq
        %v672 = vshrl.u32 %v671, 7
        %v673 = vsub.s32 0, %v672
        %v674 = vrot.slane %v636, %v673
        %v675 = vlaneseq
        %v676 = vshrl.u32 %v675, 7
        %v677 = vsub.s32 0, %v676
        %v678 = vrot.slane %v650, %v677
        %v679 = vlaneseq
        %v680 = vshrl.u32 %v679, 7
        %v681 = vsub.s32 0, %v680
        %v682 = vrot.slane %v652, %v681
        %v683 = vlaneseq
        %v684 = vshrl.u32 %v683, 7
        %v685 = vsub.s32 0, %v684
        %v686 = vrot.slane %v654, %v685
        %v695 = vsub.f32 %v345, %v658
        %v696 = vsub.f32 %v346, %v658
        %v697 = vsub.f32 %v347, %v662
        %v698 = vsub.f32 %v348, %v662
        %v699 = vsub.f32 %v349, %v666
        %v700 = vsub.f32 %v350, %v666
        %v701 = vsub.f32 %v351, %v670
        %v702 = vsub.f32 %v352, %v670
        %v703 = vsub.f32 %v353, %v674
        %v704 = vsub.f32 %v354, %v674
        %v705 = vsub.f32 %v355, %v678
        %v706 = vsub.f32 %v356, %v678
        %v707 = vsub.f32 %v357, %v682
        %v708 = vsub.f32 %v358, %v682
        %v709 = vsub.f32 %v359, %v686
        %v710 = vsub.f32 %v360, %v686
        %v711 = vmul.f32 %v695, %v695
        %v712 = vmul.f32 %v696, %v696
        %v713 = vmul.f32 %v697, %v697
        %v714 = vmul.f32 %v698, %v698
        %v715 = vmul.f32 %v699, %v699
        %v716 = vmul.f32 %v700, %v700
        %v717 = vmul.f32 %v701, %v701
        %v718 = vmul.f32 %v702, %v702
        %v719 = vmul.f32 %v703, %v703
        %v720 = vmul.f32 %v704, %v704
        %v721 = vmul.f32 %v705, %v705
        %v722 = vmul.f32 %v706, %v706
        %v723 = vmul.f32 %v707, %v707
        %v724 = vmul.f32 %v708, %v708
        %v725 = vmul.f32 %v709, %v709
        %v726 = vmul.f32 %v710, %v710
        %v727 = vadd.f32 %v711, %v712
        %v728 = vrot.slane %v727, 4
        %v729 = vadd.f32 %v727, %v728
        %v730 = vrot.slane %v729, 2
        %v731 = vadd.f32 %v729, %v730
        %v732 = vrot.slane %v731, 1
        %v733 = vadd.f32 %v731, %v732
        %v734 = vadd.f32 %v713, %v714
        %v735 = vrot.slane %v734, 4
        %v736 = vadd.f32 %v734, %v735
        %v737 = vrot.slane %v736, 2
        %v738 = vadd.f32 %v736, %v737
        %v739 = vrot.slane %v738, 1
        %v740 = vadd.f32 %v738, %v739
        %v741 = vadd.f32 %v715, %v716
        %v742 = vrot.slane %v741, 4
        %v743 = vadd.f32 %v741, %v742
        %v744 = vrot.slane %v743, 2
        %v745 = vadd.f32 %v743, %v744
        %v746 = vrot.slane %v745, 1
        %v747 = vadd.f32 %v745, %v746
        %v748 = vadd.f32 %v717, %v718
        %v749 = vrot.slane %v748, 4
        %v750 = vadd.f32 %v748, %v749
        %v751 = vrot.slane %v750, 2
        %v752 = vadd.f32 %v750, %v751
        %v753 = vrot.slane %v752, 1
        %v754 = vadd.f32 %v752, %v753
        %v755 = vadd.f32 %v719, %v720
        %v756 = vrot.slane %v755, 4
        %v757 = vadd.f32 %v755, %v756
        %v758 = vrot.slane %v757, 2
        %v759 = vadd.f32 %v757, %v758
        %v760 = vrot.slane %v759, 1
        %v761 = vadd.f32 %v759, %v760
        %v762 = vadd.f32 %v721, %v722
        %v763 = vrot.slane %v762, 4
        %v764 = vadd.f32 %v762, %v763
        %v765 = vrot.slane %v764, 2
        %v766 = vadd.f32 %v764, %v765
        %v767 = vrot.slane %v766, 1
        %v768 = vadd.f32 %v766, %v767
        %v769 = vadd.f32 %v723, %v724
        %v770 = vrot.slane %v769, 4
        %v771 = vadd.f32 %v769, %v770
        %v772 = vrot.slane %v771, 2
        %v773 = vadd.f32 %v771, %v772
        %v774 = vrot.slane %v773, 1
        %v775 = vadd.f32 %v773, %v774
        %v776 = vadd.f32 %v725, %v726
        %v777 = vrot.slane %v776, 4
        %v778 = vadd.f32 %v776, %v777
        %v779 = vrot.slane %v778, 2
        %v780 = vadd.f32 %v778, %v779
        %v781 = vrot.slane %v780, 1
        %v782 = vadd.f32 %v780, %v781
        %v791 = vsel %vm445, %v740, %v733
        %v792 = vsel %vm447, %v747, %v791
        %v793 = vsel %vm449, %v754, %v792
        %v794 = vsel %vm451, %v761, %v793
        %v795 = vsel %vm453, %v768, %v794
        %v796 = vsel %vm455, %v775, %v795
        %v797 = vsel %vm457, %v782, %v796
        %799 = vmatprep.subr.mxu0 0.0
        %800 = vmatpush1.msra.mxu0 %v361
        %801 = vmatprep.subr.mxu0 0.0
        %802 = vmatpush1.msra.mxu0 %v362
        %803 = vmatprep.subr.mxu0 0.0
        %804 = vmatpush1.msra.mxu0 %v363
        %805 = vmatprep.subr.mxu0 0.0
        %806 = vmatpush1.msra.mxu0 %v364
        %807 = vmatprep.subr.mxu0 0.0
        %808 = vmatpush1.msra.mxu0 %v365
        %809 = vmatprep.subr.mxu0 0.0
        %810 = vmatpush1.msra.mxu0 %v366
        %811 = vmatprep.subr.mxu0 0.0
        %812 = vmatpush1.msra.mxu0 %v367
        %813 = vmatprep.subr.mxu0 0.0
        %814 = vmatpush1.msra.mxu0 %v368
        %815 = vmatprep.subr.mxu0 0.0
        %816 = vmatpush1.msra.mxu0 %v369
        %817 = vmatprep.subr.mxu0 0.0
        %818 = vmatpush1.msra.mxu0 %v370
        %819 = vmatprep.subr.mxu0 0.0
        %820 = vmatpush1.msra.mxu0 %v371
        %821 = vmatprep.subr.mxu0 0.0
        %822 = vmatpush1.msra.mxu0 %v372
        %823 = vmatprep.subr.mxu0 0.0
        %824 = vmatpush1.msra.mxu0 %v373
        %825 = vmatprep.subr.mxu0 0.0
        %826 = vmatpush1.msra.mxu0 %v374
        %827 = vmatprep.subr.mxu0 0.0
        %828 = vmatpush1.msra.mxu0 %v375
        %829 = vmatprep.subr.mxu0 0.0
        %830 = vmatpush1.msra.mxu0 %v376
        %831 = vmatprep.subr.mxu0 0.0
        %832 = vmatpush1.msra.mxu0 0.0
        %833 = vmatprep.subr.mxu0 0.0
        %834 = vmatpush1.msra.mxu0 0.0
        %835 = vmatprep.subr.mxu0 0.0
        %836 = vmatpush1.msra.mxu0 0.0
        %837 = vmatprep.subr.mxu0 0.0
        %838 = vmatpush1.msra.mxu0 0.0
        %839 = vmatprep.subr.mxu0 0.0
        %840 = vmatpush1.msra.mxu0 0.0
        %841 = vmatprep.subr.mxu0 0.0
        %842 = vmatpush1.msra.mxu0 0.0
        %843 = vmatprep.subr.mxu0 0.0
        %844 = vmatpush1.msra.mxu0 0.0
        %845 = vmatprep.subr.mxu0 0.0
        %846 = vmatpush1.msra.mxu0 0.0
        %847 = vmatprep.subr.mxu0 0.0
        %848 = vmatpush1.msra.mxu0 0.0
        %849 = vmatprep.subr.mxu0 0.0
        %850 = vmatpush1.msra.mxu0 0.0
        %851 = vmatprep.subr.mxu0 0.0
        %852 = vmatpush1.msra.mxu0 0.0
        %853 = vmatprep.subr.mxu0 0.0
        %854 = vmatpush1.msra.mxu0 0.0
        %855 = vmatprep.subr.mxu0 0.0
        %856 = vmatpush1.msra.mxu0 0.0
        %857 = vmatprep.subr.mxu0 0.0
        %858 = vmatpush1.msra.mxu0 0.0
        %859 = vmatprep.subr.mxu0 0.0
        %860 = vmatpush1.msra.mxu0 0.0
        %861 = vmatprep.subr.mxu0 0.0
        %862 = vmatpush1.msra.mxu0 0.0
        %863 = vmatprep.mubr.f32.mxu0 0.0
        %864 = vmatmul.mubr.f32.gmra.mrb[0].mxu0 %v797
        %v865 = vpop.f32.mrb[0].mxu0
        %v866 = vadd.f32 0.0, %v865
        %v867 = vpop.f32.mrb[0].mxu0
        %868 = vdwg.mxu0
        %v869 = vmul.f32 %v866, 0.015625
        %v871 = vsel %vm531, %v869, 0
        %873 = vmatprep.subr.mxu0 0.0
        %874 = vmatpush1.msra.mxu0 %v377
        %875 = vmatprep.subr.mxu0 0.0
        %876 = vmatpush1.msra.mxu0 %v378
        %877 = vmatprep.subr.mxu0 0.0
        %878 = vmatpush1.msra.mxu0 %v379
        %879 = vmatprep.subr.mxu0 0.0
        %880 = vmatpush1.msra.mxu0 %v380
        %881 = vmatprep.subr.mxu0 0.0
        %882 = vmatpush1.msra.mxu0 0.0
        %883 = vmatprep.subr.mxu0 0.0
        %884 = vmatpush1.msra.mxu0 0.0
        %885 = vmatprep.subr.mxu0 0.0
        %886 = vmatpush1.msra.mxu0 0.0
        %887 = vmatprep.subr.mxu0 0.0
        %888 = vmatpush1.msra.mxu0 0.0
        %889 = vmatprep.subr.mxu0 0.0
        %890 = vmatpush1.msra.mxu0 0.0
        %891 = vmatprep.subr.mxu0 0.0
        %892 = vmatpush1.msra.mxu0 0.0
        %893 = vmatprep.subr.mxu0 0.0
        %894 = vmatpush1.msra.mxu0 0.0
        %895 = vmatprep.subr.mxu0 0.0
        %896 = vmatpush1.msra.mxu0 0.0
        %897 = vmatprep.subr.mxu0 0.0
        %898 = vmatpush1.msra.mxu0 0.0
        %899 = vmatprep.subr.mxu0 0.0
        %900 = vmatpush1.msra.mxu0 0.0
        %901 = vmatprep.subr.mxu0 0.0
        %902 = vmatpush1.msra.mxu0 0.0
        %903 = vmatprep.subr.mxu0 0.0
        %904 = vmatpush1.msra.mxu0 0.0
        %905 = vmatprep.subr.mxu0 0.0
        %906 = vmatpush1.msra.mxu0 0.0
        %907 = vmatprep.subr.mxu0 0.0
        %908 = vmatpush1.msra.mxu0 0.0
        %909 = vmatprep.subr.mxu0 0.0
        %910 = vmatpush1.msra.mxu0 0.0
        %911 = vmatprep.subr.mxu0 0.0
        %912 = vmatpush1.msra.mxu0 0.0
        %913 = vmatprep.subr.mxu0 0.0
        %914 = vmatpush1.msra.mxu0 0.0
        %915 = vmatprep.subr.mxu0 0.0
        %916 = vmatpush1.msra.mxu0 0.0
        %917 = vmatprep.subr.mxu0 0.0
        %918 = vmatpush1.msra.mxu0 0.0
        %919 = vmatprep.subr.mxu0 0.0
        %920 = vmatpush1.msra.mxu0 0.0
        %921 = vmatprep.subr.mxu0 0.0
        %922 = vmatpush1.msra.mxu0 0.0
        %923 = vmatprep.subr.mxu0 0.0
        %924 = vmatpush1.msra.mxu0 0.0
        %925 = vmatprep.subr.mxu0 0.0
        %926 = vmatpush1.msra.mxu0 0.0
        %927 = vmatprep.subr.mxu0 0.0
        %928 = vmatpush1.msra.mxu0 0.0
        %929 = vmatprep.subr.mxu0 0.0
        %930 = vmatpush1.msra.mxu0 0.0
        %931 = vmatprep.subr.mxu0 0.0
        %932 = vmatpush1.msra.mxu0 0.0
        %933 = vmatprep.subr.mxu0 0.0
        %934 = vmatpush1.msra.mxu0 0.0
        %935 = vmatprep.subr.mxu0 0.0
        %936 = vmatpush1.msra.mxu0 0.0
        %937 = vmatprep.mubr.f32.mxu0 0.0
        %938 = vmatmul.mubr.f32.gmra.mrb[0].mxu0 %v871
        %v939 = vpop.f32.mrb[0].mxu0
        %v940 = vadd.f32 1e-06, %v939
        %v941 = vpop.f32.mrb[0].mxu0
        %942 = vdwg.mxu0
        %v943 = vrsqrt.pop %v940
        %v945 = vcombine.high %v943, %v943
        %v947 = vunpack.c.l.s4 1966171168
        %v948 = vunpack.c.0.s8 %v947
        %v949 = vlaneseq
        %v950 = vshrl.u32 %v949, 7
        %v951 = vsub.s32 %v948, %v950
        %v952 = vrot.slane %v943, %v951
        %v954 = vunpack.c.l.s4 1966171168
        %v955 = vunpack.c.0.s8 %v954
        %v956 = vlaneseq
        %v957 = vshrl.u32 %v956, 7
        %v958 = vsub.s32 %v955, %v957
        %v959 = vrot.slane %v945, %v958
        %v960 = vcombine.high %v952, %v952
        %v961 = vcombine.high %v959, %v959
        %v963 = vunpack.c.l.s4 1966171168
        %v964 = vunpack.c.0.s8 %v963
        %v965 = vlaneseq
        %v966 = vshrl.u32 %v965, 7
        %v967 = vsub.s32 %v964, %v966
        %v968 = vrot.slane %v952, %v967
        %v970 = vunpack.c.l.s4 1966171168
        %v971 = vunpack.c.0.s8 %v970
        %v972 = vlaneseq
        %v973 = vshrl.u32 %v972, 7
        %v974 = vsub.s32 %v971, %v973
        %v975 = vrot.slane %v959, %v974
        %v977 = vunpack.c.l.s4 1966171168
        %v978 = vunpack.c.0.s8 %v977
        %v979 = vlaneseq
        %v980 = vshrl.u32 %v979, 7
        %v981 = vsub.s32 %v978, %v980
        %v982 = vrot.slane %v960, %v981
        %v984 = vunpack.c.l.s4 1966171168
        %v985 = vunpack.c.0.s8 %v984
        %v986 = vlaneseq
        %v987 = vshrl.u32 %v986, 7
        %v988 = vsub.s32 %v985, %v987
        %v989 = vrot.slane %v961, %v988
        %v990 = vcombine.high %v968, %v968
        %v991 = vcombine.high %v975, %v975
        %v992 = vcombine.high %v982, %v982
        %v993 = vcombine.high %v989, %v989
        %v994 = vlaneseq
        %v995 = vshrl.u32 %v994, 7
        %v996 = vsub.s32 0, %v995
        %v997 = vrot.slane %v968, %v996
        %v998 = vlaneseq
        %v999 = vshrl.u32 %v998, 7
        %v1000 = vsub.s32 0, %v999
        %v1001 = vrot.slane %v982, %v1000
        %v1002 = vlaneseq
        %v1003 = vshrl.u32 %v1002, 7
        %v1004 = vsub.s32 0, %v1003
        %v1005 = vrot.slane %v990, %v1004
        %v1006 = vlaneseq
        %v1007 = vshrl.u32 %v1006, 7
        %v1008 = vsub.s32 0, %v1007
        %v1009 = vrot.slane %v992, %v1008
        %v1010 = vlaneseq
        %v1011 = vshrl.u32 %v1010, 7
        %v1012 = vsub.s32 0, %v1011
        %v1013 = vrot.slane %v975, %v1012
        %v1014 = vlaneseq
        %v1015 = vshrl.u32 %v1014, 7
        %v1016 = vsub.s32 0, %v1015
        %v1017 = vrot.slane %v989, %v1016
        %v1018 = vlaneseq
        %v1019 = vshrl.u32 %v1018, 7
        %v1020 = vsub.s32 0, %v1019
        %v1021 = vrot.slane %v991, %v1020
        %v1022 = vlaneseq
        %v1023 = vshrl.u32 %v1022, 7
        %v1024 = vsub.s32 0, %v1023
        %v1025 = vrot.slane %v993, %v1024
        %v1034 = vmul.f32 %v695, %v997
        %v1035 = vmul.f32 %v696, %v997
        %v1036 = vmul.f32 %v697, %v1001
        %v1037 = vmul.f32 %v698, %v1001
        %v1038 = vmul.f32 %v699, %v1005
        %v1039 = vmul.f32 %v700, %v1005
        %v1040 = vmul.f32 %v701, %v1009
        %v1041 = vmul.f32 %v702, %v1009
        %v1042 = vmul.f32 %v703, %v1013
        %v1043 = vmul.f32 %v704, %v1013
        %v1044 = vmul.f32 %v705, %v1017
        %v1045 = vmul.f32 %v706, %v1017
        %v1046 = vmul.f32 %v707, %v1021
        %v1047 = vmul.f32 %v708, %v1021
        %v1048 = vmul.f32 %v709, %v1025
        %v1049 = vmul.f32 %v710, %v1025
        %v1050 = vld [vmem:[#allocation8] sm:$0xf]
        %v1051 = vpack.c.bf16 %v1035, %v1034
        %v1052 = vpack.c.bf16 %v1037, %v1036
        %v1053 = vpack.c.bf16 %v1039, %v1038
        %v1054 = vpack.c.bf16 %v1041, %v1040
        %v1055 = vpack.c.bf16 %v1043, %v1042
        %v1056 = vpack.c.bf16 %v1045, %v1044
        %v1057 = vpack.c.bf16 %v1047, %v1046
        %v1058 = vpack.c.bf16 %v1049, %v1048
        %v1059 = vld [vmem:[#allocation5] sm:$0xff]
        %v1060 = vld [vmem:[#allocation5 + $0x8] sm:$0xf]
        %v1061 = vld [vmem:[#allocation5 + $0xc] sm:$0xff]
        %v1062 = vld [vmem:[#allocation5 + $0x14] sm:$0xf]
        %v1063 = vld [vmem:[#allocation5 + $0x18] sm:$0xff]
        %v1064 = vld [vmem:[#allocation5 + $0x20] sm:$0xf]
        %v1065 = vld [vmem:[#allocation5 + $0x24] sm:$0xff]
        %v1066 = vld [vmem:[#allocation5 + $0x2c] sm:$0xf]
        %v1067 = vld [vmem:[#allocation5 + $0x30] sm:$0xff]
        %v1068 = vld [vmem:[#allocation5 + $0x38] sm:$0xf]
        %v1069 = vld [vmem:[#allocation5 + $0x3c] sm:$0xff]
        %v1070 = vld [vmem:[#allocation5 + $0x44] sm:$0xf]
        %v1071 = vld [vmem:[#allocation5 + $0x48] sm:$0xff]
        %v1072 = vld [vmem:[#allocation5 + $0x50] sm:$0xf]
        %v1073 = vld [vmem:[#allocation5 + $0x54] sm:$0xff]
        %v1074 = vld [vmem:[#allocation5 + $0x5c] sm:$0xf]
        %v1075 = vld [vmem:[#allocation5 + $0x60] sm:$0xff]
        %v1076 = vld [vmem:[#allocation5 + $0x68] sm:$0xf]
        %v1077 = vld [vmem:[#allocation5 + $0x6c] sm:$0xff]
        %v1078 = vld [vmem:[#allocation5 + $0x74] sm:$0xf]
        %v1079 = vld [vmem:[#allocation5 + $0x78] sm:$0xff]
        %v1080 = vld [vmem:[#allocation5 + $0x80] sm:$0xf]
        %v1081 = vld [vmem:[#allocation5 + $0x84] sm:$0xff]
        %v1082 = vld [vmem:[#allocation5 + $0x8c] sm:$0xf]
        %v1083 = vld [vmem:[#allocation5 + $0x90] sm:$0xff]
        %v1084 = vld [vmem:[#allocation5 + $0x98] sm:$0xf]
        %v1085 = vld [vmem:[#allocation5 + $0x9c] sm:$0xff]
        %v1086 = vld [vmem:[#allocation5 + $0xa4] sm:$0xf]
        %v1087 = vld [vmem:[#allocation5 + $0xa8] sm:$0xff]
        %v1088 = vld [vmem:[#allocation5 + $0xb0] sm:$0xf]
        %v1089 = vld [vmem:[#allocation5 + $0xb4] sm:$0xff]
        %v1090 = vld [vmem:[#allocation5 + $0xbc] sm:$0xf]
        %v1123 = vunpack.c.l.b16 %v1059
        %v1124 = vunpack.c.h.b16 %v1059
        %v1125 = vunpack.c.l.b16 %v1060
        %v1126 = vunpack.c.l.b16 %v1061
        %v1127 = vunpack.c.h.b16 %v1061
        %v1128 = vunpack.c.l.b16 %v1062
        %v1129 = vunpack.c.l.b16 %v1063
        %v1130 = vunpack.c.h.b16 %v1063
        %v1131 = vunpack.c.l.b16 %v1064
        %v1132 = vunpack.c.l.b16 %v1065
        %v1133 = vunpack.c.h.b16 %v1065
        %v1134 = vunpack.c.l.b16 %v1066
        %v1135 = vunpack.c.l.b16 %v1067
        %v1136 = vunpack.c.h.b16 %v1067
        %v1137 = vunpack.c.l.b16 %v1068
        %v1138 = vunpack.c.l.b16 %v1069
        %v1139 = vunpack.c.h.b16 %v1069
        %v1140 = vunpack.c.l.b16 %v1070
        %v1141 = vunpack.c.l.b16 %v1071
        %v1142 = vunpack.c.h.b16 %v1071
        %v1143 = vunpack.c.l.b16 %v1072
        %v1144 = vunpack.c.l.b16 %v1073
        %v1145 = vunpack.c.h.b16 %v1073
        %v1146 = vunpack.c.l.b16 %v1074
        %v1147 = vunpack.c.l.b16 %v1075
        %v1148 = vunpack.c.h.b16 %v1075
        %v1149 = vunpack.c.l.b16 %v1076
        %v1150 = vunpack.c.l.b16 %v1077
        %v1151 = vunpack.c.h.b16 %v1077
        %v1152 = vunpack.c.l.b16 %v1078
        %v1153 = vunpack.c.l.b16 %v1079
        %v1154 = vunpack.c.h.b16 %v1079
        %v1155 = vunpack.c.l.b16 %v1080
        %v1156 = vunpack.c.l.b16 %v1081
        %v1157 = vunpack.c.h.b16 %v1081
        %v1158 = vunpack.c.l.b16 %v1082
        %v1159 = vunpack.c.l.b16 %v1083
        %v1160 = vunpack.c.h.b16 %v1083
        %v1161 = vunpack.c.l.b16 %v1084
        %v1162 = vunpack.c.l.b16 %v1085
        %v1163 = vunpack.c.h.b16 %v1085
        %v1164 = vunpack.c.l.b16 %v1086
        %v1165 = vunpack.c.l.b16 %v1087
        %v1166 = vunpack.c.h.b16 %v1087
        %v1167 = vunpack.c.l.b16 %v1088
        %v1168 = vunpack.c.l.b16 %v1089
        %v1169 = vunpack.c.h.b16 %v1089
        %v1170 = vunpack.c.l.b16 %v1090
        %v1171 = vpack.c.b16 %v1126, %v1123
        %v1172 = vpack.c.b16 %v1127, %v1124
        %v1173 = vpack.c.b16 %v1128, %v1125
        %v1174 = vpack.c.b16 %v1132, %v1129
        %v1175 = vpack.c.b16 %v1133, %v1130
        %v1176 = vpack.c.b16 %v1134, %v1131
        %v1177 = vpack.c.b16 %v1138, %v1135
        %v1178 = vpack.c.b16 %v1139, %v1136
        %v1179 = vpack.c.b16 %v1140, %v1137
        %v1180 = vpack.c.b16 %v1144, %v1141
        %v1181 = vpack.c.b16 %v1145, %v1142
        %v1182 = vpack.c.b16 %v1146, %v1143
        %v1183 = vpack.c.b16 %v1150, %v1147
        %v1184 = vpack.c.b16 %v1151, %v1148
        %v1185 = vpack.c.b16 %v1152, %v1149
        %v1186 = vpack.c.b16 %v1156, %v1153
        %v1187 = vpack.c.b16 %v1157, %v1154
        %v1188 = vpack.c.b16 %v1158, %v1155
        %v1189 = vpack.c.b16 %v1162, %v1159
        %v1190 = vpack.c.b16 %v1163, %v1160
        %v1191 = vpack.c.b16 %v1164, %v1161
        %v1192 = vpack.c.b16 %v1168, %v1165
        %v1193 = vpack.c.b16 %v1169, %v1166
        %v1194 = vpack.c.b16 %v1170, %v1167
        %1219 = vmatprep.subr.bf16.mxu0 %v1172
        %1220 = vmatpush1.bf16.msra.mxu0 %v1171
        %1221 = vmatprep.subr.bf16.mxu0 %v1175
        %1222 = vmatpush1.bf16.msra.mxu0 %v1174
        %1223 = vmatprep.subr.bf16.mxu0 %v1178
        %1224 = vmatpush1.bf16.msra.mxu0 %v1177
        %1225 = vmatprep.subr.bf16.mxu0 %v1181
        %1226 = vmatpush1.bf16.msra.mxu0 %v1180
        %1227 = vmatprep.subr.bf16.mxu0 %v1184
        %1228 = vmatpush1.bf16.msra.mxu0 %v1183
        %1229 = vmatprep.subr.bf16.mxu0 %v1187
        %1230 = vmatpush1.bf16.msra.mxu0 %v1186
        %1231 = vmatprep.subr.bf16.mxu0 %v1190
        %1232 = vmatpush1.bf16.msra.mxu0 %v1189
        %1233 = vmatprep.subr.bf16.mxu0 %v1193
        %1234 = vmatpush1.bf16.msra.mxu0 %v1192
        %1235 = vmatprep.subr.bf16.mxu0 0
        %1236 = vmatpush1.bf16.msra.mxu0 0
        %1237 = vmatprep.subr.bf16.mxu0 0
        %1238 = vmatpush1.bf16.msra.mxu0 0
        %1239 = vmatprep.subr.bf16.mxu0 0
        %1240 = vmatpush1.bf16.msra.mxu0 0
        %1241 = vmatprep.subr.bf16.mxu0 0
        %1242 = vmatpush1.bf16.msra.mxu0 0
        %1243 = vmatprep.subr.bf16.mxu0 0
        %1244 = vmatpush1.bf16.msra.mxu0 0
        %1245 = vmatprep.subr.bf16.mxu0 0
        %1246 = vmatpush1.bf16.msra.mxu0 0
        %1247 = vmatprep.subr.bf16.mxu0 0
        %1248 = vmatpush1.bf16.msra.mxu0 0
        %1249 = vmatprep.subr.bf16.mxu0 0
        %1250 = vmatpush1.bf16.msra.mxu0 0
        %1251 = vmatprep.mubr.bf16.mxu0 0
        %1252 = vmatmul.mubr.bf16.gmra.mrb[0].mxu0 %v1051
        %v1253 = vpop.f32.mrb[0].mxu0
        %v1254 = vadd.f32 0.0, %v1253
        %v1255 = vpop.f32.mrb[0].mxu0
        %v1256 = vadd.f32 0.0, %v1255
        %v1257 = vpop.f32.mrb[0].mxu0
        %v1258 = vadd.f32 0.0, %v1257
        %v1259 = vpop.f32.mrb[0].mxu0
        %v1260 = vadd.f32 0.0, %v1259
        %1261 = vmatprep.mubr.bf16.mxu0 0
        %1262 = vmatmul.mubr.bf16.gmra.mrb[0].mxu0 %v1052
        %v1263 = vpop.f32.mrb[0].mxu0
        %v1264 = vadd.f32 0.0, %v1263
        %v1265 = vpop.f32.mrb[0].mxu0
        %v1266 = vadd.f32 0.0, %v1265
        %v1267 = vpop.f32.mrb[0].mxu0
        %v1268 = vadd.f32 0.0, %v1267
        %v1269 = vpop.f32.mrb[0].mxu0
        %v1270 = vadd.f32 0.0, %v1269
        %1271 = vmatprep.mubr.bf16.mxu0 0
        %1272 = vmatmul.mubr.bf16.gmra.mrb[0].mxu0 %v1053
        %v1273 = vpop.f32.mrb[0].mxu0
        %v1274 = vadd.f32 0.0, %v1273
        %v1275 = vpop.f32.mrb[0].mxu0
        %v1276 = vadd.f32 0.0, %v1275
        %v1277 = vpop.f32.mrb[0].mxu0
        %v1278 = vadd.f32 0.0, %v1277
        %v1279 = vpop.f32.mrb[0].mxu0
        %v1280 = vadd.f32 0.0, %v1279
        %1281 = vmatprep.mubr.bf16.mxu0 0
        %1282 = vmatmul.mubr.bf16.gmra.mrb[0].mxu0 %v1054
        %v1283 = vpop.f32.mrb[0].mxu0
        %v1284 = vadd.f32 0.0, %v1283
        %v1285 = vpop.f32.mrb[0].mxu0
        %v1286 = vadd.f32 0.0, %v1285
        %v1287 = vpop.f32.mrb[0].mxu0
        %v1288 = vadd.f32 0.0, %v1287
        %v1289 = vpop.f32.mrb[0].mxu0
        %v1290 = vadd.f32 0.0, %v1289
        %1291 = vmatprep.mubr.bf16.mxu0 0
        %1292 = vmatmul.mubr.bf16.gmra.mrb[0].mxu0 %v1055
        %v1293 = vpop.f32.mrb[0].mxu0
        %v1294 = vadd.f32 0.0, %v1293
        %v1295 = vpop.f32.mrb[0].mxu0
        %v1296 = vadd.f32 0.0, %v1295
        %v1297 = vpop.f32.mrb[0].mxu0
        %v1298 = vadd.f32 0.0, %v1297
        %v1299 = vpop.f32.mrb[0].mxu0
        %v1300 = vadd.f32 0.0, %v1299
        %1301 = vmatprep.mubr.bf16.mxu0 0
        %1302 = vmatmul.mubr.bf16.gmra.mrb[0].mxu0 %v1056
        %v1303 = vpop.f32.mrb[0].mxu0
        %v1304 = vadd.f32 0.0, %v1303
        %v1305 = vpop.f32.mrb[0].mxu0
        %v1306 = vadd.f32 0.0, %v1305
        %v1307 = vpop.f32.mrb[0].mxu0
        %v1308 = vadd.f32 0.0, %v1307
        %v1309 = vpop.f32.mrb[0].mxu0
        %v1310 = vadd.f32 0.0, %v1309
        %1311 = vmatprep.mubr.bf16.mxu0 0
        %1312 = vmatmul.mubr.bf16.gmra.mrb[0].mxu0 %v1057
        %v1313 = vpop.f32.mrb[0].mxu0
        %v1314 = vadd.f32 0.0, %v1313
        %v1315 = vpop.f32.mrb[0].mxu0
        %v1316 = vadd.f32 0.0, %v1315
        %v1317 = vpop.f32.mrb[0].mxu0
        %v1318 = vadd.f32 0.0, %v1317
        %v1319 = vpop.f32.mrb[0].mxu0
        %v1320 = vadd.f32 0.0, %v1319
        %1321 = vmatprep.mubr.bf16.mxu0 0
        %1322 = vmatmul.mubr.bf16.gmra.mrb[0].mxu0 %v1058
        %v1323 = vpop.f32.mrb[0].mxu0
        %v1324 = vadd.f32 0.0, %v1323
        %v1325 = vpop.f32.mrb[0].mxu0
        %v1326 = vadd.f32 0.0, %v1325
        %v1327 = vpop.f32.mrb[0].mxu0
        %v1328 = vadd.f32 0.0, %v1327
        %v1329 = vpop.f32.mrb[0].mxu0
        %v1330 = vadd.f32 0.0, %v1329
        %1331 = vdwg.mxu0
        %1332 = vmatprep.subr.bf16.mxu0 0
        %1333 = vmatpush1.bf16.msra.mxu0 %v1173
        %1334 = vmatprep.subr.bf16.mxu0 0
        %1335 = vmatpush1.bf16.msra.mxu0 %v1176
        %1336 = vmatprep.subr.bf16.mxu0 0
        %1337 = vmatpush1.bf16.msra.mxu0 %v1179
        %1338 = vmatprep.subr.bf16.mxu0 0
        %1339 = vmatpush1.bf16.msra.mxu0 %v1182
        %1340 = vmatprep.subr.bf16.mxu0 0
        %1341 = vmatpush1.bf16.msra.mxu0 %v1185
        %1342 = vmatprep.subr.bf16.mxu0 0
        %1343 = vmatpush1.bf16.msra.mxu0 %v1188
        %1344 = vmatprep.subr.bf16.mxu0 0
        %1345 = vmatpush1.bf16.msra.mxu0 %v1191
        %1346 = vmatprep.subr.bf16.mxu0 0
        %1347 = vmatpush1.bf16.msra.mxu0 %v1194
        %1348 = vmatprep.subr.bf16.mxu0 0
        %1349 = vmatpush1.bf16.msra.mxu0 0
        %1350 = vmatprep.subr.bf16.mxu0 0
        %1351 = vmatpush1.bf16.msra.mxu0 0
        %1352 = vmatprep.subr.bf16.mxu0 0
        %1353 = vmatpush1.bf16.msra.mxu0 0
        %1354 = vmatprep.subr.bf16.mxu0 0
        %1355 = vmatpush1.bf16.msra.mxu0 0
        %1356 = vmatprep.subr.bf16.mxu0 0
        %1357 = vmatpush1.bf16.msra.mxu0 0
        %1358 = vmatprep.subr.bf16.mxu0 0
        %1359 = vmatpush1.bf16.msra.mxu0 0
        %1360 = vmatprep.subr.bf16.mxu0 0
        %1361 = vmatpush1.bf16.msra.mxu0 0
        %1362 = vmatprep.subr.bf16.mxu0 0
        %1363 = vmatpush1.bf16.msra.mxu0 0
        %1364 = vmatprep.mubr.bf16.mxu0 0
        %1365 = vmatmul.mubr.bf16.gmra.mrb[0].mxu0 %v1051
        %v1366 = vpop.f32.mrb[0].mxu0
        %v1367 = vadd.f32 0.0, %v1366
        %v1368 = vpop.f32.mrb[0].mxu0
        %v1369 = vpop.f32.mrb[0].mxu0
        %v1370 = vadd.f32 0.0, %v1369
        %v1371 = vpop.f32.mrb[0].mxu0
        %1372 = vmatprep.mubr.bf16.mxu0 0
        %1373 = vmatmul.mubr.bf16.gmra.mrb[0].mxu0 %v1052
        %v1374 = vpop.f32.mrb[0].mxu0
        %v1375 = vadd.f32 0.0, %v1374
        %v1376 = vpop.f32.mrb[0].mxu0
        %v1377 = vpop.f32.mrb[0].mxu0
        %v1378 = vadd.f32 0.0, %v1377
        %v1379 = vpop.f32.mrb[0].mxu0
        %1380 = vmatprep.mubr.bf16.mxu0 0
        %1381 = vmatmul.mubr.bf16.gmra.mrb[0].mxu0 %v1053
        %v1382 = vpop.f32.mrb[0].mxu0
        %v1383 = vadd.f32 0.0, %v1382
        %v1384 = vpop.f32.mrb[0].mxu0
        %v1385 = vpop.f32.mrb[0].mxu0
        %v1386 = vadd.f32 0.0, %v1385
        %v1387 = vpop.f32.mrb[0].mxu0
        %1388 = vmatprep.mubr.bf16.mxu0 0
        %1389 = vmatmul.mubr.bf16.gmra.mrb[0].mxu0 %v1054
        %v1390 = vpop.f32.mrb[0].mxu0
        %v1391 = vadd.f32 0.0, %v1390
        %v1392 = vpop.f32.mrb[0].mxu0
        %v1393 = vpop.f32.mrb[0].mxu0
        %v1394 = vadd.f32 0.0, %v1393
        %v1395 = vpop.f32.mrb[0].mxu0
        %1396 = vmatprep.mubr.bf16.mxu0 0
        %1397 = vmatmul.mubr.bf16.gmra.mrb[0].mxu0 %v1055
        %v1398 = vpop.f32.mrb[0].mxu0
        %v1399 = vadd.f32 0.0, %v1398
        %v1400 = vpop.f32.mrb[0].mxu0
        %v1401 = vpop.f32.mrb[0].mxu0
        %v1402 = vadd.f32 0.0, %v1401
        %v1403 = vpop.f32.mrb[0].mxu0
        %1404 = vmatprep.mubr.bf16.mxu0 0
        %1405 = vmatmul.mubr.bf16.gmra.mrb[0].mxu0 %v1056
        %v1406 = vpop.f32.mrb[0].mxu0
        %v1407 = vadd.f32 0.0, %v1406
        %v1408 = vpop.f32.mrb[0].mxu0
        %v1409 = vpop.f32.mrb[0].mxu0
        %v1410 = vadd.f32 0.0, %v1409
        %v1411 = vpop.f32.mrb[0].mxu0
        %1412 = vmatprep.mubr.bf16.mxu0 0
        %1413 = vmatmul.mubr.bf16.gmra.mrb[0].mxu0 %v1057
        %v1414 = vpop.f32.mrb[0].mxu0
        %v1415 = vadd.f32 0.0, %v1414
        %v1416 = vpop.f32.mrb[0].mxu0
        %v1417 = vpop.f32.mrb[0].mxu0
        %v1418 = vadd.f32 0.0, %v1417
        %v1419 = vpop.f32.mrb[0].mxu0
        %1420 = vmatprep.mubr.bf16.mxu0 0
        %1421 = vmatmul.mubr.bf16.gmra.mrb[0].mxu0 %v1058
        %v1422 = vpop.f32.mrb[0].mxu0
        %v1423 = vadd.f32 0.0, %v1422
        %v1424 = vpop.f32.mrb[0].mxu0
        %v1425 = vpop.f32.mrb[0].mxu0
        %v1426 = vadd.f32 0.0, %v1425
        %v1427 = vpop.f32.mrb[0].mxu0
        %1428 = vdwg.mxu0
        %v1429 = vlaneseq
        %v1430 = vshrl.u32 %v1429, 7
        %v1431 = vsub.s32 0, %v1430
        %v1432 = vrot.slane %v1050, %v1431
        %v1433 = vadd.f32 %v1254, %v1432
        %v1434 = vadd.f32 %v1258, %v1432
        %v1435 = vadd.f32 %v1264, %v1432
        %v1436 = vadd.f32 %v1268, %v1432
        %v1437 = vadd.f32 %v1274, %v1432
        %v1438 = vadd.f32 %v1278, %v1432
        %v1439 = vadd.f32 %v1284, %v1432
        %v1440 = vadd.f32 %v1288, %v1432
        %v1441 = vadd.f32 %v1294, %v1432
        %v1442 = vadd.f32 %v1298, %v1432
        %v1443 = vadd.f32 %v1304, %v1432
        %v1444 = vadd.f32 %v1308, %v1432
        %v1445 = vadd.f32 %v1314, %v1432
        %v1446 = vadd.f32 %v1318, %v1432
        %v1447 = vadd.f32 %v1324, %v1432
        %v1448 = vadd.f32 %v1328, %v1432
        %v1449 = vlaneseq
        %v1450 = vshrl.u32 %v1449, 7
        %v1451 = vsub.s32 1, %v1450
        %v1452 = vrot.slane %v1050, %v1451
        %v1453 = vadd.f32 %v1256, %v1452
        %v1454 = vadd.f32 %v1260, %v1452
        %v1455 = vadd.f32 %v1266, %v1452
        %v1456 = vadd.f32 %v1270, %v1452
        %v1457 = vadd.f32 %v1276, %v1452
        %v1458 = vadd.f32 %v1280, %v1452
        %v1459 = vadd.f32 %v1286, %v1452
        %v1460 = vadd.f32 %v1290, %v1452
        %v1461 = vadd.f32 %v1296, %v1452
        %v1462 = vadd.f32 %v1300, %v1452
        %v1463 = vadd.f32 %v1306, %v1452
        %v1464 = vadd.f32 %v1310, %v1452
        %v1465 = vadd.f32 %v1316, %v1452
        %v1466 = vadd.f32 %v1320, %v1452
        %v1467 = vadd.f32 %v1326, %v1452
        %v1468 = vadd.f32 %v1330, %v1452
        %v1469 = vlaneseq
        %v1470 = vshrl.u32 %v1469, 7
        %v1471 = vsub.s32 2, %v1470
        %v1472 = vrot.slane %v1050, %v1471
        %v1473 = vadd.f32 %v1367, %v1472
        %v1474 = vadd.f32 %v1370, %v1472
        %v1475 = vadd.f32 %v1375, %v1472
        %v1476 = vadd.f32 %v1378, %v1472
        %v1477 = vadd.f32 %v1383, %v1472
        %v1478 = vadd.f32 %v1386, %v1472
        %v1479 = vadd.f32 %v1391, %v1472
        %v1480 = vadd.f32 %v1394, %v1472
        %v1481 = vadd.f32 %v1399, %v1472
        %v1482 = vadd.f32 %v1402, %v1472
        %v1483 = vadd.f32 %v1407, %v1472
        %v1484 = vadd.f32 %v1410, %v1472
        %v1485 = vadd.f32 %v1415, %v1472
        %v1486 = vadd.f32 %v1418, %v1472
        %v1487 = vadd.f32 %v1423, %v1472
        %v1488 = vadd.f32 %v1426, %v1472
        %v1489 = vpack.c.bf16 %v1434, %v1433
        %v1490 = vpack.c.bf16 %v1436, %v1435
        %v1491 = vpack.c.bf16 %v1438, %v1437
        %v1492 = vpack.c.bf16 %v1440, %v1439
        %v1493 = vpack.c.bf16 %v1442, %v1441
        %v1494 = vpack.c.bf16 %v1444, %v1443
        %v1495 = vpack.c.bf16 %v1446, %v1445
        %v1496 = vpack.c.bf16 %v1448, %v1447
        %v1497 = vpack.c.bf16 %v1454, %v1453
        %v1498 = vpack.c.bf16 %v1456, %v1455
        %v1499 = vpack.c.bf16 %v1458, %v1457
        %v1500 = vpack.c.bf16 %v1460, %v1459
        %v1501 = vpack.c.bf16 %v1462, %v1461
        %v1502 = vpack.c.bf16 %v1464, %v1463
        %v1503 = vpack.c.bf16 %v1466, %v1465
        %v1504 = vpack.c.bf16 %v1468, %v1467
        %1505 = vmatprep.subr.bf16.mxu0 0
        %1506 = vmatpush1.bf16.xpose.msra.mxu0 %v1497
        %1507 = vmatprep.subr.bf16.mxu0 0
        %1508 = vmatpush1.bf16.xpose.msra.mxu0 0
        %1509 = vmatprep.subr.bf16.mxu0 0
        %1510 = vmatpush1.bf16.xpose.msra.mxu0 0
        %1511 = vmatprep.subr.bf16.mxu0 0
        %1512 = vmatpush1.bf16.xpose.msra.mxu0 0
        %1513 = vmatprep.subr.bf16.mxu0 0
        %1514 = vmatpush1.bf16.xpose.msra.mxu0 0
        %1515 = vmatprep.subr.bf16.mxu0 0
        %1516 = vmatpush1.bf16.xpose.msra.mxu0 0
        %1517 = vmatprep.subr.bf16.mxu0 0
        %1518 = vmatpush1.bf16.xpose.msra.mxu0 0
        %1519 = vmatprep.subr.bf16.mxu0 0
        %1520 = vmatpush1.bf16.xpose.msra.mxu0 0
        %1521 = vmatprep.subr.bf16.mxu0 0
        %1522 = vmatpush1.bf16.xpose.msra.mxu0 0
        %1523 = vmatprep.subr.bf16.mxu0 0
        %1524 = vmatpush1.bf16.xpose.msra.mxu0 0
        %1525 = vmatprep.subr.bf16.mxu0 0
        %1526 = vmatpush1.bf16.xpose.msra.mxu0 0
        %1527 = vmatprep.subr.bf16.mxu0 0
        %1528 = vmatpush1.bf16.xpose.msra.mxu0 0
        %1529 = vmatprep.subr.bf16.mxu0 0
        %1530 = vmatpush1.bf16.xpose.msra.mxu0 0
        %1531 = vmatprep.subr.bf16.mxu0 0
        %1532 = vmatpush1.bf16.xpose.msra.mxu0 0
        %1533 = vmatprep.subr.bf16.mxu0 0
        %1534 = vmatpush1.bf16.xpose.msra.mxu0 0
        %1535 = vmatprep.subr.bf16.mxu0 0
        %1536 = vmatpush1.bf16.xpose.msra.mxu0 0
        %1537 = vmatprep.mubr.bf16.mxu0 0
        %1538 = vmatmul.mubr.bf16.gmra.mrb[0].mxu0 %v1489
        %v1539 = vpop.f32.mrb[0].mxu0
        %v1540 = vadd.f32 0.0, %v1539
        %v1541 = vpop.f32.mrb[0].mxu0
        %v1542 = vpop.f32.mrb[0].mxu0
        %v1543 = vadd.f32 0.0, %v1542
        %v1544 = vpop.f32.mrb[0].mxu0
        %1545 = vdwg.mxu0
        %1546 = vmatprep.subr.bf16.mxu0 0
        %1547 = vmatpush1.bf16.xpose.msra.mxu0 %v1498
        %1548 = vmatprep.subr.bf16.mxu0 0
        %1549 = vmatpush1.bf16.xpose.msra.mxu0 0
        %1550 = vmatprep.subr.bf16.mxu0 0
        %1551 = vmatpush1.bf16.xpose.msra.mxu0 0
        %1552 = vmatprep.subr.bf16.mxu0 0
        %1553 = vmatpush1.bf16.xpose.msra.mxu0 0
        %1554 = vmatprep.subr.bf16.mxu0 0
        %1555 = vmatpush1.bf16.xpose.msra.mxu0 0
        %1556 = vmatprep.subr.bf16.mxu0 0
        %1557 = vmatpush1.bf16.xpose.msra.mxu0 0
        %1558 = vmatprep.subr.bf16.mxu0 0
        %1559 = vmatpush1.bf16.xpose.msra.mxu0 0
        %1560 = vmatprep.subr.bf16.mxu0 0
        %1561 = vmatpush1.bf16.xpose.msra.mxu0 0
        %1562 = vmatprep.subr.bf16.mxu0 0
        %1563 = vmatpush1.bf16.xpose.msra.mxu0 0
        %1564 = vmatprep.subr.bf16.mxu0 0
        %1565 = vmatpush1.bf16.xpose.msra.mxu0 0
        %1566 = vmatprep.subr.bf16.mxu0 0
        %1567 = vmatpush1.bf16.xpose.msra.mxu0 0
        %1568 = vmatprep.subr.bf16.mxu0 0
        %1569 = vmatpush1.bf16.xpose.msra.mxu0 0
        %1570 = vmatprep.subr.bf16.mxu0 0
        %1571 = vmatpush1.bf16.xpose.msra.mxu0 0
        %1572 = vmatprep.subr.bf16.mxu0 0
        %1573 = vmatpush1.bf16.xpose.msra.mxu0 0
        %1574 = vmatprep.subr.bf16.mxu0 0
        %1575 = vmatpush1.bf16.xpose.msra.mxu0 0
        %1576 = vmatprep.subr.bf16.mxu0 0
        %1577 = vmatpush1.bf16.xpose.msra.mxu0 0
        %1578 = vmatprep.mubr.bf16.mxu0 0
        %1579 = vmatmul.mubr.bf16.gmra.mrb[0].mxu0 %v1490
        %v1580 = vpop.f32.mrb[0].mxu0
        %v1581 = vadd.f32 0.0, %v1580
        %v1582 = vpop.f32.mrb[0].mxu0
        %v1583 = vpop.f32.mrb[0].mxu0
        %v1584 = vadd.f32 0.0, %v1583
        %v1585 = vpop.f32.mrb[0].mxu0
        %1586 = vdwg.mxu0
        %1587 = vmatprep.subr.bf16.mxu0 0
        %1588 = vmatpush1.bf16.xpose.msra.mxu0 %v1499
        %1589 = vmatprep.subr.bf16.mxu0 0
        %1590 = vmatpush1.bf16.xpose.msra.mxu0 0
        %1591 = vmatprep.subr.bf16.mxu0 0
        %1592 = vmatpush1.bf16.xpose.msra.mxu0 0
        %1593 = vmatprep.subr.bf16.mxu0 0
        %1594 = vmatpush1.bf16.xpose.msra.mxu0 0
        %1595 = vmatprep.subr.bf16.mxu0 0
        %1596 = vmatpush1.bf16.xpose.msra.mxu0 0
        %1597 = vmatprep.subr.bf16.mxu0 0
        %1598 = vmatpush1.bf16.xpose.msra.mxu0 0
        %1599 = vmatprep.subr.bf16.mxu0 0
        %1600 = vmatpush1.bf16.xpose.msra.mxu0 0
        %1601 = vmatprep.subr.bf16.mxu0 0
        %1602 = vmatpush1.bf16.xpose.msra.mxu0 0
        %1603 = vmatprep.subr.bf16.mxu0 0
        %1604 = vmatpush1.bf16.xpose.msra.mxu0 0
        %1605 = vmatprep.subr.bf16.mxu0 0
        %1606 = vmatpush1.bf16.xpose.msra.mxu0 0
        %1607 = vmatprep.subr.bf16.mxu0 0
        %1608 = vmatpush1.bf16.xpose.msra.mxu0 0
        %1609 = vmatprep.subr.bf16.mxu0 0
        %1610 = vmatpush1.bf16.xpose.msra.mxu0 0
        %1611 = vmatprep.subr.bf16.mxu0 0
        %1612 = vmatpush1.bf16.xpose.msra.mxu0 0
        %1613 = vmatprep.subr.bf16.mxu0 0
        %1614 = vmatpush1.bf16.xpose.msra.mxu0 0
        %1615 = vmatprep.subr.bf16.mxu0 0
        %1616 = vmatpush1.bf16.xpose.msra.mxu0 0
        %1617 = vmatprep.subr.bf16.mxu0 0
        %1618 = vmatpush1.bf16.xpose.msra.mxu0 0
        %1619 = vmatprep.mubr.bf16.mxu0 0
        %1620 = vmatmul.mubr.bf16.gmra.mrb[0].mxu0 %v1491
        %v1621 = vpop.f32.mrb[0].mxu0
        %v1622 = vadd.f32 0.0, %v1621
        %v1623 = vpop.f32.mrb[0].mxu0
        %v1624 = vpop.f32.mrb[0].mxu0
        %v1625 = vadd.f32 0.0, %v1624
        %v1626 = vpop.f32.mrb[0].mxu0
        %1627 = vdwg.mxu0
        %1628 = vmatprep.subr.bf16.mxu0 0
        %1629 = vmatpush1.bf16.xpose.msra.mxu0 %v1500
        %1630 = vmatprep.subr.bf16.mxu0 0
        %1631 = vmatpush1.bf16.xpose.msra.mxu0 0
        %1632 = vmatprep.subr.bf16.mxu0 0
        %1633 = vmatpush1.bf16.xpose.msra.mxu0 0
        %1634 = vmatprep.subr.bf16.mxu0 0
        %1635 = vmatpush1.bf16.xpose.msra.mxu0 0
        %1636 = vmatprep.subr.bf16.mxu0 0
        %1637 = vmatpush1.bf16.xpose.msra.mxu0 0
        %1638 = vmatprep.subr.bf16.mxu0 0
        %1639 = vmatpush1.bf16.xpose.msra.mxu0 0
        %1640 = vmatprep.subr.bf16.mxu0 0
        %1641 = vmatpush1.bf16.xpose.msra.mxu0 0
        %1642 = vmatprep.subr.bf16.mxu0 0
        %1643 = vmatpush1.bf16.xpose.msra.mxu0 0
        %1644 = vmatprep.subr.bf16.mxu0 0
        %1645 = vmatpush1.bf16.xpose.msra.mxu0 0
        %1646 = vmatprep.subr.bf16.mxu0 0
        %1647 = vmatpush1.bf16.xpose.msra.mxu0 0
        %1648 = vmatprep.subr.bf16.mxu0 0
        %1649 = vmatpush1.bf16.xpose.msra.mxu0 0
        %1650 = vmatprep.subr.bf16.mxu0 0
        %1651 = vmatpush1.bf16.xpose.msra.mxu0 0
        %1652 = vmatprep.subr.bf16.mxu0 0
        %1653 = vmatpush1.bf16.xpose.msra.mxu0 0
        %1654 = vmatprep.subr.bf16.mxu0 0
        %1655 = vmatpush1.bf16.xpose.msra.mxu0 0
        %1656 = vmatprep.subr.bf16.mxu0 0
        %1657 = vmatpush1.bf16.xpose.msra.mxu0 0
        %1658 = vmatprep.subr.bf16.mxu0 0
        %1659 = vmatpush1.bf16.xpose.msra.mxu0 0
        %1660 = vmatprep.mubr.bf16.mxu0 0
        %1661 = vmatmul.mubr.bf16.gmra.mrb[0].mxu0 %v1492
        %v1662 = vpop.f32.mrb[0].mxu0
        %v1663 = vadd.f32 0.0, %v1662
        %v1664 = vpop.f32.mrb[0].mxu0
        %v1665 = vpop.f32.mrb[0].mxu0
        %v1666 = vadd.f32 0.0, %v1665
        %v1667 = vpop.f32.mrb[0].mxu0
        %1668 = vdwg.mxu0
        %1669 = vmatprep.subr.bf16.mxu0 0
        %1670 = vmatpush1.bf16.xpose.msra.mxu0 %v1501
        %1671 = vmatprep.subr.bf16.mxu0 0
        %1672 = vmatpush1.bf16.xpose.msra.mxu0 0
        %1673 = vmatprep.subr.bf16.mxu0 0
        %1674 = vmatpush1.bf16.xpose.msra.mxu0 0
        %1675 = vmatprep.subr.bf16.mxu0 0
        %1676 = vmatpush1.bf16.xpose.msra.mxu0 0
        %1677 = vmatprep.subr.bf16.mxu0 0
        %1678 = vmatpush1.bf16.xpose.msra.mxu0 0
        %1679 = vmatprep.subr.bf16.mxu0 0
        %1680 = vmatpush1.bf16.xpose.msra.mxu0 0
        %1681 = vmatprep.subr.bf16.mxu0 0
        %1682 = vmatpush1.bf16.xpose.msra.mxu0 0
        %1683 = vmatprep.subr.bf16.mxu0 0
        %1684 = vmatpush1.bf16.xpose.msra.mxu0 0
        %1685 = vmatprep.subr.bf16.mxu0 0
        %1686 = vmatpush1.bf16.xpose.msra.mxu0 0
        %1687 = vmatprep.subr.bf16.mxu0 0
        %1688 = vmatpush1.bf16.xpose.msra.mxu0 0
        %1689 = vmatprep.subr.bf16.mxu0 0
        %1690 = vmatpush1.bf16.xpose.msra.mxu0 0
        %1691 = vmatprep.subr.bf16.mxu0 0
        %1692 = vmatpush1.bf16.xpose.msra.mxu0 0
        %1693 = vmatprep.subr.bf16.mxu0 0
        %1694 = vmatpush1.bf16.xpose.msra.mxu0 0
        %1695 = vmatprep.subr.bf16.mxu0 0
        %1696 = vmatpush1.bf16.xpose.msra.mxu0 0
        %1697 = vmatprep.subr.bf16.mxu0 0
        %1698 = vmatpush1.bf16.xpose.msra.mxu0 0
        %1699 = vmatprep.subr.bf16.mxu0 0
        %1700 = vmatpush1.bf16.xpose.msra.mxu0 0
        %1701 = vmatprep.mubr.bf16.mxu0 0
        %1702 = vmatmul.mubr.bf16.gmra.mrb[0].mxu0 %v1493
        %v1703 = vpop.f32.mrb[0].mxu0
        %v1704 = vadd.f32 0.0, %v1703
        %v1705 = vpop.f32.mrb[0].mxu0
        %v1706 = vpop.f32.mrb[0].mxu0
        %v1707 = vadd.f32 0.0, %v1706
        %v1708 = vpop.f32.mrb[0].mxu0
        %1709 = vdwg.mxu0
        %1710 = vmatprep.subr.bf16.mxu0 0
        %1711 = vmatpush1.bf16.xpose.msra.mxu0 %v1502
        %1712 = vmatprep.subr.bf16.mxu0 0
        %1713 = vmatpush1.bf16.xpose.msra.mxu0 0
        %1714 = vmatprep.subr.bf16.mxu0 0
        %1715 = vmatpush1.bf16.xpose.msra.mxu0 0
        %1716 = vmatprep.subr.bf16.mxu0 0
        %1717 = vmatpush1.bf16.xpose.msra.mxu0 0
        %1718 = vmatprep.subr.bf16.mxu0 0
        %1719 = vmatpush1.bf16.xpose.msra.mxu0 0
        %1720 = vmatprep.subr.bf16.mxu0 0
        %1721 = vmatpush1.bf16.xpose.msra.mxu0 0
        %1722 = vmatprep.subr.bf16.mxu0 0
        %1723 = vmatpush1.bf16.xpose.msra.mxu0 0
        %1724 = vmatprep.subr.bf16.mxu0 0
        %1725 = vmatpush1.bf16.xpose.msra.mxu0 0
        %1726 = vmatprep.subr.bf16.mxu0 0
        %1727 = vmatpush1.bf16.xpose.msra.mxu0 0
        %1728 = vmatprep.subr.bf16.mxu0 0
        %1729 = vmatpush1.bf16.xpose.msra.mxu0 0
        %1730 = vmatprep.subr.bf16.mxu0 0
        %1731 = vmatpush1.bf16.xpose.msra.mxu0 0
        %1732 = vmatprep.subr.bf16.mxu0 0
        %1733 = vmatpush1.bf16.xpose.msra.mxu0 0
        %1734 = vmatprep.subr.bf16.mxu0 0
        %1735 = vmatpush1.bf16.xpose.msra.mxu0 0
        %1736 = vmatprep.subr.bf16.mxu0 0
        %1737 = vmatpush1.bf16.xpose.msra.mxu0 0
        %1738 = vmatprep.subr.bf16.mxu0 0
        %1739 = vmatpush1.bf16.xpose.msra.mxu0 0
        %1740 = vmatprep.subr.bf16.mxu0 0
        %1741 = vmatpush1.bf16.xpose.msra.mxu0 0
        %1742 = vmatprep.mubr.bf16.mxu0 0
        %1743 = vmatmul.mubr.bf16.gmra.mrb[0].mxu0 %v1494
        %v1744 = vpop.f32.mrb[0].mxu0
        %v1745 = vadd.f32 0.0, %v1744
        %v1746 = vpop.f32.mrb[0].mxu0
        %v1747 = vpop.f32.mrb[0].mxu0
        %v1748 = vadd.f32 0.0, %v1747
        %v1749 = vpop.f32.mrb[0].mxu0
        %1750 = vdwg.mxu0
        %1751 = vmatprep.subr.bf16.mxu0 0
        %1752 = vmatpush1.bf16.xpose.msra.mxu0 %v1503
        %1753 = vmatprep.subr.bf16.mxu0 0
        %1754 = vmatpush1.bf16.xpose.msra.mxu0 0
        %1755 = vmatprep.subr.bf16.mxu0 0
        %1756 = vmatpush1.bf16.xpose.msra.mxu0 0
        %1757 = vmatprep.subr.bf16.mxu0 0
        %1758 = vmatpush1.bf16.xpose.msra.mxu0 0
        %1759 = vmatprep.subr.bf16.mxu0 0
        %1760 = vmatpush1.bf16.xpose.msra.mxu0 0
        %1761 = vmatprep.subr.bf16.mxu0 0
        %1762 = vmatpush1.bf16.xpose.msra.mxu0 0
        %1763 = vmatprep.subr.bf16.mxu0 0
        %1764 = vmatpush1.bf16.xpose.msra.mxu0 0
        %1765 = vmatprep.subr.bf16.mxu0 0
        %1766 = vmatpush1.bf16.xpose.msra.mxu0 0
        %1767 = vmatprep.subr.bf16.mxu0 0
        %1768 = vmatpush1.bf16.xpose.msra.mxu0 0
        %1769 = vmatprep.subr.bf16.mxu0 0
        %1770 = vmatpush1.bf16.xpose.msra.mxu0 0
        %1771 = vmatprep.subr.bf16.mxu0 0
        %1772 = vmatpush1.bf16.xpose.msra.mxu0 0
        %1773 = vmatprep.subr.bf16.mxu0 0
        %1774 = vmatpush1.bf16.xpose.msra.mxu0 0
        %1775 = vmatprep.subr.bf16.mxu0 0
        %1776 = vmatpush1.bf16.xpose.msra.mxu0 0
        %1777 = vmatprep.subr.bf16.mxu0 0
        %1778 = vmatpush1.bf16.xpose.msra.mxu0 0
        %1779 = vmatprep.subr.bf16.mxu0 0
        %1780 = vmatpush1.bf16.xpose.msra.mxu0 0
        %1781 = vmatprep.subr.bf16.mxu0 0
        %1782 = vmatpush1.bf16.xpose.msra.mxu0 0
        %1783 = vmatprep.mubr.bf16.mxu0 0
        %1784 = vmatmul.mubr.bf16.gmra.mrb[0].mxu0 %v1495
        %v1785 = vpop.f32.mrb[0].mxu0
        %v1786 = vadd.f32 0.0, %v1785
        %v1787 = vpop.f32.mrb[0].mxu0
        %v1788 = vpop.f32.mrb[0].mxu0
        %v1789 = vadd.f32 0.0, %v1788
        %v1790 = vpop.f32.mrb[0].mxu0
        %1791 = vdwg.mxu0
        %1792 = vmatprep.subr.bf16.mxu0 0
        %1793 = vmatpush1.bf16.xpose.msra.mxu0 %v1504
        %1794 = vmatprep.subr.bf16.mxu0 0
        %1795 = vmatpush1.bf16.xpose.msra.mxu0 0
        %1796 = vmatprep.subr.bf16.mxu0 0
        %1797 = vmatpush1.bf16.xpose.msra.mxu0 0
        %1798 = vmatprep.subr.bf16.mxu0 0
        %1799 = vmatpush1.bf16.xpose.msra.mxu0 0
        %1800 = vmatprep.subr.bf16.mxu0 0
        %1801 = vmatpush1.bf16.xpose.msra.mxu0 0
        %1802 = vmatprep.subr.bf16.mxu0 0
        %1803 = vmatpush1.bf16.xpose.msra.mxu0 0
        %1804 = vmatprep.subr.bf16.mxu0 0
        %1805 = vmatpush1.bf16.xpose.msra.mxu0 0
        %1806 = vmatprep.subr.bf16.mxu0 0
        %1807 = vmatpush1.bf16.xpose.msra.mxu0 0
        %1808 = vmatprep.subr.bf16.mxu0 0
        %1809 = vmatpush1.bf16.xpose.msra.mxu0 0
        %1810 = vmatprep.subr.bf16.mxu0 0
        %1811 = vmatpush1.bf16.xpose.msra.mxu0 0
        %1812 = vmatprep.subr.bf16.mxu0 0
        %1813 = vmatpush1.bf16.xpose.msra.mxu0 0
        %1814 = vmatprep.subr.bf16.mxu0 0
        %1815 = vmatpush1.bf16.xpose.msra.mxu0 0
        %1816 = vmatprep.subr.bf16.mxu0 0
        %1817 = vmatpush1.bf16.xpose.msra.mxu0 0
        %1818 = vmatprep.subr.bf16.mxu0 0
        %1819 = vmatpush1.bf16.xpose.msra.mxu0 0
        %1820 = vmatprep.subr.bf16.mxu0 0
        %1821 = vmatpush1.bf16.xpose.msra.mxu0 0
        %1822 = vmatprep.subr.bf16.mxu0 0
        %1823 = vmatpush1.bf16.xpose.msra.mxu0 0
        %1824 = vmatprep.mubr.bf16.mxu0 0
        %1825 = vmatmul.mubr.bf16.gmra.mrb[0].mxu0 %v1496
        %v1826 = vpop.f32.mrb[0].mxu0
        %v1827 = vadd.f32 0.0, %v1826
        %v1828 = vpop.f32.mrb[0].mxu0
        %v1829 = vpop.f32.mrb[0].mxu0
        %v1830 = vadd.f32 0.0, %v1829
        %v1831 = vpop.f32.mrb[0].mxu0
        %1832 = vdwg.mxu0
        %vm1833 = vcmask 130048
        %v1834 = vsel %vm1833, %v1540, -inf
        %1835 = vmax.xlane.f32.xlu0 %v1834
        %v1836 = vpop.xlane.xlu0 %1835
        %v1837 = vsel %vm1833, %v1543, -inf
        %1838 = vmax.xlane.f32.xlu0 %v1837
        %v1839 = vpop.xlane.xlu0 %1838
        %v1840 = vsel %vm1833, %v1581, -inf
        %1841 = vmax.xlane.f32.xlu0 %v1840
        %v1842 = vpop.xlane.xlu0 %1841
        %v1843 = vsel %vm1833, %v1584, -inf
        %1844 = vmax.xlane.f32.xlu0 %v1843
        %v1845 = vpop.xlane.xlu0 %1844
        %v1846 = vsel %vm1833, %v1622, -inf
        %1847 = vmax.xlane.f32.xlu0 %v1846
        %v1848 = vpop.xlane.xlu0 %1847
        %v1849 = vsel %vm1833, %v1625, -inf
        %1850 = vmax.xlane.f32.xlu0 %v1849
        %v1851 = vpop.xlane.xlu0 %1850
        %v1852 = vsel %vm1833, %v1663, -inf
        %1853 = vmax.xlane.f32.xlu0 %v1852
        %v1854 = vpop.xlane.xlu0 %1853
        %v1855 = vsel %vm1833, %v1666, -inf
        %1856 = vmax.xlane.f32.xlu0 %v1855
        %v1857 = vpop.xlane.xlu0 %1856
        %v1858 = vsel %vm1833, %v1704, -inf
        %1859 = vmax.xlane.f32.xlu0 %v1858
        %v1860 = vpop.xlane.xlu0 %1859
        %v1861 = vsel %vm1833, %v1707, -inf
        %1862 = vmax.xlane.f32.xlu0 %v1861
        %v1863 = vpop.xlane.xlu0 %1862
        %v1864 = vsel %vm1833, %v1745, -inf
        %1865 = vmax.xlane.f32.xlu0 %v1864
        %v1866 = vpop.xlane.xlu0 %1865
        %v1867 = vsel %vm1833, %v1748, -inf
        %1868 = vmax.xlane.f32.xlu0 %v1867
        %v1869 = vpop.xlane.xlu0 %1868
        %v1870 = vsel %vm1833, %v1786, -inf
        %1871 = vmax.xlane.f32.xlu0 %v1870
        %v1872 = vpop.xlane.xlu0 %1871
        %v1873 = vsel %vm1833, %v1789, -inf
        %1874 = vmax.xlane.f32.xlu0 %v1873
        %v1875 = vpop.xlane.xlu0 %1874
        %v1876 = vsel %vm1833, %v1827, -inf
        %1877 = vmax.xlane.f32.xlu0 %v1876
        %v1878 = vpop.xlane.xlu0 %1877
        %v1879 = vsel %vm1833, %v1830, -inf
        %1880 = vmax.xlane.f32.xlu0 %v1879
        %v1881 = vpop.xlane.xlu0 %1880
        %v1882 = vsub.f32 %v1540, %v1836
        %v1883 = vsub.f32 %v1543, %v1839
        %v1884 = vsub.f32 %v1581, %v1842
        %v1885 = vsub.f32 %v1584, %v1845
        %v1886 = vsub.f32 %v1622, %v1848
        %v1887 = vsub.f32 %v1625, %v1851
        %v1888 = vsub.f32 %v1663, %v1854
        %v1889 = vsub.f32 %v1666, %v1857
        %v1890 = vsub.f32 %v1704, %v1860
        %v1891 = vsub.f32 %v1707, %v1863
        %v1892 = vsub.f32 %v1745, %v1866
        %v1893 = vsub.f32 %v1748, %v1869
        %v1894 = vsub.f32 %v1786, %v1872
        %v1895 = vsub.f32 %v1789, %v1875
        %v1896 = vsub.f32 %v1827, %v1878
        %v1897 = vsub.f32 %v1830, %v1881
        %v1898 = vmul.f32 %v1882, 1.442695
        %v1899 = vpow.pop %v1898
        %v1900 = vmul.f32 %v1883, 1.442695
        %v1901 = vpow.pop %v1900
        %v1902 = vmul.f32 %v1884, 1.442695
        %v1903 = vpow.pop %v1902
        %v1904 = vmul.f32 %v1885, 1.442695
        %v1905 = vpow.pop %v1904
        %v1906 = vmul.f32 %v1886, 1.442695
        %v1907 = vpow.pop %v1906
        %v1908 = vmul.f32 %v1887, 1.442695
        %v1909 = vpow.pop %v1908
        %v1910 = vmul.f32 %v1888, 1.442695
        %v1911 = vpow.pop %v1910
        %v1912 = vmul.f32 %v1889, 1.442695
        %v1913 = vpow.pop %v1912
        %v1914 = vmul.f32 %v1890, 1.442695
        %v1915 = vpow.pop %v1914
        %v1916 = vmul.f32 %v1891, 1.442695
        %v1917 = vpow.pop %v1916
        %v1918 = vmul.f32 %v1892, 1.442695
        %v1919 = vpow.pop %v1918
        %v1920 = vmul.f32 %v1893, 1.442695
        %v1921 = vpow.pop %v1920
        %v1922 = vmul.f32 %v1894, 1.442695
        %v1923 = vpow.pop %v1922
        %v1924 = vmul.f32 %v1895, 1.442695
        %v1925 = vpow.pop %v1924
        %v1926 = vmul.f32 %v1896, 1.442695
        %v1927 = vpow.pop %v1926
        %v1928 = vmul.f32 %v1897, 1.442695
        %v1929 = vpow.pop %v1928
        %v1930 = vsel %vm1833, %v1899, 0.0
        %1931 = vadd.xlane.f32.xlu0 %v1930
        %v1932 = vpop.xlane.xlu0 %1931
        %v1933 = vsel %vm1833, %v1901, 0.0
        %1934 = vadd.xlane.f32.xlu0 %v1933
        %v1935 = vpop.xlane.xlu0 %1934
        %v1936 = vsel %vm1833, %v1903, 0.0
        %1937 = vadd.xlane.f32.xlu0 %v1936
        %v1938 = vpop.xlane.xlu0 %1937
        %v1939 = vsel %vm1833, %v1905, 0.0
        %1940 = vadd.xlane.f32.xlu0 %v1939
        %v1941 = vpop.xlane.xlu0 %1940
        %v1942 = vsel %vm1833, %v1907, 0.0
        %1943 = vadd.xlane.f32.xlu0 %v1942
        %v1944 = vpop.xlane.xlu0 %1943
        %v1945 = vsel %vm1833, %v1909, 0.0
        %1946 = vadd.xlane.f32.xlu0 %v1945
        %v1947 = vpop.xlane.xlu0 %1946
        %v1948 = vsel %vm1833, %v1911, 0.0
        %1949 = vadd.xlane.f32.xlu0 %v1948
        %v1950 = vpop.xlane.xlu0 %1949
        %v1951 = vsel %vm1833, %v1913, 0.0
        %1952 = vadd.xlane.f32.xlu0 %v1951
        %v1953 = vpop.xlane.xlu0 %1952
        %v1954 = vsel %vm1833, %v1915, 0.0
        %1955 = vadd.xlane.f32.xlu0 %v1954
        %v1956 = vpop.xlane.xlu0 %1955
        %v1957 = vsel %vm1833, %v1917, 0.0
        %1958 = vadd.xlane.f32.xlu0 %v1957
        %v1959 = vpop.xlane.xlu0 %1958
        %v1960 = vsel %vm1833, %v1919, 0.0
        %1961 = vadd.xlane.f32.xlu0 %v1960
        %v1962 = vpop.xlane.xlu0 %1961
        %v1963 = vsel %vm1833, %v1921, 0.0
        %1964 = vadd.xlane.f32.xlu0 %v1963
        %v1965 = vpop.xlane.xlu0 %1964
        %v1966 = vsel %vm1833, %v1923, 0.0
        %1967 = vadd.xlane.f32.xlu0 %v1966
        %v1968 = vpop.xlane.xlu0 %1967
        %v1969 = vsel %vm1833, %v1925, 0.0
        %1970 = vadd.xlane.f32.xlu0 %v1969
        %v1971 = vpop.xlane.xlu0 %1970
        %v1972 = vsel %vm1833, %v1927, 0.0
        %1973 = vadd.xlane.f32.xlu0 %v1972
        %v1974 = vpop.xlane.xlu0 %1973
        %v1975 = vsel %vm1833, %v1929, 0.0
        %1976 = vadd.xlane.f32.xlu0 %v1975
        %v1977 = vpop.xlane.xlu0 %1976
        %v1978 = vrcp.pop %v1932
        %v1979 = vrcp.pop %v1935
        %v1980 = vrcp.pop %v1938
        %v1981 = vrcp.pop %v1941
        %v1982 = vrcp.pop %v1944
        %v1983 = vrcp.pop %v1947
        %v1984 = vrcp.pop %v1950
        %v1985 = vrcp.pop %v1953
        %v1986 = vrcp.pop %v1956
        %v1987 = vrcp.pop %v1959
        %v1988 = vrcp.pop %v1962
        %v1989 = vrcp.pop %v1965
        %v1990 = vrcp.pop %v1968
        %v1991 = vrcp.pop %v1971
        %v1992 = vrcp.pop %v1974
        %v1993 = vrcp.pop %v1977
        %v1994 = vmul.f32 %v1899, %v1978
        %v1995 = vmul.f32 %v1901, %v1979
        %v1996 = vmul.f32 %v1903, %v1980
        %v1997 = vmul.f32 %v1905, %v1981
        %v1998 = vmul.f32 %v1907, %v1982
        %v1999 = vmul.f32 %v1909, %v1983
        %v2000 = vmul.f32 %v1911, %v1984
        %v2001 = vmul.f32 %v1913, %v1985
        %v2002 = vmul.f32 %v1915, %v1986
        %v2003 = vmul.f32 %v1917, %v1987
        %v2004 = vmul.f32 %v1919, %v1988
        %v2005 = vmul.f32 %v1921, %v1989
        %v2006 = vmul.f32 %v1923, %v1990
        %v2007 = vmul.f32 %v1925, %v1991
        %v2008 = vmul.f32 %v1927, %v1992
        %v2009 = vmul.f32 %v1929, %v1993
        %v2010 = vpack.c.bf16 %v1995, %v1994
        %v2011 = vpack.c.bf16 %v1997, %v1996
        %v2012 = vpack.c.bf16 %v1999, %v1998
        %v2013 = vpack.c.bf16 %v2001, %v2000
        %v2014 = vpack.c.bf16 %v2003, %v2002
        %v2015 = vpack.c.bf16 %v2005, %v2004
        %v2016 = vpack.c.bf16 %v2007, %v2006
        %v2017 = vpack.c.bf16 %v2009, %v2008
        %v2018 = vpack.c.bf16 %v1474, %v1473
        %v2019 = vpack.c.bf16 %v1476, %v1475
        %v2020 = vpack.c.bf16 %v1478, %v1477
        %v2021 = vpack.c.bf16 %v1480, %v1479
        %v2022 = vpack.c.bf16 %v1482, %v1481
        %v2023 = vpack.c.bf16 %v1484, %v1483
        %v2024 = vpack.c.bf16 %v1486, %v1485
        %v2025 = vpack.c.bf16 %v1488, %v1487
        %v2027 = vsel %vm1833, %v2010, 0
        %2029 = vmatprep.subr.bf16.mxu0 0
        %2030 = vmatpush1.bf16.msra.mxu0 %v2018
        %2031 = vmatprep.subr.bf16.mxu0 0
        %2032 = vmatpush1.bf16.msra.mxu0 0
        %2033 = vmatprep.subr.bf16.mxu0 0
        %2034 = vmatpush1.bf16.msra.mxu0 0
        %2035 = vmatprep.subr.bf16.mxu0 0
        %2036 = vmatpush1.bf16.msra.mxu0 0
        %2037 = vmatprep.subr.bf16.mxu0 0
        %2038 = vmatpush1.bf16.msra.mxu0 0
        %2039 = vmatprep.subr.bf16.mxu0 0
        %2040 = vmatpush1.bf16.msra.mxu0 0
        %2041 = vmatprep.subr.bf16.mxu0 0
        %2042 = vmatpush1.bf16.msra.mxu0 0
        %2043 = vmatprep.subr.bf16.mxu0 0
        %2044 = vmatpush1.bf16.msra.mxu0 0
        %2045 = vmatprep.subr.bf16.mxu0 0
        %2046 = vmatpush1.bf16.msra.mxu0 0
        %2047 = vmatprep.subr.bf16.mxu0 0
        %2048 = vmatpush1.bf16.msra.mxu0 0
        %2049 = vmatprep.subr.bf16.mxu0 0
        %2050 = vmatpush1.bf16.msra.mxu0 0
        %2051 = vmatprep.subr.bf16.mxu0 0
        %2052 = vmatpush1.bf16.msra.mxu0 0
        %2053 = vmatprep.subr.bf16.mxu0 0
        %2054 = vmatpush1.bf16.msra.mxu0 0
        %2055 = vmatprep.subr.bf16.mxu0 0
        %2056 = vmatpush1.bf16.msra.mxu0 0
        %2057 = vmatprep.subr.bf16.mxu0 0
        %2058 = vmatpush1.bf16.msra.mxu0 0
        %2059 = vmatprep.subr.bf16.mxu0 0
        %2060 = vmatpush1.bf16.msra.mxu0 0
        %2061 = vmatprep.mubr.bf16.mxu0 0
        %2062 = vmatmul.mubr.bf16.gmra.mrb[0].mxu0 %v2027
        %v2063 = vpop.f32.mrb[0].mxu0
        %v2064 = vadd.f32 0.0, %v2063
        %v2065 = vpop.f32.mrb[0].mxu0
        %v2066 = vpop.f32.mrb[0].mxu0
        %v2067 = vadd.f32 0.0, %v2066
        %v2068 = vpop.f32.mrb[0].mxu0
        %2069 = vdwg.mxu0
        %v2071 = vsel %vm1833, %v2011, 0
        %2073 = vmatprep.subr.bf16.mxu0 0
        %2074 = vmatpush1.bf16.msra.mxu0 %v2019
        %2075 = vmatprep.subr.bf16.mxu0 0
        %2076 = vmatpush1.bf16.msra.mxu0 0
        %2077 = vmatprep.subr.bf16.mxu0 0
        %2078 = vmatpush1.bf16.msra.mxu0 0
        %2079 = vmatprep.subr.bf16.mxu0 0
        %2080 = vmatpush1.bf16.msra.mxu0 0
        %2081 = vmatprep.subr.bf16.mxu0 0
        %2082 = vmatpush1.bf16.msra.mxu0 0
        %2083 = vmatprep.subr.bf16.mxu0 0
        %2084 = vmatpush1.bf16.msra.mxu0 0
        %2085 = vmatprep.subr.bf16.mxu0 0
        %2086 = vmatpush1.bf16.msra.mxu0 0
        %2087 = vmatprep.subr.bf16.mxu0 0
        %2088 = vmatpush1.bf16.msra.mxu0 0
        %2089 = vmatprep.subr.bf16.mxu0 0
        %2090 = vmatpush1.bf16.msra.mxu0 0
        %2091 = vmatprep.subr.bf16.mxu0 0
        %2092 = vmatpush1.bf16.msra.mxu0 0
        %2093 = vmatprep.subr.bf16.mxu0 0
        %2094 = vmatpush1.bf16.msra.mxu0 0
        %2095 = vmatprep.subr.bf16.mxu0 0
        %2096 = vmatpush1.bf16.msra.mxu0 0
        %2097 = vmatprep.subr.bf16.mxu0 0
        %2098 = vmatpush1.bf16.msra.mxu0 0
        %2099 = vmatprep.subr.bf16.mxu0 0
        %2100 = vmatpush1.bf16.msra.mxu0 0
        %2101 = vmatprep.subr.bf16.mxu0 0
        %2102 = vmatpush1.bf16.msra.mxu0 0
        %2103 = vmatprep.subr.bf16.mxu0 0
        %2104 = vmatpush1.bf16.msra.mxu0 0
        %2105 = vmatprep.mubr.bf16.mxu0 0
        %2106 = vmatmul.mubr.bf16.gmra.mrb[0].mxu0 %v2071
        %v2107 = vpop.f32.mrb[0].mxu0
        %v2108 = vadd.f32 0.0, %v2107
        %v2109 = vpop.f32.mrb[0].mxu0
        %v2110 = vpop.f32.mrb[0].mxu0
        %v2111 = vadd.f32 0.0, %v2110
        %v2112 = vpop.f32.mrb[0].mxu0
        %2113 = vdwg.mxu0
        %v2115 = vsel %vm1833, %v2012, 0
        %2117 = vmatprep.subr.bf16.mxu0 0
        %2118 = vmatpush1.bf16.msra.mxu0 %v2020
        %2119 = vmatprep.subr.bf16.mxu0 0
        %2120 = vmatpush1.bf16.msra.mxu0 0
        %2121 = vmatprep.subr.bf16.mxu0 0
        %2122 = vmatpush1.bf16.msra.mxu0 0
        %2123 = vmatprep.subr.bf16.mxu0 0
        %2124 = vmatpush1.bf16.msra.mxu0 0
        %2125 = vmatprep.subr.bf16.mxu0 0
        %2126 = vmatpush1.bf16.msra.mxu0 0
        %2127 = vmatprep.subr.bf16.mxu0 0
        %2128 = vmatpush1.bf16.msra.mxu0 0
        %2129 = vmatprep.subr.bf16.mxu0 0
        %2130 = vmatpush1.bf16.msra.mxu0 0
        %2131 = vmatprep.subr.bf16.mxu0 0
        %2132 = vmatpush1.bf16.msra.mxu0 0
        %2133 = vmatprep.subr.bf16.mxu0 0
        %2134 = vmatpush1.bf16.msra.mxu0 0
        %2135 = vmatprep.subr.bf16.mxu0 0
        %2136 = vmatpush1.bf16.msra.mxu0 0
        %2137 = vmatprep.subr.bf16.mxu0 0
        %2138 = vmatpush1.bf16.msra.mxu0 0
        %2139 = vmatprep.subr.bf16.mxu0 0
        %2140 = vmatpush1.bf16.msra.mxu0 0
        %2141 = vmatprep.subr.bf16.mxu0 0
        %2142 = vmatpush1.bf16.msra.mxu0 0
        %2143 = vmatprep.subr.bf16.mxu0 0
        %2144 = vmatpush1.bf16.msra.mxu0 0
        %2145 = vmatprep.subr.bf16.mxu0 0
        %2146 = vmatpush1.bf16.msra.mxu0 0
        %2147 = vmatprep.subr.bf16.mxu0 0
        %2148 = vmatpush1.bf16.msra.mxu0 0
        %2149 = vmatprep.mubr.bf16.mxu0 0
        %2150 = vmatmul.mubr.bf16.gmra.mrb[0].mxu0 %v2115
        %v2151 = vpop.f32.mrb[0].mxu0
        %v2152 = vadd.f32 0.0, %v2151
        %v2153 = vpop.f32.mrb[0].mxu0
        %v2154 = vpop.f32.mrb[0].mxu0
        %v2155 = vadd.f32 0.0, %v2154
        %v2156 = vpop.f32.mrb[0].mxu0
        %2157 = vdwg.mxu0
        %v2159 = vsel %vm1833, %v2013, 0
        %2161 = vmatprep.subr.bf16.mxu0 0
        %2162 = vmatpush1.bf16.msra.mxu0 %v2021
        %2163 = vmatprep.subr.bf16.mxu0 0
        %2164 = vmatpush1.bf16.msra.mxu0 0
        %2165 = vmatprep.subr.bf16.mxu0 0
        %2166 = vmatpush1.bf16.msra.mxu0 0
        %2167 = vmatprep.subr.bf16.mxu0 0
        %2168 = vmatpush1.bf16.msra.mxu0 0
        %2169 = vmatprep.subr.bf16.mxu0 0
        %2170 = vmatpush1.bf16.msra.mxu0 0
        %2171 = vmatprep.subr.bf16.mxu0 0
        %2172 = vmatpush1.bf16.msra.mxu0 0
        %2173 = vmatprep.subr.bf16.mxu0 0
        %2174 = vmatpush1.bf16.msra.mxu0 0
        %2175 = vmatprep.subr.bf16.mxu0 0
        %2176 = vmatpush1.bf16.msra.mxu0 0
        %2177 = vmatprep.subr.bf16.mxu0 0
        %2178 = vmatpush1.bf16.msra.mxu0 0
        %2179 = vmatprep.subr.bf16.mxu0 0
        %2180 = vmatpush1.bf16.msra.mxu0 0
        %2181 = vmatprep.subr.bf16.mxu0 0
        %2182 = vmatpush1.bf16.msra.mxu0 0
        %2183 = vmatprep.subr.bf16.mxu0 0
        %2184 = vmatpush1.bf16.msra.mxu0 0
        %2185 = vmatprep.subr.bf16.mxu0 0
        %2186 = vmatpush1.bf16.msra.mxu0 0
        %2187 = vmatprep.subr.bf16.mxu0 0
        %2188 = vmatpush1.bf16.msra.mxu0 0
        %2189 = vmatprep.subr.bf16.mxu0 0
        %2190 = vmatpush1.bf16.msra.mxu0 0
        %2191 = vmatprep.subr.bf16.mxu0 0
        %2192 = vmatpush1.bf16.msra.mxu0 0
        %2193 = vmatprep.mubr.bf16.mxu0 0
        %2194 = vmatmul.mubr.bf16.gmra.mrb[0].mxu0 %v2159
        %v2195 = vpop.f32.mrb[0].mxu0
        %v2196 = vadd.f32 0.0, %v2195
        %v2197 = vpop.f32.mrb[0].mxu0
        %v2198 = vpop.f32.mrb[0].mxu0
        %v2199 = vadd.f32 0.0, %v2198
        %v2200 = vpop.f32.mrb[0].mxu0
        %2201 = vdwg.mxu0
        %v2203 = vsel %vm1833, %v2014, 0
        %2205 = vmatprep.subr.bf16.mxu0 0
        %2206 = vmatpush1.bf16.msra.mxu0 %v2022
        %2207 = vmatprep.subr.bf16.mxu0 0
        %2208 = vmatpush1.bf16.msra.mxu0 0
        %2209 = vmatprep.subr.bf16.mxu0 0
        %2210 = vmatpush1.bf16.msra.mxu0 0
        %2211 = vmatprep.subr.bf16.mxu0 0
        %2212 = vmatpush1.bf16.msra.mxu0 0
        %2213 = vmatprep.subr.bf16.mxu0 0
        %2214 = vmatpush1.bf16.msra.mxu0 0
        %2215 = vmatprep.subr.bf16.mxu0 0
        %2216 = vmatpush1.bf16.msra.mxu0 0
        %2217 = vmatprep.subr.bf16.mxu0 0
        %2218 = vmatpush1.bf16.msra.mxu0 0
        %2219 = vmatprep.subr.bf16.mxu0 0
        %2220 = vmatpush1.bf16.msra.mxu0 0
        %2221 = vmatprep.subr.bf16.mxu0 0
        %2222 = vmatpush1.bf16.msra.mxu0 0
        %2223 = vmatprep.subr.bf16.mxu0 0
        %2224 = vmatpush1.bf16.msra.mxu0 0
        %2225 = vmatprep.subr.bf16.mxu0 0
        %2226 = vmatpush1.bf16.msra.mxu0 0
        %2227 = vmatprep.subr.bf16.mxu0 0
        %2228 = vmatpush1.bf16.msra.mxu0 0
        %2229 = vmatprep.subr.bf16.mxu0 0
        %2230 = vmatpush1.bf16.msra.mxu0 0
        %2231 = vmatprep.subr.bf16.mxu0 0
        %2232 = vmatpush1.bf16.msra.mxu0 0
        %2233 = vmatprep.subr.bf16.mxu0 0
        %2234 = vmatpush1.bf16.msra.mxu0 0
        %2235 = vmatprep.subr.bf16.mxu0 0
        %2236 = vmatpush1.bf16.msra.mxu0 0
        %2237 = vmatprep.mubr.bf16.mxu0 0
        %2238 = vmatmul.mubr.bf16.gmra.mrb[0].mxu0 %v2203
        %v2239 = vpop.f32.mrb[0].mxu0
        %v2240 = vadd.f32 0.0, %v2239
        %v2241 = vpop.f32.mrb[0].mxu0
        %v2242 = vpop.f32.mrb[0].mxu0
        %v2243 = vadd.f32 0.0, %v2242
        %v2244 = vpop.f32.mrb[0].mxu0
        %2245 = vdwg.mxu0
        %v2247 = vsel %vm1833, %v2015, 0
        %2249 = vmatprep.subr.bf16.mxu0 0
        %2250 = vmatpush1.bf16.msra.mxu0 %v2023
        %2251 = vmatprep.subr.bf16.mxu0 0
        %2252 = vmatpush1.bf16.msra.mxu0 0
        %2253 = vmatprep.subr.bf16.mxu0 0
        %2254 = vmatpush1.bf16.msra.mxu0 0
        %2255 = vmatprep.subr.bf16.mxu0 0
        %2256 = vmatpush1.bf16.msra.mxu0 0
        %2257 = vmatprep.subr.bf16.mxu0 0
        %2258 = vmatpush1.bf16.msra.mxu0 0
        %2259 = vmatprep.subr.bf16.mxu0 0
        %2260 = vmatpush1.bf16.msra.mxu0 0
        %2261 = vmatprep.subr.bf16.mxu0 0
        %2262 = vmatpush1.bf16.msra.mxu0 0
        %2263 = vmatprep.subr.bf16.mxu0 0
        %2264 = vmatpush1.bf16.msra.mxu0 0
        %2265 = vmatprep.subr.bf16.mxu0 0
        %2266 = vmatpush1.bf16.msra.mxu0 0
        %2267 = vmatprep.subr.bf16.mxu0 0
        %2268 = vmatpush1.bf16.msra.mxu0 0
        %2269 = vmatprep.subr.bf16.mxu0 0
        %2270 = vmatpush1.bf16.msra.mxu0 0
        %2271 = vmatprep.subr.bf16.mxu0 0
        %2272 = vmatpush1.bf16.msra.mxu0 0
        %2273 = vmatprep.subr.bf16.mxu0 0
        %2274 = vmatpush1.bf16.msra.mxu0 0
        %2275 = vmatprep.subr.bf16.mxu0 0
        %2276 = vmatpush1.bf16.msra.mxu0 0
        %2277 = vmatprep.subr.bf16.mxu0 0
        %2278 = vmatpush1.bf16.msra.mxu0 0
        %2279 = vmatprep.subr.bf16.mxu0 0
        %2280 = vmatpush1.bf16.msra.mxu0 0
        %2281 = vmatprep.mubr.bf16.mxu0 0
        %2282 = vmatmul.mubr.bf16.gmra.mrb[0].mxu0 %v2247
        %v2283 = vpop.f32.mrb[0].mxu0
        %v2284 = vadd.f32 0.0, %v2283
        %v2285 = vpop.f32.mrb[0].mxu0
        %v2286 = vpop.f32.mrb[0].mxu0
        %v2287 = vadd.f32 0.0, %v2286
        %v2288 = vpop.f32.mrb[0].mxu0
        %2289 = vdwg.mxu0
        %v2291 = vsel %vm1833, %v2016, 0
        %2293 = vmatprep.subr.bf16.mxu0 0
        %2294 = vmatpush1.bf16.msra.mxu0 %v2024
        %2295 = vmatprep.subr.bf16.mxu0 0
        %2296 = vmatpush1.bf16.msra.mxu0 0
        %2297 = vmatprep.subr.bf16.mxu0 0
        %2298 = vmatpush1.bf16.msra.mxu0 0
        %2299 = vmatprep.subr.bf16.mxu0 0
        %2300 = vmatpush1.bf16.msra.mxu0 0
        %2301 = vmatprep.subr.bf16.mxu0 0
        %2302 = vmatpush1.bf16.msra.mxu0 0
        %2303 = vmatprep.subr.bf16.mxu0 0
        %2304 = vmatpush1.bf16.msra.mxu0 0
        %2305 = vmatprep.subr.bf16.mxu0 0
        %2306 = vmatpush1.bf16.msra.mxu0 0
        %2307 = vmatprep.subr.bf16.mxu0 0
        %2308 = vmatpush1.bf16.msra.mxu0 0
        %2309 = vmatprep.subr.bf16.mxu0 0
        %2310 = vmatpush1.bf16.msra.mxu0 0
        %2311 = vmatprep.subr.bf16.mxu0 0
        %2312 = vmatpush1.bf16.msra.mxu0 0
        %2313 = vmatprep.subr.bf16.mxu0 0
        %2314 = vmatpush1.bf16.msra.mxu0 0
        %2315 = vmatprep.subr.bf16.mxu0 0
        %2316 = vmatpush1.bf16.msra.mxu0 0
        %2317 = vmatprep.subr.bf16.mxu0 0
        %2318 = vmatpush1.bf16.msra.mxu0 0
        %2319 = vmatprep.subr.bf16.mxu0 0
        %2320 = vmatpush1.bf16.msra.mxu0 0
        %2321 = vmatprep.subr.bf16.mxu0 0
        %2322 = vmatpush1.bf16.msra.mxu0 0
        %2323 = vmatprep.subr.bf16.mxu0 0
        %2324 = vmatpush1.bf16.msra.mxu0 0
        %2325 = vmatprep.mubr.bf16.mxu0 0
        %2326 = vmatmul.mubr.bf16.gmra.mrb[0].mxu0 %v2291
        %v2327 = vpop.f32.mrb[0].mxu0
        %v2328 = vadd.f32 0.0, %v2327
        %v2329 = vpop.f32.mrb[0].mxu0
        %v2330 = vpop.f32.mrb[0].mxu0
        %v2331 = vadd.f32 0.0, %v2330
        %v2332 = vpop.f32.mrb[0].mxu0
        %2333 = vdwg.mxu0
        %v2335 = vsel %vm1833, %v2017, 0
        %2337 = vmatprep.subr.bf16.mxu0 0
        %2338 = vmatpush1.bf16.msra.mxu0 %v2025
        %2339 = vmatprep.subr.bf16.mxu0 0
        %2340 = vmatpush1.bf16.msra.mxu0 0
        %2341 = vmatprep.subr.bf16.mxu0 0
        %2342 = vmatpush1.bf16.msra.mxu0 0
        %2343 = vmatprep.subr.bf16.mxu0 0
        %2344 = vmatpush1.bf16.msra.mxu0 0
        %2345 = vmatprep.subr.bf16.mxu0 0
        %2346 = vmatpush1.bf16.msra.mxu0 0
        %2347 = vmatprep.subr.bf16.mxu0 0
        %2348 = vmatpush1.bf16.msra.mxu0 0
        %2349 = vmatprep.subr.bf16.mxu0 0
        %2350 = vmatpush1.bf16.msra.mxu0 0
        %2351 = vmatprep.subr.bf16.mxu0 0
        %2352 = vmatpush1.bf16.msra.mxu0 0
        %2353 = vmatprep.subr.bf16.mxu0 0
        %2354 = vmatpush1.bf16.msra.mxu0 0
        %2355 = vmatprep.subr.bf16.mxu0 0
        %2356 = vmatpush1.bf16.msra.mxu0 0
        %2357 = vmatprep.subr.bf16.mxu0 0
        %2358 = vmatpush1.bf16.msra.mxu0 0
        %2359 = vmatprep.subr.bf16.mxu0 0
        %2360 = vmatpush1.bf16.msra.mxu0 0
        %2361 = vmatprep.subr.bf16.mxu0 0
        %2362 = vmatpush1.bf16.msra.mxu0 0
        %2363 = vmatprep.subr.bf16.mxu0 0
        %2364 = vmatpush1.bf16.msra.mxu0 0
        %2365 = vmatprep.subr.bf16.mxu0 0
        %2366 = vmatpush1.bf16.msra.mxu0 0
        %2367 = vmatprep.subr.bf16.mxu0 0
        %2368 = vmatpush1.bf16.msra.mxu0 0
        %2369 = vmatprep.mubr.bf16.mxu0 0
        %2370 = vmatmul.mubr.bf16.gmra.mrb[0].mxu0 %v2335
        %v2371 = vpop.f32.mrb[0].mxu0
        %v2372 = vadd.f32 0.0, %v2371
        %v2373 = vpop.f32.mrb[0].mxu0
        %v2374 = vpop.f32.mrb[0].mxu0
        %v2375 = vadd.f32 0.0, %v2374
        %v2376 = vpop.f32.mrb[0].mxu0
        %2377 = vdwg.mxu0
        %v2378 = vpack.c.bf16 %v2067, %v2064
        %v2379 = vpack.c.bf16 %v2111, %v2108
        %v2380 = vpack.c.bf16 %v2155, %v2152
        %v2381 = vpack.c.bf16 %v2199, %v2196
        %v2382 = vpack.c.bf16 %v2243, %v2240
        %v2383 = vpack.c.bf16 %v2287, %v2284
        %v2384 = vpack.c.bf16 %v2331, %v2328
        %v2385 = vpack.c.bf16 %v2375, %v2372
        %v2386 = vld [vmem:[#allocation7] sm:$0xf]
        %v2387 = vld [vmem:[#allocation7 + $0x4] sm:$0xf]
        %v2388 = vld [vmem:[#allocation7 + $0x8] sm:$0xf]
        %v2389 = vld [vmem:[#allocation7 + $0xc] sm:$0xf]
        %v2390 = vld [vmem:[#allocation7 + $0x10] sm:$0xf]
        %v2391 = vld [vmem:[#allocation7 + $0x14] sm:$0xf]
        %v2392 = vld [vmem:[#allocation7 + $0x18] sm:$0xf]
        %v2393 = vld [vmem:[#allocation7 + $0x1c] sm:$0xf]
        %v2394 = vld [vmem:[#allocation7 + $0x20] sm:$0xf]
        %v2395 = vld [vmem:[#allocation7 + $0x24] sm:$0xf]
        %v2396 = vld [vmem:[#allocation7 + $0x28] sm:$0xf]
        %v2397 = vld [vmem:[#allocation7 + $0x2c] sm:$0xf]
        %v2398 = vld [vmem:[#allocation7 + $0x30] sm:$0xf]
        %v2399 = vld [vmem:[#allocation7 + $0x34] sm:$0xf]
        %v2400 = vld [vmem:[#allocation7 + $0x38] sm:$0xf]
        %v2401 = vld [vmem:[#allocation7 + $0x3c] sm:$0xf]
        %v2402 = vlaneseq
        %v2403 = vshrl.u32 %v2402, 7
        %v2404 = vsub.s32 3, %v2403
        %v2405 = vrot.slane %v1050, %v2404
        %v2422 = vunpack.c.l.b16 %v2386
        %v2423 = vunpack.c.l.b16 %v2387
        %v2424 = vunpack.c.l.b16 %v2388
        %v2425 = vunpack.c.l.b16 %v2389
        %v2426 = vunpack.c.l.b16 %v2390
        %v2427 = vunpack.c.l.b16 %v2391
        %v2428 = vunpack.c.l.b16 %v2392
        %v2429 = vunpack.c.l.b16 %v2393
        %v2430 = vunpack.c.l.b16 %v2394
        %v2431 = vunpack.c.l.b16 %v2395
        %v2432 = vunpack.c.l.b16 %v2396
        %v2433 = vunpack.c.l.b16 %v2397
        %v2434 = vunpack.c.l.b16 %v2398
        %v2435 = vunpack.c.l.b16 %v2399
        %v2436 = vunpack.c.l.b16 %v2400
        %v2437 = vunpack.c.l.b16 %v2401
        %v2438 = vpack.c.b16 %v2423, %v2422
        %v2439 = vpack.c.b16 %v2425, %v2424
        %v2440 = vpack.c.b16 %v2427, %v2426
        %v2441 = vpack.c.b16 %v2429, %v2428
        %v2442 = vpack.c.b16 %v2431, %v2430
        %v2443 = vpack.c.b16 %v2433, %v2432
        %v2444 = vpack.c.b16 %v2435, %v2434
        %v2445 = vpack.c.b16 %v2437, %v2436
        %2454 = vmatprep.subr.bf16.mxu0 0
        %2455 = vmatpush1.bf16.msra.mxu0 %v2438
        %2456 = vmatprep.subr.bf16.mxu0 0
        %2457 = vmatpush1.bf16.msra.mxu0 %v2439
        %2458 = vmatprep.subr.bf16.mxu0 0
        %2459 = vmatpush1.bf16.msra.mxu0 %v2440
        %2460 = vmatprep.subr.bf16.mxu0 0
        %2461 = vmatpush1.bf16.msra.mxu0 %v2441
        %2462 = vmatprep.subr.bf16.mxu0 0
        %2463 = vmatpush1.bf16.msra.mxu0 %v2442
        %2464 = vmatprep.subr.bf16.mxu0 0
        %2465 = vmatpush1.bf16.msra.mxu0 %v2443
        %2466 = vmatprep.subr.bf16.mxu0 0
        %2467 = vmatpush1.bf16.msra.mxu0 %v2444
        %2468 = vmatprep.subr.bf16.mxu0 0
        %2469 = vmatpush1.bf16.msra.mxu0 %v2445
        %2470 = vmatprep.subr.bf16.mxu0 0
        %2471 = vmatpush1.bf16.msra.mxu0 0
        %2472 = vmatprep.subr.bf16.mxu0 0
        %2473 = vmatpush1.bf16.msra.mxu0 0
        %2474 = vmatprep.subr.bf16.mxu0 0
        %2475 = vmatpush1.bf16.msra.mxu0 0
        %2476 = vmatprep.subr.bf16.mxu0 0
        %2477 = vmatpush1.bf16.msra.mxu0 0
        %2478 = vmatprep.subr.bf16.mxu0 0
        %2479 = vmatpush1.bf16.msra.mxu0 0
        %2480 = vmatprep.subr.bf16.mxu0 0
        %2481 = vmatpush1.bf16.msra.mxu0 0
        %2482 = vmatprep.subr.bf16.mxu0 0
        %2483 = vmatpush1.bf16.msra.mxu0 0
        %2484 = vmatprep.subr.bf16.mxu0 0
        %2485 = vmatpush1.bf16.msra.mxu0 0
        %2486 = vmatprep.mubr.bf16.mxu0 0
        %2487 = vmatmul.mubr.bf16.gmra.mrb[0].mxu0 %v2378
        %v2488 = vpop.f32.mrb[0].mxu0
        %v2489 = vadd.f32 %v2405, %v2488
        %v2490 = vpop.f32.mrb[0].mxu0
        %v2491 = vpop.f32.mrb[0].mxu0
        %v2492 = vadd.f32 %v2405, %v2491
        %v2493 = vpop.f32.mrb[0].mxu0
        %2494 = vmatprep.mubr.bf16.mxu0 0
        %2495 = vmatmul.mubr.bf16.gmra.mrb[0].mxu0 %v2379
        %v2496 = vpop.f32.mrb[0].mxu0
        %v2497 = vadd.f32 %v2405, %v2496
        %v2498 = vpop.f32.mrb[0].mxu0
        %v2499 = vpop.f32.mrb[0].mxu0
        %v2500 = vadd.f32 %v2405, %v2499
        %v2501 = vpop.f32.mrb[0].mxu0
        %2502 = vmatprep.mubr.bf16.mxu0 0
        %2503 = vmatmul.mubr.bf16.gmra.mrb[0].mxu0 %v2380
        %v2504 = vpop.f32.mrb[0].mxu0
        %v2505 = vadd.f32 %v2405, %v2504
        %v2506 = vpop.f32.mrb[0].mxu0
        %v2507 = vpop.f32.mrb[0].mxu0
        %v2508 = vadd.f32 %v2405, %v2507
        %v2509 = vpop.f32.mrb[0].mxu0
        %2510 = vmatprep.mubr.bf16.mxu0 0
        %2511 = vmatmul.mubr.bf16.gmra.mrb[0].mxu0 %v2381
        %v2512 = vpop.f32.mrb[0].mxu0
        %v2513 = vadd.f32 %v2405, %v2512
        %v2514 = vpop.f32.mrb[0].mxu0
        %v2515 = vpop.f32.mrb[0].mxu0
        %v2516 = vadd.f32 %v2405, %v2515
        %v2517 = vpop.f32.mrb[0].mxu0
        %2518 = vmatprep.mubr.bf16.mxu0 0
        %2519 = vmatmul.mubr.bf16.gmra.mrb[0].mxu0 %v2382
        %v2520 = vpop.f32.mrb[0].mxu0
        %v2521 = vadd.f32 %v2405, %v2520
        %v2522 = vpop.f32.mrb[0].mxu0
        %v2523 = vpop.f32.mrb[0].mxu0
        %v2524 = vadd.f32 %v2405, %v2523
        %v2525 = vpop.f32.mrb[0].mxu0
        %2526 = vmatprep.mubr.bf16.mxu0 0
        %2527 = vmatmul.mubr.bf16.gmra.mrb[0].mxu0 %v2383
        %v2528 = vpop.f32.mrb[0].mxu0
        %v2529 = vadd.f32 %v2405, %v2528
        %v2530 = vpop.f32.mrb[0].mxu0
        %v2531 = vpop.f32.mrb[0].mxu0
        %v2532 = vadd.f32 %v2405, %v2531
        %v2533 = vpop.f32.mrb[0].mxu0
        %2534 = vmatprep.mubr.bf16.mxu0 0
        %2535 = vmatmul.mubr.bf16.gmra.mrb[0].mxu0 %v2384
        %v2536 = vpop.f32.mrb[0].mxu0
        %v2537 = vadd.f32 %v2405, %v2536
        %v2538 = vpop.f32.mrb[0].mxu0
        %v2539 = vpop.f32.mrb[0].mxu0
        %v2540 = vadd.f32 %v2405, %v2539
        %v2541 = vpop.f32.mrb[0].mxu0
        %2542 = vmatprep.mubr.bf16.mxu0 0
        %2543 = vmatmul.mubr.bf16.gmra.mrb[0].mxu0 %v2385
        %v2544 = vpop.f32.mrb[0].mxu0
        %v2545 = vadd.f32 %v2405, %v2544
        %v2546 = vpop.f32.mrb[0].mxu0
        %v2547 = vpop.f32.mrb[0].mxu0
        %v2548 = vadd.f32 %v2405, %v2547
        %v2549 = vpop.f32.mrb[0].mxu0
        %2550 = vdwg.mxu0
        %v2551 = vadd.f32 %v345, %v2489
        %v2552 = vadd.f32 %v346, %v2492
        %v2553 = vadd.f32 %v347, %v2497
        %v2554 = vadd.f32 %v348, %v2500
        %v2555 = vadd.f32 %v349, %v2505
        %v2556 = vadd.f32 %v350, %v2508
        %v2557 = vadd.f32 %v351, %v2513
        %v2558 = vadd.f32 %v352, %v2516
        %v2559 = vadd.f32 %v353, %v2521
        %v2560 = vadd.f32 %v354, %v2524
        %v2561 = vadd.f32 %v355, %v2529
        %v2562 = vadd.f32 %v356, %v2532
        %v2563 = vadd.f32 %v357, %v2537
        %v2564 = vadd.f32 %v358, %v2540
        %v2565 = vadd.f32 %v359, %v2545
        %v2566 = vadd.f32 %v360, %v2548
        %2567 = vst [vmem:[%s341] sm:$0xff] %v2551
        %2568 = vst [vmem:[%s341 + $0x8] sm:$0xff] %v2552
        %2569 = vst [vmem:[%s341 + $0x10] sm:$0xff] %v2553
        %2570 = vst [vmem:[%s341 + $0x18] sm:$0xff] %v2554
        %2571 = vst [vmem:[%s341 + $0x20] sm:$0xff] %v2555
        %2572 = vst [vmem:[%s341 + $0x28] sm:$0xff] %v2556
        %2573 = vst [vmem:[%s341 + $0x30] sm:$0xff] %v2557
        %2574 = vst [vmem:[%s341 + $0x38] sm:$0xff] %v2558
        %2575 = vst [vmem:[%s341 + $0x40] sm:$0xff] %v2559
        %2576 = vst [vmem:[%s341 + $0x48] sm:$0xff] %v2560
        %2577 = vst [vmem:[%s341 + $0x50] sm:$0xff] %v2561
        %2578 = vst [vmem:[%s341 + $0x58] sm:$0xff] %v2562
        %2579 = vst [vmem:[%s341 + $0x60] sm:$0xff] %v2563
        %2580 = vst [vmem:[%s341 + $0x68] sm:$0xff] %v2564
        %2581 = vst [vmem:[%s341 + $0x70] sm:$0xff] %v2565
        %2582 = vst [vmem:[%s341 + $0x78] sm:$0xff] %v2566
        %s2583 = sand.u32 %s165, 1
        %s2584 = scalar_lea.sflag [#allocation4], %s2583
        %s2585 = sand.u32 %s165, 1
        %s2586 = smul.addr %s2585, 128
        %s2587 = scalar_lea.vmem [#allocation13], %s2586
        // Predicated region
        $region69: #{tpu_custom_call.1} parent=43 // pred_check
          %p2588 = pneg %p175
        $region70: #{tpu_custom_call.1} parent=43 // pred_check_branch
          %2590 = sbr.rel (%p2588) target = $region72
        $region71: #{tpu_custom_call.1} parent=43 // pred_region
          %s2591 = smul.u32 8, %s26
          %s2593 = ssub.s32 2048, 2048
          %2594 = vsyncadd %s2584, %s2593
          %s2595 = smul.addr %s2591, 2
          %s2596 = smul.addr %s2595, 128
          %s2597 = scalar_lea.hbm %s6, %s2596
          %s2598 = sshll.u32 %s2587, 4
          %s2599 = int_to_ptr.vmem [resolvable:$true] %s2598
          %2604 = dma.vmem_to_hbm [thread:$0]  %s2599, 2048, %s2597, %s2584, 128, 128, 8
        $region72: #{tpu_custom_call.1} parent=43 // pred_fallthru
          _
      $region44: #{tpu_custom_call.1} parent=5 // pred_fallthru
        _
      %p2605 = scmp.le.s32.totalorder 2, %s21
      // Predicated region
      $region73: #{tpu_custom_call.1} parent=5 // pred_check
        %p2606 = pneg %p2605
      $region74: #{tpu_custom_call.1} parent=5 // pred_check_branch
        %2608 = sbr.rel (%p2606) target = $region76
      $region75: #{tpu_custom_call.1} parent=5 // pred_region
        %s2609 = ssub.s32 %s21, 2
        // Predicated region
        $region77: #{tpu_custom_call.1} parent=75 // pred_check
          %p2610 = pneg %p181
        $region78: #{tpu_custom_call.1} parent=75 // pred_check_branch
          %2612 = sbr.rel (%p2610) target = $region80
        $region79: #{tpu_custom_call.1} parent=75 // pred_region
          %s2613 = sand.u32 %s166, 1
          %s2614 = scalar_lea.sflag [#allocation4], %s2613
          %s2615 = sand.u32 %s166, 1
          %s2616 = smul.addr %s2615, 128
          %s2617 = scalar_lea.vmem [#allocation13], %s2616
          %2618 = dma.done %s2614, 2048
        $region80: #{tpu_custom_call.1} parent=75 // pred_fallthru
          _
      $region76: #{tpu_custom_call.1} parent=5 // pred_fallthru
        _
    $region6: #{tpu_custom_call.1} parent=1 // loop_footer
      %s25 = sadd.s32 1, %s21
    $region7: #{tpu_custom_call.1} parent=1 // loop_footer_branch
      %20 = sbr.rel target = $region3
    $region8: #{tpu_custom_call.1} parent=1 // loop_exit
      _
    %2619 = vsyncpa [#allocation3], 1
    %s2620 = scalar_lea.sflag [#allocation3], 1
    %2621 = vsyncpa %s2620, 1
    %2622 = vsyncpa [#allocation6], 1
    %2623 = vsyncpa [#allocation9], 1
    %2624 = vsyncpa [#allocation12], 1
    %2625 = vsyncpa [#allocation4], 1
    %s2626 = scalar_lea.sflag [#allocation4], 1
    %2627 = vsyncpa %s2626, 1

// kernel: tpu_custom_call.1
$region0: #{tpu_custom_call.1}
  #allocation0 [shape = 'u32[]', space=smem, size = 0x4, offset = 0x4, fixed_abs, tag = 'smem constant byte address 0x4 - core index']
  #allocation1 [shape = 'u32[144,128]{1,0:T(1,128)}', space=vmem, size = 0x12000, scoped, tag = 'internal scratch']
  %s0 = inlined_call_operand.hbm [shape: f32[16,16,128], index: 0, kind: input, shape index: {}]
  %s1 = inlined_call_operand.hbm [shape: bf16[128,384], index: 1, kind: input, shape index: {}]
  %s2 = inlined_call_operand.hbm [shape: bf16[128,128], index: 2, kind: input, shape index: {}]
  %s3 = inlined_call_operand.hbm [shape: f32[4,128], index: 3, kind: input, shape index: {}]
  %s4 = inlined_call_operand.hbm [shape: f32[128,32], index: 4, kind: input, shape index: {}]
  %s5 = inlined_call_operand.hbm [shape: f32[32,128], index: 5, kind: input, shape index: {}]
  %s6 = inlined_call_operand.hbm [shape: f32[16,16,128], index: 6, kind: output, shape index: {}]
  %s7 = sld [smem:[#allocation0]]
  $region81: #{tpu_custom_call.1} parent=0
    _
  %s9 = ssub.s32 1, %s7
  %s10 = scalar_select 0, %s9, %s7
  $region1: #{tpu_custom_call.1} parent=0
    #allocation2 [shape = 'u8[131072]{0}', space=vmem, size = 0x20000, scoped, tag = 'input window, operand 0']
    #allocation3 [shape = 's32[2]{0}', space=sflag, size = 0x8, scoped, tag = 'scoped memory for tpu_custom_call.1']
    #allocation4 [shape = 's32[2]{0}', space=sflag, size = 0x8, scoped, tag = 'scoped memory for tpu_custom_call.1']
    #allocation5 [shape = 'u8[98304]{0}', space=vmem, size = 0x18000, scoped, tag = 'input window, operand 1, single buffered']
    #allocation6 [shape = 's32[1]{0}', space=sflag, size = 0x4, scoped, tag = 'scoped memory for tpu_custom_call.1']
    #allocation7 [shape = 'u8[32768]{0}', space=vmem, size = 0x8000, scoped, tag = 'input window, operand 2, single buffered']
    #allocation8 [shape = 'u8[2048]{0}', space=vmem, size = 0x800, scoped, tag = 'input window, operand 3, single buffered']
    #allocation9 [shape = 's32[1]{0}', space=sflag, size = 0x4, scoped, tag = 'scoped memory for tpu_custom_call.1']
    #allocation10 [shape = 'u8[65536]{0}', space=vmem, size = 0x10000, scoped, tag = 'input window, operand 4, single buffered']
    #allocation11 [shape = 'u8[16384]{0}', space=vmem, size = 0x4000, scoped, tag = 'input window, operand 5, single buffered']
    #allocation12 [shape = 's32[1]{0}', space=sflag, size = 0x4, scoped, tag = 'scoped memory for tpu_custom_call.1']
    #allocation13 [shape = 'u8[131072]{0}', space=vmem, size = 0x20000, scoped, tag = 'output window, operand 0']
    %11 = vsyncpa [#allocation3], 0
    %s12 = scalar_lea.sflag [#allocation3], 1
    %13 = vsyncpa %s12, 0
    %14 = vsyncpa [#allocation6], 0
    %15 = vsyncpa [#allocation9], 0
    %16 = vsyncpa [#allocation12], 0
    %17 = vsyncpa [#allocation4], 0
    %s18 = scalar_lea.sflag [#allocation4], 1
    %19 = vsyncpa %s18, 0
    loop: start=0, step=1, limit=4
    $region2: #{tpu_custom_call.1} parent=1 // loop_pre_header
      _
    $region3: #{tpu_custom_call.1} parent=1 // loop_header
      %s21 = sphi 0, %s25
      %p22 = scmp.ge.s32.totalorder %s21, 4
      %s31 = sphi 0, %s33
      %s34 = sphi 0, %s31
      %s35 = sphi 0, %s34
      %s51 = sphi 0, %s35
      %s55 = sphi 0, %s55
      %s57 = sphi 0, %s55
      %s58 = sphi 0, %s57
      %s72 = sphi 0, %s58
      %s76 = sphi 0, %s76
      %s78 = sphi 0, %s76
      %s79 = sphi 0, %s78
      %s93 = sphi 0, %s79
      %s97 = sphi 0, %s97
      %s99 = sphi 0, %s97
      %s100 = sphi 0, %s99
      %s114 = sphi 0, %s100
      %s118 = sphi 0, %s118
      %s120 = sphi 0, %s118
      %s121 = sphi 0, %s120
      %s135 = sphi 0, %s121
      %s139 = sphi 0, %s139
      %s141 = sphi 0, %s139
      %s142 = sphi 0, %s141
      %s156 = sphi 0, %s142
      %s162 = sphi 0, %s164
      %s165 = sphi 0, %s162
      %s166 = sphi 0, %s165
      %s182 = sphi 0, %s166
    $region4: #{tpu_custom_call.1} parent=1 // loop_header_branch
      %24 = sbr.rel (%p22) target = $region8
    $region5: #{tpu_custom_call.1} parent=1 // loop_body
      %s26 = ssub.s32 %s21, 1
      %s27 = ssub.s32 %s21, 2
      %s28 = sadd.s32 %s21, 1
      %s29 = ssub.s32 %s21, %s28
      %p30 = scmp.eq.s32.totalorder %s29, 0
      %s32 = sadd.s32 %s31, 1
      %s33 = scalar_select %p30, %s31, %s32
      %p36 = pneg %p30
      %p37 = scmp.eq.s32.totalorder %s21, 1
      %p38 = por %p36, %p37
      %p39 = scmp.ne.s32.totalorder %s31, %s34
      %p40 = scmp.eq.s32.totalorder %s21, 0
      %p41 = por %p39, %p40
      %p42 = scmp.ne.s32.totalorder %s31, %s34
      %p43 = scmp.eq.s32.totalorder %s26, 1
      %p44 = por %p42, %p43
      %p45 = scmp.ne.s32.totalorder %s34, %s35
      %p46 = scmp.eq.s32.totalorder %s26, 0
      %p47 = por %p45, %p46
      %p48 = scmp.ne.s32.totalorder %s34, %s35
      %p49 = scmp.eq.s32.totalorder %s27, 1
      %p50 = por %p48, %p49
      %p52 = scmp.ne.s32.totalorder %s35, %s51
      %p53 = scmp.eq.s32.totalorder %s27, 0
      %p54 = por %p52, %p53
      %s56 = sadd.s32 %s55, 1
      %p59 = scmp.eq.s32.totalorder %s21, 1
      %p60 = scmp.ne.s32.totalorder %s55, %s57
      %p61 = scmp.eq.s32.totalorder %s21, 0
      %p62 = por %p60, %p61
      %p63 = scmp.ne.s32.totalorder %s55, %s57
      %p64 = scmp.eq.s32.totalorder %s26, 1
      %p65 = por %p63, %p64
      %p66 = scmp.ne.s32.totalorder %s57, %s58
      %p67 = scmp.eq.s32.totalorder %s26, 0
      %p68 = por %p66, %p67
      %p69 = scmp.ne.s32.totalorder %s57, %s58
      %p70 = scmp.eq.s32.totalorder %s27, 1
      %p71 = por %p69, %p70
      %p73 = scmp.ne.s32.totalorder %s58, %s72
      %p74 = scmp.eq.s32.totalorder %s27, 0
      %p75 = por %p73, %p74
      %s77 = sadd.s32 %s76, 1
      %p80 = scmp.eq.s32.totalorder %s21, 1
      %p81 = scmp.ne.s32.totalorder %s76, %s78
      %p82 = scmp.eq.s32.totalorder %s21, 0
      %p83 = por %p81, %p82
      %p84 = scmp.ne.s32.totalorder %s76, %s78
      %p85 = scmp.eq.s32.totalorder %s26, 1
      %p86 = por %p84, %p85
      %p87 = scmp.ne.s32.totalorder %s78, %s79
      %p88 = scmp.eq.s32.totalorder %s26, 0
      %p89 = por %p87, %p88
      %p90 = scmp.ne.s32.totalorder %s78, %s79
      %p91 = scmp.eq.s32.totalorder %s27, 1
      %p92 = por %p90, %p91
      %p94 = scmp.ne.s32.totalorder %s79, %s93
      %p95 = scmp.eq.s32.totalorder %s27, 0
      %p96 = por %p94, %p95
      %s98 = sadd.s32 %s97, 1
      %p101 = scmp.eq.s32.totalorder %s21, 1
      %p102 = scmp.ne.s32.totalorder %s97, %s99
      %p103 = scmp.eq.s32.totalorder %s21, 0
      %p104 = por %p102, %p103
      %p105 = scmp.ne.s32.totalorder %s97, %s99
      %p106 = scmp.eq.s32.totalorder %s26, 1
      %p107 = por %p105, %p106
      %p108 = scmp.ne.s32.totalorder %s99, %s100
      %p109 = scmp.eq.s32.totalorder %s26, 0
      %p110 = por %p108, %p109
      %p111 = scmp.ne.s32.totalorder %s99, %s100
      %p112 = scmp.eq.s32.totalorder %s27, 1
      %p113 = por %p111, %p112
      %p115 = scmp.ne.s32.totalorder %s100, %s114
      %p116 = scmp.eq.s32.totalorder %s27, 0
      %p117 = por %p115, %p116
      %s119 = sadd.s32 %s118, 1
      %p122 = scmp.eq.s32.totalorder %s21, 1
      %p123 = scmp.ne.s32.totalorder %s118, %s120
      %p124 = scmp.eq.s32.totalorder %s21, 0
      %p125 = por %p123, %p124
      %p126 = scmp.ne.s32.totalorder %s118, %s120
      %p127 = scmp.eq.s32.totalorder %s26, 1
      %p128 = por %p126, %p127
      %p129 = scmp.ne.s32.totalorder %s120, %s121
      %p130 = scmp.eq.s32.totalorder %s26, 0
      %p131 = por %p129, %p130
      %p132 = scmp.ne.s32.totalorder %s120, %s121
      %p133 = scmp.eq.s32.totalorder %s27, 1
      %p134 = por %p132, %p133
      %p136 = scmp.ne.s32.totalorder %s121, %s135
      %p137 = scmp.eq.s32.totalorder %s27, 0
      %p138 = por %p136, %p137
      %s140 = sadd.s32 %s139, 1
      %p143 = scmp.eq.s32.totalorder %s21, 1
      %p144 = scmp.ne.s32.totalorder %s139, %s141
      %p145 = scmp.eq.s32.totalorder %s21, 0
      %p146 = por %p144, %p145
      %p147 = scmp.ne.s32.totalorder %s139, %s141
      %p148 = scmp.eq.s32.totalorder %s26, 1
      %p149 = por %p147, %p148
      %p150 = scmp.ne.s32.totalorder %s141, %s142
      %p151 = scmp.eq.s32.totalorder %s26, 0
      %p152 = por %p150, %p151
      %p153 = scmp.ne.s32.totalorder %s141, %s142
      %p154 = scmp.eq.s32.totalorder %s27, 1
      %p155 = por %p153, %p154
      %p157 = scmp.ne.s32.totalorder %s142, %s156
      %p158 = scmp.eq.s32.totalorder %s27, 0
      %p159 = por %p157, %p158
      %s160 = ssub.s32 %s21, %s28
      %p161 = scmp.eq.s32.totalorder %s160, 0
      %s163 = sadd.s32 %s162, 1
      %s164 = scalar_select %p161, %s162, %s163
      %p167 = pneg %p161
      %p168 = scmp.eq.s32.totalorder %s21, 1
      %p169 = por %p167, %p168
      %p170 = scmp.ne.s32.totalorder %s162, %s165
      %p171 = scmp.eq.s32.totalorder %s21, 0
      %p172 = por %p170, %p171
      %p173 = scmp.ne.s32.totalorder %s162, %s165
      %p174 = scmp.eq.s32.totalorder %s26, 1
      %p175 = por %p173, %p174
      %p176 = scmp.ne.s32.totalorder %s165, %s166
      %p177 = scmp.eq.s32.totalorder %s26, 0
      %p178 = por %p176, %p177
      %p179 = scmp.ne.s32.totalorder %s165, %s166
      %p180 = scmp.eq.s32.totalorder %s27, 1
      %p181 = por %p179, %p180
      %p183 = scmp.ne.s32.totalorder %s166, %s182
      %p184 = scmp.eq.s32.totalorder %s27, 0
      %p185 = por %p183, %p184
      %p186 = scmp.le.s32.totalorder 1, %s21
      %p187 = scmp.lt.s32.totalorder %s21, 3
      %p188 = pnand %p186, %p187
      %p189 = pneg %p188
      // Predicated region
      $region9: #{tpu_custom_call.1} parent=5 // pred_check
        _
      $region10: #{tpu_custom_call.1} parent=5 // pred_check_branch
        %191 = sbr.rel (%p188) target = $region12
      $region11: #{tpu_custom_call.1} parent=5 // pred_region
        %s192 = ssub.s32 %s21, 1
        // Predicated region
        $region13: #{tpu_custom_call.1} parent=11 // pred_check
          %p193 = pneg %p68
        $region14: #{tpu_custom_call.1} parent=11 // pred_check_branch
          %195 = sbr.rel (%p193) target = $region16
        $region15: #{tpu_custom_call.1} parent=11 // pred_region
          %s197 = ssub.s32 3072, 3072
          %198 = vsyncadd [#allocation6], %s197
          %s199 = sshll.u32 [#allocation5], 4
          %s200 = int_to_ptr.vmem [resolvable:$true] %s199
          %205 = dma.hbm_to_vmem [thread:$0]  %s1, 3072, %s200, [#allocation6], 192, 192, 12
        $region16: #{tpu_custom_call.1} parent=11 // pred_fallthru
          _
        // Predicated region
        $region17: #{tpu_custom_call.1} parent=11 // pred_check
          %p206 = pneg %p89
        $region18: #{tpu_custom_call.1} parent=11 // pred_check_branch
          %208 = sbr.rel (%p206) target = $region20
        $region19: #{tpu_custom_call.1} parent=11 // pred_region
          %s210 = ssub.s32 1024, 1024
          %211 = vsyncadd [#allocation6], %s210
          %s212 = sshll.u32 [#allocation7], 4
          %s213 = int_to_ptr.vmem [resolvable:$true] %s212
          %218 = dma.hbm_to_vmem [thread:$0]  %s2, 1024, %s213, [#allocation6], 64, 64, 4
        $region20: #{tpu_custom_call.1} parent=11 // pred_fallthru
          _
        // Predicated region
        $region21: #{tpu_custom_call.1} parent=11 // pred_check
          %p219 = pneg %p110
        $region22: #{tpu_custom_call.1} parent=11 // pred_check_branch
          %221 = sbr.rel (%p219) target = $region24
        $region23: #{tpu_custom_call.1} parent=11 // pred_region
          %s223 = ssub.s32 64, 64
          %224 = vsyncadd [#allocation9], %s223
          %s226 = sshll.u32 [#allocation8], 4
          %s227 = int_to_ptr.vmem [resolvable:$true] %s226
          %229 = dma.hbm_to_vmem [thread:$0]  %s3, 64, %s227, [#allocation9]
        $region24: #{tpu_custom_call.1} parent=11 // pred_fallthru
          _
        // Predicated region
        $region25: #{tpu_custom_call.1} parent=11 // pred_check
          %p230 = pneg %p131
        $region26: #{tpu_custom_call.1} parent=11 // pred_check_branch
          %232 = sbr.rel (%p230) target = $region28
        $region27: #{tpu_custom_call.1} parent=11 // pred_region
          %s234 = ssub.s32 2048, 2048
          %235 = vsyncadd [#allocation9], %s234
          %s236 = sshll.u32 [#allocation10], 4
          %s237 = int_to_ptr.vmem [resolvable:$true] %s236
          %242 = dma.hbm_to_vmem [thread:$0]  %s4, 2048, %s237, [#allocation9], 128, 128, 8
        $region28: #{tpu_custom_call.1} parent=11 // pred_fallthru
          _
        // Predicated region
        $region29: #{tpu_custom_call.1} parent=11 // pred_check
          %p243 = pneg %p152
        $region30: #{tpu_custom_call.1} parent=11 // pred_check_branch
          %245 = sbr.rel (%p243) target = $region32
        $region31: #{tpu_custom_call.1} parent=11 // pred_region
          %s247 = ssub.s32 512, 512
          %248 = vsyncadd [#allocation12], %s247
          %s249 = sshll.u32 [#allocation11], 4
          %s250 = int_to_ptr.vmem [resolvable:$true] %s249
          %255 = dma.hbm_to_vmem [thread:$0]  %s5, 512, %s250, [#allocation12], 128, 128, 8
        $region32: #{tpu_custom_call.1} parent=11 // pred_fallthru
          _
      $region12: #{tpu_custom_call.1} parent=5 // pred_fallthru
        _
      %p256 = scmp.lt.s32.totalorder %s21, 2
      // Predicated region
      $region33: #{tpu_custom_call.1} parent=5 // pred_check
        %p257 = pneg %p256
      $region34: #{tpu_custom_call.1} parent=5 // pred_check_branch
        %259 = sbr.rel (%p257) target = $region36
      $region35: #{tpu_custom_call.1} parent=5 // pred_region
        // Predicated region
        $region37: #{tpu_custom_call.1} parent=35 // pred_check
          %p260 = pneg %p41
        $region38: #{tpu_custom_call.1} parent=35 // pred_check_branch
          %262 = sbr.rel (%p260) target = $region40
        $region39: #{tpu_custom_call.1} parent=35 // pred_region
          %s263 = sand.u32 %s31, 1
          %s264 = scalar_lea.sflag [#allocation3], %s263
          %s265 = sand.u32 %s31, 1
          %s266 = smul.addr %s265, 128
          %s267 = scalar_lea.vmem [#allocation2], %s266
          %s268 = smul.u32 8, %s21
          %s270 = ssub.s32 2048, 2048
          %271 = vsyncadd %s264, %s270
          %s272 = smul.addr %s268, 2
          %s273 = smul.addr %s272, 128
          %s274 = scalar_lea.hbm %s0, %s273
          %s275 = sshll.u32 %s267, 4
          %s276 = int_to_ptr.vmem [resolvable:$true] %s275
          %281 = dma.hbm_to_vmem [thread:$0]  %s274, 2048, %s276, %s264, 128, 128, 8
        $region40: #{tpu_custom_call.1} parent=35 // pred_fallthru
          _
      $region36: #{tpu_custom_call.1} parent=5 // pred_fallthru
        _
      %p282 = scmp.le.s32.totalorder 1, %s21
      %p283 = scmp.lt.s32.totalorder %s21, 3
      %p284 = pnand %p282, %p283
      %p285 = pneg %p284
      // Predicated region
      $region41: #{tpu_custom_call.1} parent=5 // pred_check
        _
      $region42: #{tpu_custom_call.1} parent=5 // pred_check_branch
        %287 = sbr.rel (%p284) target = $region44
      $region43: #{tpu_custom_call.1} parent=5 // pred_region
        %s288 = ssub.s32 %s21, 1
        %s289 = sand.u32 %s34, 1
        %s290 = scalar_lea.sflag [#allocation3], %s289
        %s291 = sand.u32 %s34, 1
        %s292 = smul.addr %s291, 128
        %s293 = scalar_lea.vmem [#allocation2], %s292
        // Predicated region
        $region45: #{tpu_custom_call.1} parent=43 // pred_check
          %p294 = pneg %p47
        $region46: #{tpu_custom_call.1} parent=43 // pred_check_branch
          %296 = sbr.rel (%p294) target = $region48
        $region47: #{tpu_custom_call.1} parent=43 // pred_region
          %297 = dma.done %s290, 2048
        $region48: #{tpu_custom_call.1} parent=43 // pred_fallthru
          _
        // Predicated region
        $region49: #{tpu_custom_call.1} parent=43 // pred_check
          %p298 = pneg %p68
        $region50: #{tpu_custom_call.1} parent=43 // pred_check_branch
          %300 = sbr.rel (%p298) target = $region52
        $region51: #{tpu_custom_call.1} parent=43 // pred_region
          %301 = dma.done [#allocation6], 3072
        $region52: #{tpu_custom_call.1} parent=43 // pred_fallthru
          _
        // Predicated region
        $region53: #{tpu_custom_call.1} parent=43 // pred_check
          %p302 = pneg %p89
        $region54: #{tpu_custom_call.1} parent=43 // pred_check_branch
          %304 = sbr.rel (%p302) target = $region56
        $region55: #{tpu_custom_call.1} parent=43 // pred_region
          %305 = dma.done [#allocation6], 1024
        $region56: #{tpu_custom_call.1} parent=43 // pred_fallthru
          _
        // Predicated region
        $region57: #{tpu_custom_call.1} parent=43 // pred_check
          %p306 = pneg %p110
        $region58: #{tpu_custom_call.1} parent=43 // pred_check_branch
          %308 = sbr.rel (%p306) target = $region60
        $region59: #{tpu_custom_call.1} parent=43 // pred_region
          %309 = dma.done [#allocation9], 64
        $region60: #{tpu_custom_call.1} parent=43 // pred_fallthru
          _
        // Predicated region
        $region61: #{tpu_custom_call.1} parent=43 // pred_check
          %p310 = pneg %p131
        $region62: #{tpu_custom_call.1} parent=43 // pred_check_branch
          %312 = sbr.rel (%p310) target = $region64
        $region63: #{tpu_custom_call.1} parent=43 // pred_region
          %313 = dma.done [#allocation9], 2048
        $region64: #{tpu_custom_call.1} parent=43 // pred_fallthru
          _
        // Predicated region
        $region65: #{tpu_custom_call.1} parent=43 // pred_check
          %p314 = pneg %p152
        $region66: #{tpu_custom_call.1} parent=43 // pred_check_branch
          %316 = sbr.rel (%p314) target = $region68
        $region67: #{tpu_custom_call.1} parent=43 // pred_region
          %317 = dma.done [#allocation12], 512
        $region68: #{tpu_custom_call.1} parent=43 // pred_fallthru
          _
        %s318 = sand.u32 %s34, 1
        %s319 = scalar_lea.sflag [#allocation3], %s318
        %s320 = sand.u32 %s34, 1
        %s321 = smul.addr %s320, 128
        %s322 = scalar_lea.vmem [#allocation2], %s321
        %p323 = pneg %p47
        %p324 = pneg %p44
        %p325 = pneg %p68
        %p326 = pneg %p65
        %p327 = pneg %p89
        %p328 = pneg %p86
        %p329 = pneg %p110
        %p330 = pneg %p107
        %p331 = pneg %p131
        %p332 = pneg %p128
        %p333 = pneg %p152
        %p334 = pneg %p149
        %p335 = pneg %p178
        %p336 = pneg %p175
        %s337 = sand.u32 %s165, 1
        %s338 = scalar_lea.sflag [#allocation4], %s337
        %s339 = sand.u32 %s165, 1
        %s340 = smul.addr %s339, 128
        %s341 = scalar_lea.vmem [#allocation13], %s340
        %s342 = smul.u32 8, %s26
        %s343 = smul.u32 8, %s26
        %v345 = vld [vmem:[%s293] sm:$0xff]
        %v346 = vld [vmem:[%s293 + $0x8] sm:$0xff]
        %v347 = vld [vmem:[%s293 + $0x10] sm:$0xff]
        %v348 = vld [vmem:[%s293 + $0x18] sm:$0xff]
        %v349 = vld [vmem:[%s293 + $0x20] sm:$0xff]
        %v350 = vld [vmem:[%s293 + $0x28] sm:$0xff]
        %v351 = vld [vmem:[%s293 + $0x30] sm:$0xff]
        %v352 = vld [vmem:[%s293 + $0x38] sm:$0xff]
        %v353 = vld [vmem:[%s293 + $0x40] sm:$0xff]
        %v354 = vld [vmem:[%s293 + $0x48] sm:$0xff]
        %v355 = vld [vmem:[%s293 + $0x50] sm:$0xff]
        %v356 = vld [vmem:[%s293 + $0x58] sm:$0xff]
        %v357 = vld [vmem:[%s293 + $0x60] sm:$0xff]
        %v358 = vld [vmem:[%s293 + $0x68] sm:$0xff]
        %v359 = vld [vmem:[%s293 + $0x70] sm:$0xff]
        %v360 = vld [vmem:[%s293 + $0x78] sm:$0xff]
        %v361 = vld [vmem:[#allocation10] sm:$0xff]
        %v362 = vld [vmem:[#allocation10 + $0x8] sm:$0xff]
        %v363 = vld [vmem:[#allocation10 + $0x10] sm:$0xff]
        %v364 = vld [vmem:[#allocation10 + $0x18] sm:$0xff]
        %v365 = vld [vmem:[#allocation10 + $0x20] sm:$0xff]
        %v366 = vld [vmem:[#allocation10 + $0x28] sm:$0xff]
        %v367 = vld [vmem:[#allocation10 + $0x30] sm:$0xff]
        %v368 = vld [vmem:[#allocation10 + $0x38] sm:$0xff]
        %v369 = vld [vmem:[#allocation10 + $0x40] sm:$0xff]
        %v370 = vld [vmem:[#allocation10 + $0x48] sm:$0xff]
        %v371 = vld [vmem:[#allocation10 + $0x50] sm:$0xff]
        %v372 = vld [vmem:[#allocation10 + $0x58] sm:$0xff]
        %v373 = vld [vmem:[#allocation10 + $0x60] sm:$0xff]
        %v374 = vld [vmem:[#allocation10 + $0x68] sm:$0xff]
        %v375 = vld [vmem:[#allocation10 + $0x70] sm:$0xff]
        %v376 = vld [vmem:[#allocation10 + $0x78] sm:$0xff]
        %v377 = vld [vmem:[#allocation11] sm:$0xff]
        %v378 = vld [vmem:[#allocation11 + $0x8] sm:$0xff]
        %v379 = vld [vmem:[#allocation11 + $0x10] sm:$0xff]
        %v380 = vld [vmem:[#allocation11 + $0x18] sm:$0xff]
        %v381 = vadd.f32 %v345, %v346
        %v382 = vrot.slane %v381, 4
        %v383 = vadd.f32 %v381, %v382
        %v384 = vrot.slane %v383, 2
        %v385 = vadd.f32 %v383, %v384
        %v386 = vrot.slane %v385, 1
        %v387 = vadd.f32 %v385, %v386
        %v388 = vadd.f32 %v347, %v348
        %v389 = vrot.slane %v388, 4
        %v390 = vadd.f32 %v388, %v389
        %v391 = vrot.slane %v390, 2
        %v392 = vadd.f32 %v390, %v391
        %v393 = vrot.slane %v392, 1
        %v394 = vadd.f32 %v392, %v393
        %v395 = vadd.f32 %v349, %v350
        %v396 = vrot.slane %v395, 4
        %v397 = vadd.f32 %v395, %v396
        %v398 = vrot.slane %v397, 2
        %v399 = vadd.f32 %v397, %v398
        %v400 = vrot.slane %v399, 1
        %v401 = vadd.f32 %v399, %v400
        %v402 = vadd.f32 %v351, %v352
        %v403 = vrot.slane %v402, 4
        %v404 = vadd.f32 %v402, %v403
        %v405 = vrot.slane %v404, 2
        %v406 = vadd.f32 %v404, %v405
        %v407 = vrot.slane %v406, 1
        %v408 = vadd.f32 %v406, %v407
        %v409 = vadd.f32 %v353, %v354
        %v410 = vrot.slane %v409, 4
        %v411 = vadd.f32 %v409, %v410
        %v412 = vrot.slane %v411, 2
        %v413 = vadd.f32 %v411, %v412
        %v414 = vrot.slane %v413, 1
        %v415 = vadd.f32 %v413, %v414
        %v416 = vadd.f32 %v355, %v356
        %v417 = vrot.slane %v416, 4
        %v418 = vadd.f32 %v416, %v417
        %v419 = vrot.slane %v418, 2
        %v420 = vadd.f32 %v418, %v419
        %v421 = vrot.slane %v420, 1
        %v422 = vadd.f32 %v420, %v421
        %v423 = vadd.f32 %v357, %v358
        %v424 = vrot.slane %v423, 4
        %v425 = vadd.f32 %v423, %v424
        %v426 = vrot.slane %v425, 2
        %v427 = vadd.f32 %v425, %v426
        %v428 = vrot.slane %v427, 1
        %v429 = vadd.f32 %v427, %v428
        %v430 = vadd.f32 %v359, %v360
        %v431 = vrot.slane %v430, 4
        %v432 = vadd.f32 %v430, %v431
        %v433 = vrot.slane %v432, 2
        %v434 = vadd.f32 %v432, %v433
        %v435 = vrot.slane %v434, 1
        %v436 = vadd.f32 %v434, %v435
        %vm445 = vcmask 1041409
        %v446 = vsel %vm445, %v394, %v387
        %vm447 = vcmask 1042434
        %v448 = vsel %vm447, %v401, %v446
        %vm449 = vcmask 1043459
        %v450 = vsel %vm449, %v408, %v448
        %vm451 = vcmask 1044484
        %v452 = vsel %vm451, %v415, %v450
        %vm453 = vcmask 1045509
        %v454 = vsel %vm453, %v422, %v452
        %vm455 = vcmask 1046534
        %v456 = vsel %vm455, %v429, %v454
        %vm457 = vcmask 1047559
        %v458 = vsel %vm457, %v436, %v456
        %460 = vmatprep.subr.mxu0 0.0
        %461 = vmatpush1.msra.mxu0 %v361
        %462 = vmatprep.subr.mxu0 0.0
        %463 = vmatpush1.msra.mxu0 %v362
        %464 = vmatprep.subr.mxu0 0.0
        %465 = vmatpush1.msra.mxu0 %v363
        %466 = vmatprep.subr.mxu0 0.0
        %467 = vmatpush1.msra.mxu0 %v364
        %468 = vmatprep.subr.mxu0 0.0
        %469 = vmatpush1.msra.mxu0 %v365
        %470 = vmatprep.subr.mxu0 0.0
        %471 = vmatpush1.msra.mxu0 %v366
        %472 = vmatprep.subr.mxu0 0.0
        %473 = vmatpush1.msra.mxu0 %v367
        %474 = vmatprep.subr.mxu0 0.0
        %475 = vmatpush1.msra.mxu0 %v368
        %476 = vmatprep.subr.mxu0 0.0
        %477 = vmatpush1.msra.mxu0 %v369
        %478 = vmatprep.subr.mxu0 0.0
        %479 = vmatpush1.msra.mxu0 %v370
        %480 = vmatprep.subr.mxu0 0.0
        %481 = vmatpush1.msra.mxu0 %v371
        %482 = vmatprep.subr.mxu0 0.0
        %483 = vmatpush1.msra.mxu0 %v372
        %484 = vmatprep.subr.mxu0 0.0
        %485 = vmatpush1.msra.mxu0 %v373
        %486 = vmatprep.subr.mxu0 0.0
        %487 = vmatpush1.msra.mxu0 %v374
        %488 = vmatprep.subr.mxu0 0.0
        %489 = vmatpush1.msra.mxu0 %v375
        %490 = vmatprep.subr.mxu0 0.0
        %491 = vmatpush1.msra.mxu0 %v376
        %492 = vmatprep.subr.mxu0 0.0
        %493 = vmatpush1.msra.mxu0 0.0
        %494 = vmatprep.subr.mxu0 0.0
        %495 = vmatpush1.msra.mxu0 0.0
        %496 = vmatprep.subr.mxu0 0.0
        %497 = vmatpush1.msra.mxu0 0.0
        %498 = vmatprep.subr.mxu0 0.0
        %499 = vmatpush1.msra.mxu0 0.0
        %500 = vmatprep.subr.mxu0 0.0
        %501 = vmatpush1.msra.mxu0 0.0
        %502 = vmatprep.subr.mxu0 0.0
        %503 = vmatpush1.msra.mxu0 0.0
        %504 = vmatprep.subr.mxu0 0.0
        %505 = vmatpush1.msra.mxu0 0.0
        %506 = vmatprep.subr.mxu0 0.0
        %507 = vmatpush1.msra.mxu0 0.0
        %508 = vmatprep.subr.mxu0 0.0
        %509 = vmatpush1.msra.mxu0 0.0
        %510 = vmatprep.subr.mxu0 0.0
        %511 = vmatpush1.msra.mxu0 0.0
        %512 = vmatprep.subr.mxu0 0.0
        %513 = vmatpush1.msra.mxu0 0.0
        %514 = vmatprep.subr.mxu0 0.0
        %515 = vmatpush1.msra.mxu0 0.0
        %516 = vmatprep.subr.mxu0 0.0
        %517 = vmatpush1.msra.mxu0 0.0
        %518 = vmatprep.subr.mxu0 0.0
        %519 = vmatpush1.msra.mxu0 0.0
        %520 = vmatprep.subr.mxu0 0.0
        %521 = vmatpush1.msra.mxu0 0.0
        %522 = vmatprep.subr.mxu0 0.0
        %523 = vmatpush1.msra.mxu0 0.0
        %524 = vmatprep.mubr.f32.mxu0 0.0
        %525 = vmatmul.mubr.f32.gmra.mrb[0].mxu0 %v458
        %v526 = vpop.f32.mrb[0].mxu0
        %v527 = vadd.f32 0.0, %v526
        %v528 = vpop.f32.mrb[0].mxu0
        %529 = vdwg.mxu0
        %v530 = vmul.f32 %v527, 0.015625
        %vm531 = vcmask 261120
        %v533 = vsel %vm531, %v530, 0
        %535 = vmatprep.subr.mxu0 0.0
        %536 = vmatpush1.msra.mxu0 %v377
        %537 = vmatprep.subr.mxu0 0.0
        %538 = vmatpush1.msra.mxu0 %v378
        %539 = vmatprep.subr.mxu0 0.0
        %540 = vmatpush1.msra.mxu0 %v379
        %541 = vmatprep.subr.mxu0 0.0
        %542 = vmatpush1.msra.mxu0 %v380
        %543 = vmatprep.subr.mxu0 0.0
        %544 = vmatpush1.msra.mxu0 0.0
        %545 = vmatprep.subr.mxu0 0.0
        %546 = vmatpush1.msra.mxu0 0.0
        %547 = vmatprep.subr.mxu0 0.0
        %548 = vmatpush1.msra.mxu0 0.0
        %549 = vmatprep.subr.mxu0 0.0
        %550 = vmatpush1.msra.mxu0 0.0
        %551 = vmatprep.subr.mxu0 0.0
        %552 = vmatpush1.msra.mxu0 0.0
        %553 = vmatprep.subr.mxu0 0.0
        %554 = vmatpush1.msra.mxu0 0.0
        %555 = vmatprep.subr.mxu0 0.0
        %556 = vmatpush1.msra.mxu0 0.0
        %557 = vmatprep.subr.mxu0 0.0
        %558 = vmatpush1.msra.mxu0 0.0
        %559 = vmatprep.subr.mxu0 0.0
        %560 = vmatpush1.msra.mxu0 0.0
        %561 = vmatprep.subr.mxu0 0.0
        %562 = vmatpush1.msra.mxu0 0.0
        %563 = vmatprep.subr.mxu0 0.0
        %564 = vmatpush1.msra.mxu0 0.0
        %565 = vmatprep.subr.mxu0 0.0
        %566 = vmatpush1.msra.mxu0 0.0
        %567 = vmatprep.subr.mxu0 0.0
        %568 = vmatpush1.msra.mxu0 0.0
        %569 = vmatprep.subr.mxu0 0.0
        %570 = vmatpush1.msra.mxu0 0.0
        %571 = vmatprep.subr.mxu0 0.0
        %572 = vmatpush1.msra.mxu0 0.0
        %573 = vmatprep.subr.mxu0 0.0
        %574 = vmatpush1.msra.mxu0 0.0
        %575 = vmatprep.subr.mxu0 0.0
        %576 = vmatpush1.msra.mxu0 0.0
        %577 = vmatprep.subr.mxu0 0.0
        %578 = vmatpush1.msra.mxu0 0.0
        %579 = vmatprep.subr.mxu0 0.0
        %580 = vmatpush1.msra.mxu0 0.0
        %581 = vmatprep.subr.mxu0 0.0
        %582 = vmatpush1.msra.mxu0 0.0
        %583 = vmatprep.subr.mxu0 0.0
        %584 = vmatpush1.msra.mxu0 0.0
        %585 = vmatprep.subr.mxu0 0.0
        %586 = vmatpush1.msra.mxu0 0.0
        %587 = vmatprep.subr.mxu0 0.0
        %588 = vmatpush1.msra.mxu0 0.0
        %589 = vmatprep.subr.mxu0 0.0
        %590 = vmatpush1.msra.mxu0 0.0
        %591 = vmatprep.subr.mxu0 0.0
        %592 = vmatpush1.msra.mxu0 0.0
        %593 = vmatprep.subr.mxu0 0.0
        %594 = vmatpush1.msra.mxu0 0.0
        %595 = vmatprep.subr.mxu0 0.0
        %596 = vmatpush1.msra.mxu0 0.0
        %597 = vmatprep.subr.mxu0 0.0
        %598 = vmatpush1.msra.mxu0 0.0
        %599 = vmatprep.mubr.f32.mxu0 0.0
        %600 = vmatmul.mubr.f32.gmra.mrb[0].mxu0 %v533
        %v601 = vpop.f32.mrb[0].mxu0
        %v602 = vadd.f32 0.0, %v601
        %v603 = vpop.f32.mrb[0].mxu0
        %604 = vdwg.mxu0
        %v606 = vcombine.high %v602, %v602
        %v608 = vunpack.c.l.s4 1966171168
        %v609 = vunpack.c.0.s8 %v608
        %v610 = vlaneseq
        %v611 = vshrl.u32 %v610, 7
        %v612 = vsub.s32 %v609, %v611
        %v613 = vrot.slane %v602, %v612
        %v615 = vunpack.c.l.s4 1966171168
        %v616 = vunpack.c.0.s8 %v615
        %v617 = vlaneseq
        %v618 = vshrl.u32 %v617, 7
        %v619 = vsub.s32 %v616, %v618
        %v620 = vrot.slane %v606, %v619
        %v621 = vcombine.high %v613, %v613
        %v622 = vcombine.high %v620, %v620
        %v624 = vunpack.c.l.s4 1966171168
        %v625 = vunpack.c.0.s8 %v624
        %v626 = vlaneseq
        %v627 = vshrl.u32 %v626, 7
        %v628 = vsub.s32 %v625, %v627
        %v629 = vrot.slane %v613, %v628
        %v631 = vunpack.c.l.s4 1966171168
        %v632 = vunpack.c.0.s8 %v631
        %v633 = vlaneseq
        %v634 = vshrl.u32 %v633, 7
        %v635 = vsub.s32 %v632, %v634
        %v636 = vrot.slane %v620, %v635
        %v638 = vunpack.c.l.s4 1966171168
        %v639 = vunpack.c.0.s8 %v638
        %v640 = vlaneseq
        %v641 = vshrl.u32 %v640, 7
        %v642 = vsub.s32 %v639, %v641
        %v643 = vrot.slane %v621, %v642
        %v645 = vunpack.c.l.s4 1966171168
        %v646 = vunpack.c.0.s8 %v645
        %v647 = vlaneseq
        %v648 = vshrl.u32 %v647, 7
        %v649 = vsub.s32 %v646, %v648
        %v650 = vrot.slane %v622, %v649
        %v651 = vcombine.high %v629, %v629
        %v652 = vcombine.high %v636, %v636
        %v653 = vcombine.high %v643, %v643
        %v654 = vcombine.high %v650, %v650
        %v655 = vlaneseq
        %v656 = vshrl.u32 %v655, 7
        %v657 = vsub.s32 0, %v656
        %v658 = vrot.slane %v629, %v657
        %v659 = vlaneseq
        %v660 = vshrl.u32 %v659, 7
        %v661 = vsub.s32 0, %v660
        %v662 = vrot.slane %v643, %v661
        %v663 = vlaneseq
        %v664 = vshrl.u32 %v663, 7
        %v665 = vsub.s32 0, %v664
        %v666 = vrot.slane %v651, %v665
        %v667 = vlaneseq
        %v668 = vshrl.u32 %v667, 7
        %v669 = vsub.s32 0, %v668
        %v670 = vrot.slane %v653, %v669
        %v671 = vlaneseq
        %v672 = vshrl.u32 %v671, 7
        %v673 = vsub.s32 0, %v672
        %v674 = vrot.slane %v636, %v673
        %v675 = vlaneseq
        %v676 = vshrl.u32 %v675, 7
        %v677 = vsub.s32 0, %v676
        %v678 = vrot.slane %v650, %v677
        %v679 = vlaneseq
        %v680 = vshrl.u32 %v679, 7
        %v681 = vsub.s32 0, %v680
        %v682 = vrot.slane %v652, %v681
        %v683 = vlaneseq
        %v684 = vshrl.u32 %v683, 7
        %v685 = vsub.s32 0, %v684
        %v686 = vrot.slane %v654, %v685
        %v695 = vsub.f32 %v345, %v658
        %v696 = vsub.f32 %v346, %v658
        %v697 = vsub.f32 %v347, %v662
        %v698 = vsub.f32 %v348, %v662
        %v699 = vsub.f32 %v349, %v666
        %v700 = vsub.f32 %v350, %v666
        %v701 = vsub.f32 %v351, %v670
        %v702 = vsub.f32 %v352, %v670
        %v703 = vsub.f32 %v353, %v674
        %v704 = vsub.f32 %v354, %v674
        %v705 = vsub.f32 %v355, %v678
        %v706 = vsub.f32 %v356, %v678
        %v707 = vsub.f32 %v357, %v682
        %v708 = vsub.f32 %v358, %v682
        %v709 = vsub.f32 %v359, %v686
        %v710 = vsub.f32 %v360, %v686
        %v711 = vmul.f32 %v695, %v695
        %v712 = vmul.f32 %v696, %v696
        %v713 = vmul.f32 %v697, %v697
        %v714 = vmul.f32 %v698, %v698
        %v715 = vmul.f32 %v699, %v699
        %v716 = vmul.f32 %v700, %v700
        %v717 = vmul.f32 %v701, %v701
        %v718 = vmul.f32 %v702, %v702
        %v719 = vmul.f32 %v703, %v703
        %v720 = vmul.f32 %v704, %v704
        %v721 = vmul.f32 %v705, %v705
        %v722 = vmul.f32 %v706, %v706
        %v723 = vmul.f32 %v707, %v707
        %v724 = vmul.f32 %v708, %v708
        %v725 = vmul.f32 %v709, %v709
        %v726 = vmul.f32 %v710, %v710
        %v727 = vadd.f32 %v711, %v712
        %v728 = vrot.slane %v727, 4
        %v729 = vadd.f32 %v727, %v728
        %v730 = vrot.slane %v729, 2
        %v731 = vadd.f32 %v729, %v730
        %v732 = vrot.slane %v731, 1
        %v733 = vadd.f32 %v731, %v732
        %v734 = vadd.f32 %v713, %v714
        %v735 = vrot.slane %v734, 4
        %v736 = vadd.f32 %v734, %v735
        %v737 = vrot.slane %v736, 2
        %v738 = vadd.f32 %v736, %v737
        %v739 = vrot.slane %v738, 1
        %v740 = vadd.f32 %v738, %v739
        %v741 = vadd.f32 %v715, %v716
        %v742 = vrot.slane %v741, 4
        %v743 = vadd.f32 %v741, %v742
        %v744 = vrot.slane %v743, 2
        %v745 = vadd.f32 %v743, %v744
        %v746 = vrot.slane %v745, 1
        %v747 = vadd.f32 %v745, %v746
        %v748 = vadd.f32 %v717, %v718
        %v749 = vrot.slane %v748, 4
        %v750 = vadd.f32 %v748, %v749
        %v751 = vrot.slane %v750, 2
        %v752 = vadd.f32 %v750, %v751
        %v753 = vrot.slane %v752, 1
        %v754 = vadd.f32 %v752, %v753
        %v755 = vadd.f32 %v719, %v720
        %v756 = vrot.slane %v755, 4
        %v757 = vadd.f32 %v755, %v756
        %v758 = vrot.slane %v757, 2
        %v759 = vadd.f32 %v757, %v758
        %v760 = vrot.slane %v759, 1
        %v761 = vadd.f32 %v759, %v760
        %v762 = vadd.f32 %v721, %v722
        %v763 = vrot.slane %v762, 4
        %v764 = vadd.f32 %v762, %v763
        %v765 = vrot.slane %v764, 2
        %v766 = vadd.f32 %v764, %v765
        %v767 = vrot.slane %v766, 1
        %v768 = vadd.f32 %v766, %v767
        %v769 = vadd.f32 %v723, %v724
        %v770 = vrot.slane %v769, 4
        %v771 = vadd.f32 %v769, %v770
        %v772 = vrot.slane %v771, 2
        %v773 = vadd.f32 %v771, %v772
        %v774 = vrot.slane %v773, 1
        %v775 = vadd.f32 %v773, %v774
        %v776 = vadd.f32 %v725, %v726
        %v777 = vrot.slane %v776, 4
        %v778 = vadd.f32 %v776, %v777
        %v779 = vrot.slane %v778, 2
        %v780 = vadd.f32 %v778, %v779
        %v781 = vrot.slane %v780, 1
        %v782 = vadd.f32 %v780, %v781
        %v791 = vsel %vm445, %v740, %v733
        %v792 = vsel %vm447, %v747, %v791
        %v793 = vsel %vm449, %v754, %v792
        %v794 = vsel %vm451, %v761, %v793
        %v795 = vsel %vm453, %v768, %v794
        %v796 = vsel %vm455, %v775, %v795
        %v797 = vsel %vm457, %v782, %v796
        %799 = vmatprep.subr.mxu0 0.0
        %800 = vmatpush1.msra.mxu0 %v361
        %801 = vmatprep.subr.mxu0 0.0
        %802 = vmatpush1.msra.mxu0 %v362
        %803 = vmatprep.subr.mxu0 0.0
        %804 = vmatpush1.msra.mxu0 %v363
        %805 = vmatprep.subr.mxu0 0.0
        %806 = vmatpush1.msra.mxu0 %v364
        %807 = vmatprep.subr.mxu0 0.0
        %808 = vmatpush1.msra.mxu0 %v365
        %809 = vmatprep.subr.mxu0 0.0
        %810 = vmatpush1.msra.mxu0 %v366
        %811 = vmatprep.subr.mxu0 0.0
        %812 = vmatpush1.msra.mxu0 %v367
        %813 = vmatprep.subr.mxu0 0.0
        %814 = vmatpush1.msra.mxu0 %v368
        %815 = vmatprep.subr.mxu0 0.0
        %816 = vmatpush1.msra.mxu0 %v369
        %817 = vmatprep.subr.mxu0 0.0
        %818 = vmatpush1.msra.mxu0 %v370
        %819 = vmatprep.subr.mxu0 0.0
        %820 = vmatpush1.msra.mxu0 %v371
        %821 = vmatprep.subr.mxu0 0.0
        %822 = vmatpush1.msra.mxu0 %v372
        %823 = vmatprep.subr.mxu0 0.0
        %824 = vmatpush1.msra.mxu0 %v373
        %825 = vmatprep.subr.mxu0 0.0
        %826 = vmatpush1.msra.mxu0 %v374
        %827 = vmatprep.subr.mxu0 0.0
        %828 = vmatpush1.msra.mxu0 %v375
        %829 = vmatprep.subr.mxu0 0.0
        %830 = vmatpush1.msra.mxu0 %v376
        %831 = vmatprep.subr.mxu0 0.0
        %832 = vmatpush1.msra.mxu0 0.0
        %833 = vmatprep.subr.mxu0 0.0
        %834 = vmatpush1.msra.mxu0 0.0
        %835 = vmatprep.subr.mxu0 0.0
        %836 = vmatpush1.msra.mxu0 0.0
        %837 = vmatprep.subr.mxu0 0.0
        %838 = vmatpush1.msra.mxu0 0.0
        %839 = vmatprep.subr.mxu0 0.0
        %840 = vmatpush1.msra.mxu0 0.0
        %841 = vmatprep.subr.mxu0 0.0
        %842 = vmatpush1.msra.mxu0 0.0
        %843 = vmatprep.subr.mxu0 0.0
        %844 = vmatpush1.msra.mxu0 0.0
        %845 = vmatprep.subr.mxu0 0.0
        %846 = vmatpush1.msra.mxu0 0.0
        %847 = vmatprep.subr.mxu0 0.0
        %848 = vmatpush1.msra.mxu0 0.0
        %849 = vmatprep.subr.mxu0 0.0
        %850 = vmatpush1.msra.mxu0 0.0
        %851 = vmatprep.subr.mxu0 0.0
        %852 = vmatpush1.msra.mxu0 0.0
        %853 = vmatprep.subr.mxu0 0.0
        %854 = vmatpush1.msra.mxu0 0.0
        %855 = vmatprep.subr.mxu0 0.0
        %856 = vmatpush1.msra.mxu0 0.0
        %857 = vmatprep.subr.mxu0 0.0
        %858 = vmatpush1.msra.mxu0 0.0
        %859 = vmatprep.subr.mxu0 0.0
        %860 = vmatpush1.msra.mxu0 0.0
        %861 = vmatprep.subr.mxu0 0.0
        %862 = vmatpush1.msra.mxu0 0.0
        %863 = vmatprep.mubr.f32.mxu0 0.0
        %864 = vmatmul.mubr.f32.gmra.mrb[0].mxu0 %v797
        %v865 = vpop.f32.mrb[0].mxu0
        %v866 = vadd.f32 0.0, %v865
        %v867 = vpop.f32.mrb[0].mxu0
        %868 = vdwg.mxu0
        %v869 = vmul.f32 %v866, 0.015625
        %v871 = vsel %vm531, %v869, 0
        %873 = vmatprep.subr.mxu0 0.0
        %874 = vmatpush1.msra.mxu0 %v377
        %875 = vmatprep.subr.mxu0 0.0
        %876 = vmatpush1.msra.mxu0 %v378
        %877 = vmatprep.subr.mxu0 0.0
        %878 = vmatpush1.msra.mxu0 %v379
        %879 = vmatprep.subr.mxu0 0.0
        %880 = vmatpush1.msra.mxu0 %v380
        %881 = vmatprep.subr.mxu0 0.0
        %882 = vmatpush1.msra.mxu0 0.0
        %883 = vmatprep.subr.mxu0 0.0
        %884 = vmatpush1.msra.mxu0 0.0
        %885 = vmatprep.subr.mxu0 0.0
        %886 = vmatpush1.msra.mxu0 0.0
        %887 = vmatprep.subr.mxu0 0.0
        %888 = vmatpush1.msra.mxu0 0.0
        %889 = vmatprep.subr.mxu0 0.0
        %890 = vmatpush1.msra.mxu0 0.0
        %891 = vmatprep.subr.mxu0 0.0
        %892 = vmatpush1.msra.mxu0 0.0
        %893 = vmatprep.subr.mxu0 0.0
        %894 = vmatpush1.msra.mxu0 0.0
        %895 = vmatprep.subr.mxu0 0.0
        %896 = vmatpush1.msra.mxu0 0.0
        %897 = vmatprep.subr.mxu0 0.0
        %898 = vmatpush1.msra.mxu0 0.0
        %899 = vmatprep.subr.mxu0 0.0
        %900 = vmatpush1.msra.mxu0 0.0
        %901 = vmatprep.subr.mxu0 0.0
        %902 = vmatpush1.msra.mxu0 0.0
        %903 = vmatprep.subr.mxu0 0.0
        %904 = vmatpush1.msra.mxu0 0.0
        %905 = vmatprep.subr.mxu0 0.0
        %906 = vmatpush1.msra.mxu0 0.0
        %907 = vmatprep.subr.mxu0 0.0
        %908 = vmatpush1.msra.mxu0 0.0
        %909 = vmatprep.subr.mxu0 0.0
        %910 = vmatpush1.msra.mxu0 0.0
        %911 = vmatprep.subr.mxu0 0.0
        %912 = vmatpush1.msra.mxu0 0.0
        %913 = vmatprep.subr.mxu0 0.0
        %914 = vmatpush1.msra.mxu0 0.0
        %915 = vmatprep.subr.mxu0 0.0
        %916 = vmatpush1.msra.mxu0 0.0
        %917 = vmatprep.subr.mxu0 0.0
        %918 = vmatpush1.msra.mxu0 0.0
        %919 = vmatprep.subr.mxu0 0.0
        %920 = vmatpush1.msra.mxu0 0.0
        %921 = vmatprep.subr.mxu0 0.0
        %922 = vmatpush1.msra.mxu0 0.0
        %923 = vmatprep.subr.mxu0 0.0
        %924 = vmatpush1.msra.mxu0 0.0
        %925 = vmatprep.subr.mxu0 0.0
        %926 = vmatpush1.msra.mxu0 0.0
        %927 = vmatprep.subr.mxu0 0.0
        %928 = vmatpush1.msra.mxu0 0.0
        %929 = vmatprep.subr.mxu0 0.0
        %930 = vmatpush1.msra.mxu0 0.0
        %931 = vmatprep.subr.mxu0 0.0
        %932 = vmatpush1.msra.mxu0 0.0
        %933 = vmatprep.subr.mxu0 0.0
        %934 = vmatpush1.msra.mxu0 0.0
        %935 = vmatprep.subr.mxu0 0.0
        %936 = vmatpush1.msra.mxu0 0.0
        %937 = vmatprep.mubr.f32.mxu0 0.0
        %938 = vmatmul.mubr.f32.gmra.mrb[0].mxu0 %v871
        %v939 = vpop.f32.mrb[0].mxu0
        %v940 = vadd.f32 1e-06, %v939
        %v941 = vpop.f32.mrb[0].mxu0
        %942 = vdwg.mxu0
        %v943 = vrsqrt.pop %v940
        %v945 = vcombine.high %v943, %v943
        %v947 = vunpack.c.l.s4 1966171168
        %v948 = vunpack.c.0.s8 %v947
        %v949 = vlaneseq
        %v950 = vshrl.u32 %v949, 7
        %v951 = vsub.s32 %v948, %v950
        %v952 = vrot.slane %v943, %v951
        %v954 = vunpack.c.l.s4 1966171168
        %v955 = vunpack.c.0.s8 %v954
        %v956 = vlaneseq
        %v957 = vshrl.u32 %v956, 7
        %v958 = vsub.s32 %v955, %v957
        %v959 = vrot.slane %v945, %v958
        %v960 = vcombine.high %v952, %v952
        %v961 = vcombine.high %v959, %v959
        %v963 = vunpack.c.l.s4 1966171168
        %v964 = vunpack.c.0.s8 %v963
        %v965 = vlaneseq
        %v966 = vshrl.u32 %v965, 7
        %v967 = vsub.s32 %v964, %v966
        %v968 = vrot.slane %v952, %v967
        %v970 = vunpack.c.l.s4 1966171168
        %v971 = vunpack.c.0.s8 %v970
        %v972 = vlaneseq
        %v973 = vshrl.u32 %v972, 7
        %v974 = vsub.s32 %v971, %v973
        %v975 = vrot.slane %v959, %v974
        %v977 = vunpack.c.l.s4 1966171168
        %v978 = vunpack.c.0.s8 %v977
        %v979 = vlaneseq
        %v980 = vshrl.u32 %v979, 7
        %v981 = vsub.s32 %v978, %v980
        %v982 = vrot.slane %v960, %v981
        %v984 = vunpack.c.l.s4 1966171168
        %v985 = vunpack.c.0.s8 %v984
        %v986 = vlaneseq
        %v987 = vshrl.u32 %v986, 7
        %v988 = vsub.s32 %v985, %v987
        %v989 = vrot.slane %v961, %v988
        %v990 = vcombine.high %v968, %v968
        %v991 = vcombine.high %v975, %v975
        %v992 = vcombine.high %v982, %v982
        %v993 = vcombine.high %v989, %v989
        %v994 = vlaneseq
        %v995 = vshrl.u32 %v994, 7
        %v996 = vsub.s32 0, %v995
        %v997 = vrot.slane %v968, %v996
        %v998 = vlaneseq
        %v999 = vshrl.u32 %v998, 7
        %v1000 = vsub.s32 0, %v999
        %v1001 = vrot.slane %v982, %v1000
        %v1002 = vlaneseq
        %v1003 = vshrl.u32 %v1002, 7
        %v1004 = vsub.s32 0, %v1003
        %v1005 = vrot.slane %v990, %v1004
        %v1006 = vlaneseq
        %v1007 = vshrl.u32 %v1006, 7
        %v1008 = vsub.s32 0, %v1007
        %v1009 = vrot.slane %v992, %v1008
        %v1010 = vlaneseq
        %v1011 = vshrl.u32 %v1010, 7
        %v1012 = vsub.s32 0, %v1011
        %v1013 = vrot.slane %v975, %v1012
        %v1014 = vlaneseq
        %v1015 = vshrl.u32 %v1014, 7
        %v1016 = vsub.s32 0, %v1015
        %v1017 = vrot.slane %v989, %v1016
        %v1018 = vlaneseq
        %v1019 = vshrl.u32 %v1018, 7
        %v1020 = vsub.s32 0, %v1019
        %v1021 = vrot.slane %v991, %v1020
        %v1022 = vlaneseq
        %v1023 = vshrl.u32 %v1022, 7
        %v1024 = vsub.s32 0, %v1023
        %v1025 = vrot.slane %v993, %v1024
        %v1034 = vmul.f32 %v695, %v997
        %v1035 = vmul.f32 %v696, %v997
        %v1036 = vmul.f32 %v697, %v1001
        %v1037 = vmul.f32 %v698, %v1001
        %v1038 = vmul.f32 %v699, %v1005
        %v1039 = vmul.f32 %v700, %v1005
        %v1040 = vmul.f32 %v701, %v1009
        %v1041 = vmul.f32 %v702, %v1009
        %v1042 = vmul.f32 %v703, %v1013
        %v1043 = vmul.f32 %v704, %v1013
        %v1044 = vmul.f32 %v705, %v1017
        %v1045 = vmul.f32 %v706, %v1017
        %v1046 = vmul.f32 %v707, %v1021
        %v1047 = vmul.f32 %v708, %v1021
        %v1048 = vmul.f32 %v709, %v1025
        %v1049 = vmul.f32 %v710, %v1025
        %v1050 = vld [vmem:[#allocation8] sm:$0xf]
        %v1051 = vpack.c.bf16 %v1035, %v1034
        %v1052 = vpack.c.bf16 %v1037, %v1036
        %v1053 = vpack.c.bf16 %v1039, %v1038
        %v1054 = vpack.c.bf16 %v1041, %v1040
        %v1055 = vpack.c.bf16 %v1043, %v1042
        %v1056 = vpack.c.bf16 %v1045, %v1044
        %v1057 = vpack.c.bf16 %v1047, %v1046
        %v1058 = vpack.c.bf16 %v1049, %v1048
        %v1059 = vld [vmem:[#allocation5] sm:$0xff]
        %v1060 = vld [vmem:[#allocation5 + $0x8] sm:$0xf]
        %v1061 = vld [vmem:[#allocation5 + $0xc] sm:$0xff]
        %v1062 = vld [vmem:[#allocation5 + $0x14] sm:$0xf]
        %v1063 = vld [vmem:[#allocation5 + $0x18] sm:$0xff]
        %v1064 = vld [vmem:[#allocation5 + $0x20] sm:$0xf]
        %v1065 = vld [vmem:[#allocation5 + $0x24] sm:$0xff]
        %v1066 = vld [vmem:[#allocation5 + $0x2c] sm:$0xf]
        %v1067 = vld [vmem:[#allocation5 + $0x30] sm:$0xff]
        %v1068 = vld [vmem:[#allocation5 + $0x38] sm:$0xf]
        %v1069 = vld [vmem:[#allocation5 + $0x3c] sm:$0xff]
        %v1070 = vld [vmem:[#allocation5 + $0x44] sm:$0xf]
        %v1071 = vld [vmem:[#allocation5 + $0x48] sm:$0xff]
        %v1072 = vld [vmem:[#allocation5 + $0x50] sm:$0xf]
        %v1073 = vld [vmem:[#allocation5 + $0x54] sm:$0xff]
        %v1074 = vld [vmem:[#allocation5 + $0x5c] sm:$0xf]
        %v1075 = vld [vmem:[#allocation5 + $0x60] sm:$0xff]
        %v1076 = vld [vmem:[#allocation5 + $0x68] sm:$0xf]
        %v1077 = vld [vmem:[#allocation5 + $0x6c] sm:$0xff]
        %v1078 = vld [vmem:[#allocation5 + $0x74] sm:$0xf]
        %v1079 = vld [vmem:[#allocation5 + $0x78] sm:$0xff]
        %v1080 = vld [vmem:[#allocation5 + $0x80] sm:$0xf]
        %v1081 = vld [vmem:[#allocation5 + $0x84] sm:$0xff]
        %v1082 = vld [vmem:[#allocation5 + $0x8c] sm:$0xf]
        %v1083 = vld [vmem:[#allocation5 + $0x90] sm:$0xff]
        %v1084 = vld [vmem:[#allocation5 + $0x98] sm:$0xf]
        %v1085 = vld [vmem:[#allocation5 + $0x9c] sm:$0xff]
        %v1086 = vld [vmem:[#allocation5 + $0xa4] sm:$0xf]
        %v1087 = vld [vmem:[#allocation5 + $0xa8] sm:$0xff]
        %v1088 = vld [vmem:[#allocation5 + $0xb0] sm:$0xf]
        %v1089 = vld [vmem:[#allocation5 + $0xb4] sm:$0xff]
        %v1090 = vld [vmem:[#allocation5 + $0xbc] sm:$0xf]
        %v1123 = vunpack.c.l.b16 %v1059
        %v1124 = vunpack.c.h.b16 %v1059
        %v1125 = vunpack.c.l.b16 %v1060
        %v1126 = vunpack.c.l.b16 %v1061
        %v1127 = vunpack.c.h.b16 %v1061
        %v1128 = vunpack.c.l.b16 %v1062
        %v1129 = vunpack.c.l.b16 %v1063
        %v1130 = vunpack.c.h.b16 %v1063
        %v1131 = vunpack.c.l.b16 %v1064
        %v1132 = vunpack.c.l.b16 %v1065
        %v1133 = vunpack.c.h.b16 %v1065
        %v1134 = vunpack.c.l.b16 %v1066
        %v1135 = vunpack.c.l.b16 %v1067
        %v1136 = vunpack.c.h.b16 %v1067
        %v1137 = vunpack.c.l.b16 %v1068
        %v1138 = vunpack.c.l.b16 %v1069
        %v1139 = vunpack.c.h.b16 %v1069
        %v1140 = vunpack.c.l.b16 %v1070
        %v1141 = vunpack.c.l.b16 %v1071
        %v1142 = vunpack.c.h.b16 %v1071
        %v1143 = vunpack.c.l.b16 %v1072
        %v1144 = vunpack.c.l.b16 %v1073
        %v1145 = vunpack.c.h.b16 %v1073
        %v1146 = vunpack.c.l.b16 %v1074
        %v1147 = vunpack.c.l.b16 %v1075
        %v1148 = vunpack.c.h.b16 %v1075
        %v1149 = vunpack.c.l.b16 %v1076
        %v1150 = vunpack.c.l.b16 %v1077
        %v1151 = vunpack.c.h.b16 %v1077
        %v1152 = vunpack.c.l.b16 %v1078
        %v1153 = vunpack.c.l.b16 %v1079
        %v1154 = vunpack.c.h.b16 %v1079
        %v1155 = vunpack.c.l.b16 %v1080
        %v1156 = vunpack.c.l.b16 %v1081
        %v1157 = vunpack.c.h.b16 %v1081
        %v1158 = vunpack.c.l.b16 %v1082
        %v1159 = vunpack.c.l.b16 %v1083
        %v1160 = vunpack.c.h.b16 %v1083
        %v1161 = vunpack.c.l.b16 %v1084
        %v1162 = vunpack.c.l.b16 %v1085
        %v1163 = vunpack.c.h.b16 %v1085
        %v1164 = vunpack.c.l.b16 %v1086
        %v1165 = vunpack.c.l.b16 %v1087
        %v1166 = vunpack.c.h.b16 %v1087
        %v1167 = vunpack.c.l.b16 %v1088
        %v1168 = vunpack.c.l.b16 %v1089
        %v1169 = vunpack.c.h.b16 %v1089
        %v1170 = vunpack.c.l.b16 %v1090
        %v1171 = vpack.c.b16 %v1126, %v1123
        %v1172 = vpack.c.b16 %v1127, %v1124
        %v1173 = vpack.c.b16 %v1128, %v1125
        %v1174 = vpack.c.b16 %v1132, %v1129
        %v1175 = vpack.c.b16 %v1133, %v1130
        %v1176 = vpack.c.b16 %v1134, %v1131
        %v1177 = vpack.c.b16 %v1138, %v1135
        %v1178 = vpack.c.b16 %v1139, %v1136
        %v1179 = vpack.c.b16 %v1140, %v1137
        %v1180 = vpack.c.b16 %v1144, %v1141
        %v1181 = vpack.c.b16 %v1145, %v1142
        %v1182 = vpack.c.b16 %v1146, %v1143
        %v1183 = vpack.c.b16 %v1150, %v1147
        %v1184 = vpack.c.b16 %v1151, %v1148
        %v1185 = vpack.c.b16 %v1152, %v1149
        %v1186 = vpack.c.b16 %v1156, %v1153
        %v1187 = vpack.c.b16 %v1157, %v1154
        %v1188 = vpack.c.b16 %v1158, %v1155
        %v1189 = vpack.c.b16 %v1162, %v1159
        %v1190 = vpack.c.b16 %v1163, %v1160
        %v1191 = vpack.c.b16 %v1164, %v1161
        %v1192 = vpack.c.b16 %v1168, %v1165
        %v1193 = vpack.c.b16 %v1169, %v1166
        %v1194 = vpack.c.b16 %v1170, %v1167
        %1219 = vmatprep.subr.bf16.mxu0 %v1172
        %1220 = vmatpush1.bf16.msra.mxu0 %v1171
        %1221 = vmatprep.subr.bf16.mxu0 %v1175
        %1222 = vmatpush1.bf16.msra.mxu0 %v1174
        %1223 = vmatprep.subr.bf16.mxu0 %v1178
        %1224 = vmatpush1.bf16.msra.mxu0 %v1177
        %1225 = vmatprep.subr.bf16.mxu0 %v1181
        %1226 = vmatpush1.bf16.msra.mxu0 %v1180
        %1227 = vmatprep.subr.bf16.mxu0 %v1184
        %1228 = vmatpush1.bf16.msra.mxu0 %v1183
        %1229 = vmatprep.subr.bf16.mxu0 %v1187
        %1230 = vmatpush1.bf16.msra.mxu0 %v1186
        %1231 = vmatprep.subr.bf16.mxu0 %v1190
        %1232 = vmatpush1.bf16.msra.mxu0 %v1189
        %1233 = vmatprep.subr.bf16.mxu0 %v1193
        %1234 = vmatpush1.bf16.msra.mxu0 %v1192
        %1235 = vmatprep.subr.bf16.mxu0 0
        %1236 = vmatpush1.bf16.msra.mxu0 0
        %1237 = vmatprep.subr.bf16.mxu0 0
        %1238 = vmatpush1.bf16.msra.mxu0 0
        %1239 = vmatprep.subr.bf16.mxu0 0
        %1240 = vmatpush1.bf16.msra.mxu0 0
        %1241 = vmatprep.subr.bf16.mxu0 0
        %1242 = vmatpush1.bf16.msra.mxu0 0
        %1243 = vmatprep.subr.bf16.mxu0 0
        %1244 = vmatpush1.bf16.msra.mxu0 0
        %1245 = vmatprep.subr.bf16.mxu0 0
        %1246 = vmatpush1.bf16.msra.mxu0 0
        %1247 = vmatprep.subr.bf16.mxu0 0
        %1248 = vmatpush1.bf16.msra.mxu0 0
        %1249 = vmatprep.subr.bf16.mxu0 0
        %1250 = vmatpush1.bf16.msra.mxu0 0
        %1251 = vmatprep.mubr.bf16.mxu0 0
        %1252 = vmatmul.mubr.bf16.gmra.mrb[0].mxu0 %v1051
        %v1253 = vpop.f32.mrb[0].mxu0
        %v1254 = vadd.f32 0.0, %v1253
        %v1255 = vpop.f32.mrb[0].mxu0
        %v1256 = vadd.f32 0.0, %v1255
        %v1257 = vpop.f32.mrb[0].mxu0
        %v1258 = vadd.f32 0.0, %v1257
        %v1259 = vpop.f32.mrb[0].mxu0
        %v1260 = vadd.f32 0.0, %v1259
        %1261 = vmatprep.mubr.bf16.mxu0 0
        %1262 = vmatmul.mubr.bf16.gmra.mrb[0].mxu0 %v1052
        %v1263 = vpop.f32.mrb[0].mxu0
        %v1264 = vadd.f32 0.0, %v1263
        %v1265 = vpop.f32.mrb[0].mxu0
        %v1266 = vadd.f32 0.0, %v1265
        %v1267 = vpop.f32.mrb[0].mxu0
        %v1268 = vadd.f32 0.0, %v1267
        %v1269 = vpop.f32.mrb[0].mxu0
        %v1270 = vadd.f32 0.0, %v1269
        %1271 = vmatprep.mubr.bf16.mxu0 0
        %1272 = vmatmul.mubr.bf16.gmra.mrb[0].mxu0 %v1053
        %v1273 = vpop.f32.mrb[0].mxu0
        %v1274 = vadd.f32 0.0, %v1273
        %v1275 = vpop.f32.mrb[0].mxu0
        %v1276 = vadd.f32 0.0, %v1275
        %v1277 = vpop.f32.mrb[0].mxu0
        %v1278 = vadd.f32 0.0, %v1277
        %v1279 = vpop.f32.mrb[0].mxu0
        %v1280 = vadd.f32 0.0, %v1279
        %1281 = vmatprep.mubr.bf16.mxu0 0
        %1282 = vmatmul.mubr.bf16.gmra.mrb[0].mxu0 %v1054
        %v1283 = vpop.f32.mrb[0].mxu0
        %v1284 = vadd.f32 0.0, %v1283
        %v1285 = vpop.f32.mrb[0].mxu0
        %v1286 = vadd.f32 0.0, %v1285
        %v1287 = vpop.f32.mrb[0].mxu0
        %v1288 = vadd.f32 0.0, %v1287
        %v1289 = vpop.f32.mrb[0].mxu0
        %v1290 = vadd.f32 0.0, %v1289
        %1291 = vmatprep.mubr.bf16.mxu0 0
        %1292 = vmatmul.mubr.bf16.gmra.mrb[0].mxu0 %v1055
        %v1293 = vpop.f32.mrb[0].mxu0
        %v1294 = vadd.f32 0.0, %v1293
        %v1295 = vpop.f32.mrb[0].mxu0
        %v1296 = vadd.f32 0.0, %v1295
        %v1297 = vpop.f32.mrb[0].mxu0
        %v1298 = vadd.f32 0.0, %v1297
        %v1299 = vpop.f32.mrb[0].mxu0
        %v1300 = vadd.f32 0.0, %v1299
        %1301 = vmatprep.mubr.bf16.mxu0 0
        %1302 = vmatmul.mubr.bf16.gmra.mrb[0].mxu0 %v1056
        %v1303 = vpop.f32.mrb[0].mxu0
        %v1304 = vadd.f32 0.0, %v1303
        %v1305 = vpop.f32.mrb[0].mxu0
        %v1306 = vadd.f32 0.0, %v1305
        %v1307 = vpop.f32.mrb[0].mxu0
        %v1308 = vadd.f32 0.0, %v1307
        %v1309 = vpop.f32.mrb[0].mxu0
        %v1310 = vadd.f32 0.0, %v1309
        %1311 = vmatprep.mubr.bf16.mxu0 0
        %1312 = vmatmul.mubr.bf16.gmra.mrb[0].mxu0 %v1057
        %v1313 = vpop.f32.mrb[0].mxu0
        %v1314 = vadd.f32 0.0, %v1313
        %v1315 = vpop.f32.mrb[0].mxu0
        %v1316 = vadd.f32 0.0, %v1315
        %v1317 = vpop.f32.mrb[0].mxu0
        %v1318 = vadd.f32 0.0, %v1317
        %v1319 = vpop.f32.mrb[0].mxu0
        %v1320 = vadd.f32 0.0, %v1319
        %1321 = vmatprep.mubr.bf16.mxu0 0
        %1322 = vmatmul.mubr.bf16.gmra.mrb[0].mxu0 %v1058
        %v1323 = vpop.f32.mrb[0].mxu0
        %v1324 = vadd.f32 0.0, %v1323
        %v1325 = vpop.f32.mrb[0].mxu0
        %v1326 = vadd.f32 0.0, %v1325
        %v1327 = vpop.f32.mrb[0].mxu0
        %v1328 = vadd.f32 0.0, %v1327
        %v1329 = vpop.f32.mrb[0].mxu0
        %v1330 = vadd.f32 0.0, %v1329
        %1331 = vdwg.mxu0
        %1332 = vmatprep.subr.bf16.mxu0 0
        %1333 = vmatpush1.bf16.msra.mxu0 %v1173
        %1334 = vmatprep.subr.bf16.mxu0 0
        %1335 = vmatpush1.bf16.msra.mxu0 %v1176
        %1336 = vmatprep.subr.bf16.mxu0 0
        %1337 = vmatpush1.bf16.msra.mxu0 %v1179
        %1338 = vmatprep.subr.bf16.mxu0 0
        %1339 = vmatpush1.bf16.msra.mxu0 %v1182
        %1340 = vmatprep.subr.bf16.mxu0 0
        %1341 = vmatpush1.bf16.msra.mxu0 %v1185
        %1342 = vmatprep.subr.bf16.mxu0 0
        %1343 = vmatpush1.bf16.msra.mxu0 %v1188
        %1344 = vmatprep.subr.bf16.mxu0 0
        %1345 = vmatpush1.bf16.msra.mxu0 %v1191
        %1346 = vmatprep.subr.bf16.mxu0 0
        %1347 = vmatpush1.bf16.msra.mxu0 %v1194
        %1348 = vmatprep.subr.bf16.mxu0 0
        %1349 = vmatpush1.bf16.msra.mxu0 0
        %1350 = vmatprep.subr.bf16.mxu0 0
        %1351 = vmatpush1.bf16.msra.mxu0 0
        %1352 = vmatprep.subr.bf16.mxu0 0
        %1353 = vmatpush1.bf16.msra.mxu0 0
        %1354 = vmatprep.subr.bf16.mxu0 0
        %1355 = vmatpush1.bf16.msra.mxu0 0
        %1356 = vmatprep.subr.bf16.mxu0 0
        %1357 = vmatpush1.bf16.msra.mxu0 0
        %1358 = vmatprep.subr.bf16.mxu0 0
        %1359 = vmatpush1.bf16.msra.mxu0 0
        %1360 = vmatprep.subr.bf16.mxu0 0
        %1361 = vmatpush1.bf16.msra.mxu0 0
        %1362 = vmatprep.subr.bf16.mxu0 0
        %1363 = vmatpush1.bf16.msra.mxu0 0
        %1364 = vmatprep.mubr.bf16.mxu0 0
        %1365 = vmatmul.mubr.bf16.gmra.mrb[0].mxu0 %v1051
        %v1366 = vpop.f32.mrb[0].mxu0
        %v1367 = vadd.f32 0.0, %v1366
        %v1368 = vpop.f32.mrb[0].mxu0
        %v1369 = vpop.f32.mrb[0].mxu0
        %v1370 = vadd.f32 0.0, %v1369
        %v1371 = vpop.f32.mrb[0].mxu0
        %1372 = vmatprep.mubr.bf16.mxu0 0
        %1373 = vmatmul.mubr.bf16.gmra.mrb[0].mxu0 %v1052
        %v1374 = vpop.f32.mrb[0].mxu0
        %v1375 = vadd.f32 0.0, %v1374
        %v1376 = vpop.f32.mrb[0].mxu0
        %v1377 = vpop.f32.mrb[0].mxu0
        %v1378 = vadd.f32 0.0, %v1377
        %v1379 = vpop.f32.mrb[0].mxu0
        %1380 = vmatprep.mubr.bf16.mxu0 0
        %1381 = vmatmul.mubr.bf16.gmra.mrb[0].mxu0 %v1053
        %v1382 = vpop.f32.mrb[0].mxu0
        %v1383 = vadd.f32 0.0, %v1382
        %v1384 = vpop.f32.mrb[0].mxu0
        %v1385 = vpop.f32.mrb[0].mxu0
        %v1386 = vadd.f32 0.0, %v1385
        %v1387 = vpop.f32.mrb[0].mxu0
        %1388 = vmatprep.mubr.bf16.mxu0 0
        %1389 = vmatmul.mubr.bf16.gmra.mrb[0].mxu0 %v1054
        %v1390 = vpop.f32.mrb[0].mxu0
        %v1391 = vadd.f32 0.0, %v1390
        %v1392 = vpop.f32.mrb[0].mxu0
        %v1393 = vpop.f32.mrb[0].mxu0
        %v1394 = vadd.f32 0.0, %v1393
        %v1395 = vpop.f32.mrb[0].mxu0
        %1396 = vmatprep.mubr.bf16.mxu0 0
        %1397 = vmatmul.mubr.bf16.gmra.mrb[0].mxu0 %v1055
        %v1398 = vpop.f32.mrb[0].mxu0
        %v1399 = vadd.f32 0.0, %v1398
        %v1400 = vpop.f32.mrb[0].mxu0
        %v1401 = vpop.f32.mrb[0].mxu0
        %v1402 = vadd.f32 0.0, %v1401
        %v1403 = vpop.f32.mrb[0].mxu0
        %1404 = vmatprep.mubr.bf16.mxu0 0
        %1405 = vmatmul.mubr.bf16.gmra.mrb[0].mxu0 %v1056
        %v1406 = vpop.f32.mrb[0].mxu0
        %v1407 = vadd.f32 0.0, %v1406
        %v1408 = vpop.f32.mrb[0].mxu0
        %v1409 = vpop.f32.mrb[0].mxu0
        %v1410 = vadd.f32 0.0, %v1409
        %v1411 = vpop.f32.mrb[0].mxu0
        %1412 = vmatprep.mubr.bf16.mxu0 0
        %1413 = vmatmul.mubr.bf16.gmra.mrb[0].mxu0 %v1057
        %v1414 = vpop.f32.mrb[0].mxu0
        %v1415 = vadd.f32 0.0, %v1414
        %v1416 = vpop.f32.mrb[0].mxu0
        %v1417 = vpop.f32.mrb[0].mxu0
        %v1418 = vadd.f32 0.0, %v1417
        %v1419 = vpop.f32.mrb[0].mxu0
        %1420 = vmatprep.mubr.bf16.mxu0 0
        %1421 = vmatmul.mubr.bf16.gmra.mrb[0].mxu0 %v1058
        %v1422 = vpop.f32.mrb[0].mxu0
        %v1423 = vadd.f32 0.0, %v1422
        %v1424 = vpop.f32.mrb[0].mxu0
        %v1425 = vpop.f32.mrb[0].mxu0
        %v1426 = vadd.f32 0.0, %v1425
        %v1427 = vpop.f32.mrb[0].mxu0
        %1428 = vdwg.mxu0
        %v1429 = vlaneseq
        %v1430 = vshrl.u32 %v1429, 7
        %v1431 = vsub.s32 0, %v1430
        %v1432 = vrot.slane %v1050, %v1431
        %v1433 = vadd.f32 %v1254, %v1432
        %v1434 = vadd.f32 %v1258, %v1432
        %v1435 = vadd.f32 %v1264, %v1432
        %v1436 = vadd.f32 %v1268, %v1432
        %v1437 = vadd.f32 %v1274, %v1432
        %v1438 = vadd.f32 %v1278, %v1432
        %v1439 = vadd.f32 %v1284, %v1432
        %v1440 = vadd.f32 %v1288, %v1432
        %v1441 = vadd.f32 %v1294, %v1432
        %v1442 = vadd.f32 %v1298, %v1432
        %v1443 = vadd.f32 %v1304, %v1432
        %v1444 = vadd.f32 %v1308, %v1432
        %v1445 = vadd.f32 %v1314, %v1432
        %v1446 = vadd.f32 %v1318, %v1432
        %v1447 = vadd.f32 %v1324, %v1432
        %v1448 = vadd.f32 %v1328, %v1432
        %v1449 = vlaneseq
        %v1450 = vshrl.u32 %v1449, 7
        %v1451 = vsub.s32 1, %v1450
        %v1452 = vrot.slane %v1050, %v1451
        %v1453 = vadd.f32 %v1256, %v1452
        %v1454 = vadd.f32 %v1260, %v1452
        %v1455 = vadd.f32 %v1266, %v1452
        %v1456 = vadd.f32 %v1270, %v1452
        %v1457 = vadd.f32 %v1276, %v1452
        %v1458 = vadd.f32 %v1280, %v1452
        %v1459 = vadd.f32 %v1286, %v1452
        %v1460 = vadd.f32 %v1290, %v1452
        %v1461 = vadd.f32 %v1296, %v1452
        %v1462 = vadd.f32 %v1300, %v1452
        %v1463 = vadd.f32 %v1306, %v1452
        %v1464 = vadd.f32 %v1310, %v1452
        %v1465 = vadd.f32 %v1316, %v1452
        %v1466 = vadd.f32 %v1320, %v1452
        %v1467 = vadd.f32 %v1326, %v1452
        %v1468 = vadd.f32 %v1330, %v1452
        %v1469 = vlaneseq
        %v1470 = vshrl.u32 %v1469, 7
        %v1471 = vsub.s32 2, %v1470
        %v1472 = vrot.slane %v1050, %v1471
        %v1473 = vadd.f32 %v1367, %v1472
        %v1474 = vadd.f32 %v1370, %v1472
        %v1475 = vadd.f32 %v1375, %v1472
        %v1476 = vadd.f32 %v1378, %v1472
        %v1477 = vadd.f32 %v1383, %v1472
        %v1478 = vadd.f32 %v1386, %v1472
        %v1479 = vadd.f32 %v1391, %v1472
        %v1480 = vadd.f32 %v1394, %v1472
        %v1481 = vadd.f32 %v1399, %v1472
        %v1482 = vadd.f32 %v1402, %v1472
        %v1483 = vadd.f32 %v1407, %v1472
        %v1484 = vadd.f32 %v1410, %v1472
        %v1485 = vadd.f32 %v1415, %v1472
        %v1486 = vadd.f32 %v1418, %v1472
        %v1487 = vadd.f32 %v1423, %v1472
        %v1488 = vadd.f32 %v1426, %v1472
        %v1489 = vpack.c.bf16 %v1434, %v1433
        %v1490 = vpack.c.bf16 %v1436, %v1435
        %v1491 = vpack.c.bf16 %v1438, %v1437
        %v1492 = vpack.c.bf16 %v1440, %v1439
        %v1493 = vpack.c.bf16 %v1442, %v1441
        %v1494 = vpack.c.bf16 %v1444, %v1443
        %v1495 = vpack.c.bf16 %v1446, %v1445
        %v1496 = vpack.c.bf16 %v1448, %v1447
        %v1497 = vpack.c.bf16 %v1454, %v1453
        %v1498 = vpack.c.bf16 %v1456, %v1455
        %v1499 = vpack.c.bf16 %v1458, %v1457
        %v1500 = vpack.c.bf16 %v1460, %v1459
        %v1501 = vpack.c.bf16 %v1462, %v1461
        %v1502 = vpack.c.bf16 %v1464, %v1463
        %v1503 = vpack.c.bf16 %v1466, %v1465
        %v1504 = vpack.c.bf16 %v1468, %v1467
        %1505 = vmatprep.subr.bf16.mxu0 0
        %1506 = vmatpush1.bf16.xpose.msra.mxu0 %v1497
        %1507 = vmatprep.subr.bf16.mxu0 0
        %1508 = vmatpush1.bf16.xpose.msra.mxu0 0
        %1509 = vmatprep.subr.bf16.mxu0 0
        %1510 = vmatpush1.bf16.xpose.msra.mxu0 0
        %1511 = vmatprep.subr.bf16.mxu0 0
        %1512 = vmatpush1.bf16.xpose.msra.mxu0 0
        %1513 = vmatprep.subr.bf16.mxu0 0
        %1514 = vmatpush1.bf16.xpose.msra.mxu0 0
        %1515 = vmatprep.subr.bf16.mxu0 0
        %1516 = vmatpush1.bf16.xpose.msra.mxu0 0
        %1517 = vmatprep.subr.bf16.mxu0 0
        %1518 = vmatpush1.bf16.xpose.msra.mxu0 0
        %1519 = vmatprep.subr.bf16.mxu0 0
        %1520 = vmatpush1.bf16.xpose.msra.mxu0 0
        %1521 = vmatprep.subr.bf16.mxu0 0
        %1522 = vmatpush1.bf16.xpose.msra.mxu0 0
        %1523 = vmatprep.subr.bf16.mxu0 0
        %1524 = vmatpush1.bf16.xpose.msra.mxu0 0
        %1525 = vmatprep.subr.bf16.mxu0 0
        %1526 = vmatpush1.bf16.xpose.msra.mxu0 0
        %1527 = vmatprep.subr.bf16.mxu0 0
        %1528 = vmatpush1.bf16.xpose.msra.mxu0 0
        %1529 = vmatprep.subr.bf16.mxu0 0
        %1530 = vmatpush1.bf16.xpose.msra.mxu0 0
        %1531 = vmatprep.subr.bf16.mxu0 0
        %1532 = vmatpush1.bf16.xpose.msra.mxu0 0
        %1533 = vmatprep.subr.bf16.mxu0 0
        %1534 = vmatpush1.bf16.xpose.msra.mxu0 0
        %1535 = vmatprep.subr.bf16.mxu0 0
        %1536 = vmatpush1.bf16.xpose.msra.mxu0 0
        %1537 = vmatprep.mubr.bf16.mxu0 0
        %1538 = vmatmul.mubr.bf16.gmra.mrb[0].mxu0 %v1489
        %v1539 = vpop.f32.mrb[0].mxu0
        %v1540 = vadd.f32 0.0, %v1539
        %v1541 = vpop.f32.mrb[0].mxu0
        %v1542 = vpop.f32.mrb[0].mxu0
        %v1543 = vadd.f32 0.0, %v1542
        %v1544 = vpop.f32.mrb[0].mxu0
        %1545 = vdwg.mxu0
        %1546 = vmatprep.subr.bf16.mxu0 0
        %1547 = vmatpush1.bf16.xpose.msra.mxu0 %v1498
        %1548 = vmatprep.subr.bf16.mxu0 0
        %1549 = vmatpush1.bf16.xpose.msra.mxu0 0
        %1550 = vmatprep.subr.bf16.mxu0 0
        %1551 = vmatpush1.bf16.xpose.msra.mxu0 0
        %1552 = vmatprep.subr.bf16.mxu0 0
        %1553 = vmatpush1.bf16.xpose.msra.mxu0 0
        %1554 = vmatprep.subr.bf16.mxu0 0
        %1555 = vmatpush1.bf16.xpose.msra.mxu0 0
        %1556 = vmatprep.subr.bf16.mxu0 0
        %1557 = vmatpush1.bf16.xpose.msra.mxu0 0
        %1558 = vmatprep.subr.bf16.mxu0 0
        %1559 = vmatpush1.bf16.xpose.msra.mxu0 0
        %1560 = vmatprep.subr.bf16.mxu0 0
        %1561 = vmatpush1.bf16.xpose.msra.mxu0 0
        %1562 = vmatprep.subr.bf16.mxu0 0
        %1563 = vmatpush1.bf16.xpose.msra.mxu0 0
        %1564 = vmatprep.subr.bf16.mxu0 0
        %1565 = vmatpush1.bf16.xpose.msra.mxu0 0
        %1566 = vmatprep.subr.bf16.mxu0 0
        %1567 = vmatpush1.bf16.xpose.msra.mxu0 0
        %1568 = vmatprep.subr.bf16.mxu0 0
        %1569 = vmatpush1.bf16.xpose.msra.mxu0 0
        %1570 = vmatprep.subr.bf16.mxu0 0
        %1571 = vmatpush1.bf16.xpose.msra.mxu0 0
        %1572 = vmatprep.subr.bf16.mxu0 0
        %1573 = vmatpush1.bf16.xpose.msra.mxu0 0
        %1574 = vmatprep.subr.bf16.mxu0 0
        %1575 = vmatpush1.bf16.xpose.msra.mxu0 0
        %1576 = vmatprep.subr.bf16.mxu0 0
        %1577 = vmatpush1.bf16.xpose.msra.mxu0 0
        %1578 = vmatprep.mubr.bf16.mxu0 0
        %1579 = vmatmul.mubr.bf16.gmra.mrb[0].mxu0 %v1490
        %v1580 = vpop.f32.mrb[0].mxu0
        %v1581 = vadd.f32 0.0, %v1580
        %v1582 = vpop.f32.mrb[0].mxu0
        %v1583 = vpop.f32.mrb[0].mxu0
        %v1584 = vadd.f32 0.0, %v1583
        %v1585 = vpop.f32.mrb[0].mxu0
        %1586 = vdwg.mxu0
        %1587 = vmatprep.subr.bf16.mxu0 0
        %1588 = vmatpush1.bf16.xpose.msra.mxu0 %v1499
        %1589 = vmatprep.subr.bf16.mxu0 0
        %1590 = vmatpush1.bf16.xpose.msra.mxu0 0
        %1591 = vmatprep.subr.bf16.mxu0 0
        %1592 = vmatpush1.bf16.xpose.msra.mxu0 0
        %1593 = vmatprep.subr.bf16.mxu0 0
        %1594 = vmatpush1.bf16.xpose.msra.mxu0 0
        %1595 = vmatprep.subr.bf16.mxu0 0
        %1596 = vmatpush1.bf16.xpose.msra.mxu0 0
        %1597 = vmatprep.subr.bf16.mxu0 0
        %1598 = vmatpush1.bf16.xpose.msra.mxu0 0
        %1599 = vmatprep.subr.bf16.mxu0 0
        %1600 = vmatpush1.bf16.xpose.msra.mxu0 0
        %1601 = vmatprep.subr.bf16.mxu0 0
        %1602 = vmatpush1.bf16.xpose.msra.mxu0 0
        %1603 = vmatprep.subr.bf16.mxu0 0
        %1604 = vmatpush1.bf16.xpose.msra.mxu0 0
        %1605 = vmatprep.subr.bf16.mxu0 0
        %1606 = vmatpush1.bf16.xpose.msra.mxu0 0
        %1607 = vmatprep.subr.bf16.mxu0 0
        %1608 = vmatpush1.bf16.xpose.msra.mxu0 0
        %1609 = vmatprep.subr.bf16.mxu0 0
        %1610 = vmatpush1.bf16.xpose.msra.mxu0 0
        %1611 = vmatprep.subr.bf16.mxu0 0
        %1612 = vmatpush1.bf16.xpose.msra.mxu0 0
        %1613 = vmatprep.subr.bf16.mxu0 0
        %1614 = vmatpush1.bf16.xpose.msra.mxu0 0
        %1615 = vmatprep.subr.bf16.mxu0 0
        %1616 = vmatpush1.bf16.xpose.msra.mxu0 0
        %1617 = vmatprep.subr.bf16.mxu0 0
        %1618 = vmatpush1.bf16.xpose.msra.mxu0 0
        %1619 = vmatprep.mubr.bf16.mxu0 0
        %1620 = vmatmul.mubr.bf16.gmra.mrb[0].mxu0 %v1491
        %v1621 = vpop.f32.mrb[0].mxu0
        %v1622 = vadd.f32 0.0, %v1621
        %v1623 = vpop.f32.mrb[0].mxu0
        %v1624 = vpop.f32.mrb[0].mxu0
        %v1625 = vadd.f32 0.0, %v1624
        %v1626 = vpop.f32.mrb[0].mxu0
        %1627 = vdwg.mxu0
        %1628 = vmatprep.subr.bf16.mxu0 0
        %1629 = vmatpush1.bf16.xpose.msra.mxu0 %v1500
        %1630 = vmatprep.subr.bf16.mxu0 0
        %1631 = vmatpush1.bf16.xpose.msra.mxu0 0
        %1632 = vmatprep.subr.bf16.mxu0 0
        %1633 = vmatpush1.bf16.xpose.msra.mxu0 0
        %1634 = vmatprep.subr.bf16.mxu0 0
        %1635 = vmatpush1.bf16.xpose.msra.mxu0 0
        %1636 = vmatprep.subr.bf16.mxu0 0
        %1637 = vmatpush1.bf16.xpose.msra.mxu0 0
        %1638 = vmatprep.subr.bf16.mxu0 0
        %1639 = vmatpush1.bf16.xpose.msra.mxu0 0
        %1640 = vmatprep.subr.bf16.mxu0 0
        %1641 = vmatpush1.bf16.xpose.msra.mxu0 0
        %1642 = vmatprep.subr.bf16.mxu0 0
        %1643 = vmatpush1.bf16.xpose.msra.mxu0 0
        %1644 = vmatprep.subr.bf16.mxu0 0
        %1645 = vmatpush1.bf16.xpose.msra.mxu0 0
        %1646 = vmatprep.subr.bf16.mxu0 0
        %1647 = vmatpush1.bf16.xpose.msra.mxu0 0
        %1648 = vmatprep.subr.bf16.mxu0 0
        %1649 = vmatpush1.bf16.xpose.msra.mxu0 0
        %1650 = vmatprep.subr.bf16.mxu0 0
        %1651 = vmatpush1.bf16.xpose.msra.mxu0 0
        %1652 = vmatprep.subr.bf16.mxu0 0
        %1653 = vmatpush1.bf16.xpose.msra.mxu0 0
        %1654 = vmatprep.subr.bf16.mxu0 0
        %1655 = vmatpush1.bf16.xpose.msra.mxu0 0
        %1656 = vmatprep.subr.bf16.mxu0 0
        %1657 = vmatpush1.bf16.xpose.msra.mxu0 0
        %1658 = vmatprep.subr.bf16.mxu0 0
        %1659 = vmatpush1.bf16.xpose.msra.mxu0 0
        %1660 = vmatprep.mubr.bf16.mxu0 0
        %1661 = vmatmul.mubr.bf16.gmra.mrb[0].mxu0 %v1492
        %v1662 = vpop.f32.mrb[0].mxu0
        %v1663 = vadd.f32 0.0, %v1662
        %v1664 = vpop.f32.mrb[0].mxu0
        %v1665 = vpop.f32.mrb[0].mxu0
        %v1666 = vadd.f32 0.0, %v1665
        %v1667 = vpop.f32.mrb[0].mxu0
        %1668 = vdwg.mxu0
        %1669 = vmatprep.subr.bf16.mxu0 0
        %1670 = vmatpush1.bf16.xpose.msra.mxu0 %v1501
        %1671 = vmatprep.subr.bf16.mxu0 0
        %1672 = vmatpush1.bf16.xpose.msra.mxu0 0
        %1673 = vmatprep.subr.bf16.mxu0 0
        %1674 = vmatpush1.bf16.xpose.msra.mxu0 0
        %1675 = vmatprep.subr.bf16.mxu0 0
        %1676 = vmatpush1.bf16.xpose.msra.mxu0 0
        %1677 = vmatprep.subr.bf16.mxu0 0
        %1678 = vmatpush1.bf16.xpose.msra.mxu0 0
        %1679 = vmatprep.subr.bf16.mxu0 0
        %1680 = vmatpush1.bf16.xpose.msra.mxu0 0
        %1681 = vmatprep.subr.bf16.mxu0 0
        %1682 = vmatpush1.bf16.xpose.msra.mxu0 0
        %1683 = vmatprep.subr.bf16.mxu0 0
        %1684 = vmatpush1.bf16.xpose.msra.mxu0 0
        %1685 = vmatprep.subr.bf16.mxu0 0
        %1686 = vmatpush1.bf16.xpose.msra.mxu0 0
        %1687 = vmatprep.subr.bf16.mxu0 0
        %1688 = vmatpush1.bf16.xpose.msra.mxu0 0
        %1689 = vmatprep.subr.bf16.mxu0 0
        %1690 = vmatpush1.bf16.xpose.msra.mxu0 0
        %1691 = vmatprep.subr.bf16.mxu0 0
        %1692 = vmatpush1.bf16.xpose.msra.mxu0 0
        %1693 = vmatprep.subr.bf16.mxu0 0
        %1694 = vmatpush1.bf16.xpose.msra.mxu0 0
        %1695 = vmatprep.subr.bf16.mxu0 0
        %1696 = vmatpush1.bf16.xpose.msra.mxu0 0
        %1697 = vmatprep.subr.bf16.mxu0 0
        %1698 = vmatpush1.bf16.xpose.msra.mxu0 0
        %1699 = vmatprep.subr.bf16.mxu0 0
        %1700 = vmatpush1.bf16.xpose.msra.mxu0 0
        %1701 = vmatprep.mubr.bf16.mxu0 0
        %1702 = vmatmul.mubr.bf16.gmra.mrb[0].mxu0 %v1493
        %v1703 = vpop.f32.mrb[0].mxu0
        %v1704 = vadd.f32 0.0, %v1703
        %v1705 = vpop.f32.mrb[0].mxu0
        %v1706 = vpop.f32.mrb[0].mxu0
        %v1707 = vadd.f32 0.0, %v1706
        %v1708 = vpop.f32.mrb[0].mxu0
        %1709 = vdwg.mxu0
        %1710 = vmatprep.subr.bf16.mxu0 0
        %1711 = vmatpush1.bf16.xpose.msra.mxu0 %v1502
        %1712 = vmatprep.subr.bf16.mxu0 0
        %1713 = vmatpush1.bf16.xpose.msra.mxu0 0
        %1714 = vmatprep.subr.bf16.mxu0 0
        %1715 = vmatpush1.bf16.xpose.msra.mxu0 0
        %1716 = vmatprep.subr.bf16.mxu0 0
        %1717 = vmatpush1.bf16.xpose.msra.mxu0 0
        %1718 = vmatprep.subr.bf16.mxu0 0
        %1719 = vmatpush1.bf16.xpose.msra.mxu0 0
        %1720 = vmatprep.subr.bf16.mxu0 0
        %1721 = vmatpush1.bf16.xpose.msra.mxu0 0
        %1722 = vmatprep.subr.bf16.mxu0 0
        %1723 = vmatpush1.bf16.xpose.msra.mxu0 0
        %1724 = vmatprep.subr.bf16.mxu0 0
        %1725 = vmatpush1.bf16.xpose.msra.mxu0 0
        %1726 = vmatprep.subr.bf16.mxu0 0
        %1727 = vmatpush1.bf16.xpose.msra.mxu0 0
        %1728 = vmatprep.subr.bf16.mxu0 0
        %1729 = vmatpush1.bf16.xpose.msra.mxu0 0
        %1730 = vmatprep.subr.bf16.mxu0 0
        %1731 = vmatpush1.bf16.xpose.msra.mxu0 0
        %1732 = vmatprep.subr.bf16.mxu0 0
        %1733 = vmatpush1.bf16.xpose.msra.mxu0 0
        %1734 = vmatprep.subr.bf16.mxu0 0
        %1735 = vmatpush1.bf16.xpose.msra.mxu0 0
        %1736 = vmatprep.subr.bf16.mxu0 0
        %1737 = vmatpush1.bf16.xpose.msra.mxu0 0
        %1738 = vmatprep.subr.bf16.mxu0 0
        %1739 = vmatpush1.bf16.xpose.msra.mxu0 0
        %1740 = vmatprep.subr.bf16.mxu0 0
        %1741 = vmatpush1.bf16.xpose.msra.mxu0 0
        %1742 = vmatprep.mubr.bf16.mxu0 0
        %1743 = vmatmul.mubr.bf16.gmra.mrb[0].mxu0 %v1494
        %v1744 = vpop.f32.mrb[0].mxu0
        %v1745 = vadd.f32 0.0, %v1744
        %v1746 = vpop.f32.mrb[0].mxu0
        %v1747 = vpop.f32.mrb[0].mxu0
        %v1748 = vadd.f32 0.0, %v1747
        %v1749 = vpop.f32.mrb[0].mxu0
        %1750 = vdwg.mxu0
        %1751 = vmatprep.subr.bf16.mxu0 0
        %1752 = vmatpush1.bf16.xpose.msra.mxu0 %v1503
        %1753 = vmatprep.subr.bf16.mxu0 0
        %1754 = vmatpush1.bf16.xpose.msra.mxu0 0
        %1755 = vmatprep.subr.bf16.mxu0 0
        %1756 = vmatpush1.bf16.xpose.msra.mxu0 0
        %1757 = vmatprep.subr.bf16.mxu0 0
        %1758 = vmatpush1.bf16.xpose.msra.mxu0 0
        %1759 = vmatprep.subr.bf16.mxu0 0
        %1760 = vmatpush1.bf16.xpose.msra.mxu0 0
        %1761 = vmatprep.subr.bf16.mxu0 0
        %1762 = vmatpush1.bf16.xpose.msra.mxu0 0
        %1763 = vmatprep.subr.bf16.mxu0 0
        %1764 = vmatpush1.bf16.xpose.msra.mxu0 0
        %1765 = vmatprep.subr.bf16.mxu0 0
        %1766 = vmatpush1.bf16.xpose.msra.mxu0 0
        %1767 = vmatprep.subr.bf16.mxu0 0
        %1768 = vmatpush1.bf16.xpose.msra.mxu0 0
        %1769 = vmatprep.subr.bf16.mxu0 0
        %1770 = vmatpush1.bf16.xpose.msra.mxu0 0
        %1771 = vmatprep.subr.bf16.mxu0 0
        %1772 = vmatpush1.bf16.xpose.msra.mxu0 0
        %1773 = vmatprep.subr.bf16.mxu0 0
        %1774 = vmatpush1.bf16.xpose.msra.mxu0 0
        %1775 = vmatprep.subr.bf16.mxu0 0
        %1776 = vmatpush1.bf16.xpose.msra.mxu0 0
        %1777 = vmatprep.subr.bf16.mxu0 0
        %1778 = vmatpush1.bf16.xpose.msra.mxu0 0
        %1779 = vmatprep.subr.bf16.mxu0 0
        %1780 = vmatpush1.bf16.xpose.msra.mxu0 0
        %1781 = vmatprep.subr.bf16.mxu0 0
        %1782 = vmatpush1.bf16.xpose.msra.mxu0 0
        %1783 = vmatprep.mubr.bf16.mxu0 0
        %1784 = vmatmul.mubr.bf16.gmra.mrb[0].mxu0 %v1495
        %v1785 = vpop.f32.mrb[0].mxu0
        %v1786 = vadd.f32 0.0, %v1785
        %v1787 = vpop.f32.mrb[0].mxu0
        %v1788 = vpop.f32.mrb[0].mxu0
        %v1789 = vadd.f32 0.0, %v1788
        %v1790 = vpop.f32.mrb[0].mxu0
        %1791 = vdwg.mxu0
        %1792 = vmatprep.subr.bf16.mxu0 0
        %1793 = vmatpush1.bf16.xpose.msra.mxu0 %v1504
        %1794 = vmatprep.subr.bf16.mxu0 0
        %1795 = vmatpush1.bf16.xpose.msra.mxu0 0
        %1796 = vmatprep.subr.bf16.mxu0 0
        %1797 = vmatpush1.bf16.xpose.msra.mxu0 0
        %1798 = vmatprep.subr.bf16.mxu0 0
        %1799 = vmatpush1.bf16.xpose.msra.mxu0 0
        %1800 = vmatprep.subr.bf16.mxu0 0
        %1801 = vmatpush1.bf16.xpose.msra.mxu0 0
        %1802 = vmatprep.subr.bf16.mxu0 0
        %1803 = vmatpush1.bf16.xpose.msra.mxu0 0
        %1804 = vmatprep.subr.bf16.mxu0 0
        %1805 = vmatpush1.bf16.xpose.msra.mxu0 0
        %1806 = vmatprep.subr.bf16.mxu0 0
        %1807 = vmatpush1.bf16.xpose.msra.mxu0 0
        %1808 = vmatprep.subr.bf16.mxu0 0
        %1809 = vmatpush1.bf16.xpose.msra.mxu0 0
        %1810 = vmatprep.subr.bf16.mxu0 0
        %1811 = vmatpush1.bf16.xpose.msra.mxu0 0
        %1812 = vmatprep.subr.bf16.mxu0 0
        %1813 = vmatpush1.bf16.xpose.msra.mxu0 0
        %1814 = vmatprep.subr.bf16.mxu0 0
        %1815 = vmatpush1.bf16.xpose.msra.mxu0 0
        %1816 = vmatprep.subr.bf16.mxu0 0
        %1817 = vmatpush1.bf16.xpose.msra.mxu0 0
        %1818 = vmatprep.subr.bf16.mxu0 0
        %1819 = vmatpush1.bf16.xpose.msra.mxu0 0
        %1820 = vmatprep.subr.bf16.mxu0 0
        %1821 = vmatpush1.bf16.xpose.msra.mxu0 0
        %1822 = vmatprep.subr.bf16.mxu0 0
        %1823 = vmatpush1.bf16.xpose.msra.mxu0 0
        %1824 = vmatprep.mubr.bf16.mxu0 0
        %1825 = vmatmul.mubr.bf16.gmra.mrb[0].mxu0 %v1496
        %v1826 = vpop.f32.mrb[0].mxu0
        %v1827 = vadd.f32 0.0, %v1826
        %v1828 = vpop.f32.mrb[0].mxu0
        %v1829 = vpop.f32.mrb[0].mxu0
        %v1830 = vadd.f32 0.0, %v1829
        %v1831 = vpop.f32.mrb[0].mxu0
        %1832 = vdwg.mxu0
        %vm1833 = vcmask 130048
        %v1834 = vsel %vm1833, %v1540, -inf
        %1835 = vmax.xlane.f32.xlu0 %v1834
        %v1836 = vpop.xlane.xlu0 %1835
        %v1837 = vsel %vm1833, %v1543, -inf
        %1838 = vmax.xlane.f32.xlu0 %v1837
        %v1839 = vpop.xlane.xlu0 %1838
        %v1840 = vsel %vm1833, %v1581, -inf
        %1841 = vmax.xlane.f32.xlu0 %v1840
        %v1842 = vpop.xlane.xlu0 %1841
        %v1843 = vsel %vm1833, %v1584, -inf
        %1844 = vmax.xlane.f32.xlu0 %v1843
        %v1845 = vpop.xlane.xlu0 %1844
        %v1846 = vsel %vm1833, %v1622, -inf
        %1847 = vmax.xlane.f32.xlu0 %v1846
        %v1848 = vpop.xlane.xlu0 %1847
        %v1849 = vsel %vm1833, %v1625, -inf
        %1850 = vmax.xlane.f32.xlu0 %v1849
        %v1851 = vpop.xlane.xlu0 %1850
        %v1852 = vsel %vm1833, %v1663, -inf
        %1853 = vmax.xlane.f32.xlu0 %v1852
        %v1854 = vpop.xlane.xlu0 %1853
        %v1855 = vsel %vm1833, %v1666, -inf
        %1856 = vmax.xlane.f32.xlu0 %v1855
        %v1857 = vpop.xlane.xlu0 %1856
        %v1858 = vsel %vm1833, %v1704, -inf
        %1859 = vmax.xlane.f32.xlu0 %v1858
        %v1860 = vpop.xlane.xlu0 %1859
        %v1861 = vsel %vm1833, %v1707, -inf
        %1862 = vmax.xlane.f32.xlu0 %v1861
        %v1863 = vpop.xlane.xlu0 %1862
        %v1864 = vsel %vm1833, %v1745, -inf
        %1865 = vmax.xlane.f32.xlu0 %v1864
        %v1866 = vpop.xlane.xlu0 %1865
        %v1867 = vsel %vm1833, %v1748, -inf
        %1868 = vmax.xlane.f32.xlu0 %v1867
        %v1869 = vpop.xlane.xlu0 %1868
        %v1870 = vsel %vm1833, %v1786, -inf
        %1871 = vmax.xlane.f32.xlu0 %v1870
        %v1872 = vpop.xlane.xlu0 %1871
        %v1873 = vsel %vm1833, %v1789, -inf
        %1874 = vmax.xlane.f32.xlu0 %v1873
        %v1875 = vpop.xlane.xlu0 %1874
        %v1876 = vsel %vm1833, %v1827, -inf
        %1877 = vmax.xlane.f32.xlu0 %v1876
        %v1878 = vpop.xlane.xlu0 %1877
        %v1879 = vsel %vm1833, %v1830, -inf
        %1880 = vmax.xlane.f32.xlu0 %v1879
        %v1881 = vpop.xlane.xlu0 %1880
        %v1882 = vsub.f32 %v1540, %v1836
        %v1883 = vsub.f32 %v1543, %v1839
        %v1884 = vsub.f32 %v1581, %v1842
        %v1885 = vsub.f32 %v1584, %v1845
        %v1886 = vsub.f32 %v1622, %v1848
        %v1887 = vsub.f32 %v1625, %v1851
        %v1888 = vsub.f32 %v1663, %v1854
        %v1889 = vsub.f32 %v1666, %v1857
        %v1890 = vsub.f32 %v1704, %v1860
        %v1891 = vsub.f32 %v1707, %v1863
        %v1892 = vsub.f32 %v1745, %v1866
        %v1893 = vsub.f32 %v1748, %v1869
        %v1894 = vsub.f32 %v1786, %v1872
        %v1895 = vsub.f32 %v1789, %v1875
        %v1896 = vsub.f32 %v1827, %v1878
        %v1897 = vsub.f32 %v1830, %v1881
        %v1898 = vmul.f32 %v1882, 1.442695
        %v1899 = vpow.pop %v1898
        %v1900 = vmul.f32 %v1883, 1.442695
        %v1901 = vpow.pop %v1900
        %v1902 = vmul.f32 %v1884, 1.442695
        %v1903 = vpow.pop %v1902
        %v1904 = vmul.f32 %v1885, 1.442695
        %v1905 = vpow.pop %v1904
        %v1906 = vmul.f32 %v1886, 1.442695
        %v1907 = vpow.pop %v1906
        %v1908 = vmul.f32 %v1887, 1.442695
        %v1909 = vpow.pop %v1908
        %v1910 = vmul.f32 %v1888, 1.442695
        %v1911 = vpow.pop %v1910
        %v1912 = vmul.f32 %v1889, 1.442695
        %v1913 = vpow.pop %v1912
        %v1914 = vmul.f32 %v1890, 1.442695
        %v1915 = vpow.pop %v1914
        %v1916 = vmul.f32 %v1891, 1.442695
        %v1917 = vpow.pop %v1916
        %v1918 = vmul.f32 %v1892, 1.442695
        %v1919 = vpow.pop %v1918
        %v1920 = vmul.f32 %v1893, 1.442695
        %v1921 = vpow.pop %v1920
        %v1922 = vmul.f32 %v1894, 1.442695
        %v1923 = vpow.pop %v1922
        %v1924 = vmul.f32 %v1895, 1.442695
        %v1925 = vpow.pop %v1924
        %v1926 = vmul.f32 %v1896, 1.442695
        %v1927 = vpow.pop %v1926
        %v1928 = vmul.f32 %v1897, 1.442695
        %v1929 = vpow.pop %v1928
        %v1930 = vsel %vm1833, %v1899, 0.0
        %1931 = vadd.xlane.f32.xlu0 %v1930
        %v1932 = vpop.xlane.xlu0 %1931
        %v1933 = vsel %vm1833, %v1901, 0.0
        %1934 = vadd.xlane.f32.xlu0 %v1933
        %v1935 = vpop.xlane.xlu0 %1934
        %v1936 = vsel %vm1833, %v1903, 0.0
        %1937 = vadd.xlane.f32.xlu0 %v1936
        %v1938 = vpop.xlane.xlu0 %1937
        %v1939 = vsel %vm1833, %v1905, 0.0
        %1940 = vadd.xlane.f32.xlu0 %v1939
        %v1941 = vpop.xlane.xlu0 %1940
        %v1942 = vsel %vm1833, %v1907, 0.0
        %1943 = vadd.xlane.f32.xlu0 %v1942
        %v1944 = vpop.xlane.xlu0 %1943
        %v1945 = vsel %vm1833, %v1909, 0.0
        %1946 = vadd.xlane.f32.xlu0 %v1945
        %v1947 = vpop.xlane.xlu0 %1946
        %v1948 = vsel %vm1833, %v1911, 0.0
        %1949 = vadd.xlane.f32.xlu0 %v1948
        %v1950 = vpop.xlane.xlu0 %1949
        %v1951 = vsel %vm1833, %v1913, 0.0
        %1952 = vadd.xlane.f32.xlu0 %v1951
        %v1953 = vpop.xlane.xlu0 %1952
        %v1954 = vsel %vm1833, %v1915, 0.0
        %1955 = vadd.xlane.f32.xlu0 %v1954
        %v1956 = vpop.xlane.xlu0 %1955
        %v1957 = vsel %vm1833, %v1917, 0.0
        %1958 = vadd.xlane.f32.xlu0 %v1957
        %v1959 = vpop.xlane.xlu0 %1958
        %v1960 = vsel %vm1833, %v1919, 0.0
        %1961 = vadd.xlane.f32.xlu0 %v1960
        %v1962 = vpop.xlane.xlu0 %1961
        %v1963 = vsel %vm1833, %v1921, 0.0
        %1964 = vadd.xlane.f32.xlu0 %v1963
        %v1965 = vpop.xlane.xlu0 %1964
        %v1966 = vsel %vm1833, %v1923, 0.0
        %1967 = vadd.xlane.f32.xlu0 %v1966
        %v1968 = vpop.xlane.xlu0 %1967
        %v1969 = vsel %vm1833, %v1925, 0.0
        %1970 = vadd.xlane.f32.xlu0 %v1969
        %v1971 = vpop.xlane.xlu0 %1970
        %v1972 = vsel %vm1833, %v1927, 0.0
        %1973 = vadd.xlane.f32.xlu0 %v1972
        %v1974 = vpop.xlane.xlu0 %1973
        %v1975 = vsel %vm1833, %v1929, 0.0
        %1976 = vadd.xlane.f32.xlu0 %v1975
        %v1977 = vpop.xlane.xlu0 %1976
        %v1978 = vrcp.pop %v1932
        %v1979 = vrcp.pop %v1935
        %v1980 = vrcp.pop %v1938
        %v1981 = vrcp.pop %v1941
        %v1982 = vrcp.pop %v1944
        %v1983 = vrcp.pop %v1947
        %v1984 = vrcp.pop %v1950
        %v1985 = vrcp.pop %v1953
        %v1986 = vrcp.pop %v1956
        %v1987 = vrcp.pop %v1959
        %v1988 = vrcp.pop %v1962
        %v1989 = vrcp.pop %v1965
        %v1990 = vrcp.pop %v1968
        %v1991 = vrcp.pop %v1971
        %v1992 = vrcp.pop %v1974
        %v1993 = vrcp.pop %v1977
        %v1994 = vmul.f32 %v1899, %v1978
        %v1995 = vmul.f32 %v1901, %v1979
        %v1996 = vmul.f32 %v1903, %v1980
        %v1997 = vmul.f32 %v1905, %v1981
        %v1998 = vmul.f32 %v1907, %v1982
        %v1999 = vmul.f32 %v1909, %v1983
        %v2000 = vmul.f32 %v1911, %v1984
        %v2001 = vmul.f32 %v1913, %v1985
        %v2002 = vmul.f32 %v1915, %v1986
        %v2003 = vmul.f32 %v1917, %v1987
        %v2004 = vmul.f32 %v1919, %v1988
        %v2005 = vmul.f32 %v1921, %v1989
        %v2006 = vmul.f32 %v1923, %v1990
        %v2007 = vmul.f32 %v1925, %v1991
        %v2008 = vmul.f32 %v1927, %v1992
        %v2009 = vmul.f32 %v1929, %v1993
        %v2010 = vpack.c.bf16 %v1995, %v1994
        %v2011 = vpack.c.bf16 %v1997, %v1996
        %v2012 = vpack.c.bf16 %v1999, %v1998
        %v2013 = vpack.c.bf16 %v2001, %v2000
        %v2014 = vpack.c.bf16 %v2003, %v2002
        %v2015 = vpack.c.bf16 %v2005, %v2004
        %v2016 = vpack.c.bf16 %v2007, %v2006
        %v2017 = vpack.c.bf16 %v2009, %v2008
        %v2018 = vpack.c.bf16 %v1474, %v1473
        %v2019 = vpack.c.bf16 %v1476, %v1475
        %v2020 = vpack.c.bf16 %v1478, %v1477
        %v2021 = vpack.c.bf16 %v1480, %v1479
        %v2022 = vpack.c.bf16 %v1482, %v1481
        %v2023 = vpack.c.bf16 %v1484, %v1483
        %v2024 = vpack.c.bf16 %v1486, %v1485
        %v2025 = vpack.c.bf16 %v1488, %v1487
        %v2027 = vsel %vm1833, %v2010, 0
        %2029 = vmatprep.subr.bf16.mxu0 0
        %2030 = vmatpush1.bf16.msra.mxu0 %v2018
        %2031 = vmatprep.subr.bf16.mxu0 0
        %2032 = vmatpush1.bf16.msra.mxu0 0
        %2033 = vmatprep.subr.bf16.mxu0 0
        %2034 = vmatpush1.bf16.msra.mxu0 0
        %2035 = vmatprep.subr.bf16.mxu0 0
        %2036 = vmatpush1.bf16.msra.mxu0 0
        %2037 = vmatprep.subr.bf16.mxu0 0
        %2038 = vmatpush1.bf16.msra.mxu0 0
        %2039 = vmatprep.subr.bf16.mxu0 0
        %2040 = vmatpush1.bf16.msra.mxu0 0
        %2041 = vmatprep.subr.bf16.mxu0 0
        %2042 = vmatpush1.bf16.msra.mxu0 0
        %2043 = vmatprep.subr.bf16.mxu0 0
        %2044 = vmatpush1.bf16.msra.mxu0 0
        %2045 = vmatprep.subr.bf16.mxu0 0
        %2046 = vmatpush1.bf16.msra.mxu0 0
        %2047 = vmatprep.subr.bf16.mxu0 0
        %2048 = vmatpush1.bf16.msra.mxu0 0
        %2049 = vmatprep.subr.bf16.mxu0 0
        %2050 = vmatpush1.bf16.msra.mxu0 0
        %2051 = vmatprep.subr.bf16.mxu0 0
        %2052 = vmatpush1.bf16.msra.mxu0 0
        %2053 = vmatprep.subr.bf16.mxu0 0
        %2054 = vmatpush1.bf16.msra.mxu0 0
        %2055 = vmatprep.subr.bf16.mxu0 0
        %2056 = vmatpush1.bf16.msra.mxu0 0
        %2057 = vmatprep.subr.bf16.mxu0 0
        %2058 = vmatpush1.bf16.msra.mxu0 0
        %2059 = vmatprep.subr.bf16.mxu0 0
        %2060 = vmatpush1.bf16.msra.mxu0 0
        %2061 = vmatprep.mubr.bf16.mxu0 0
        %2062 = vmatmul.mubr.bf16.gmra.mrb[0].mxu0 %v2027
        %v2063 = vpop.f32.mrb[0].mxu0
        %v2064 = vadd.f32 0.0, %v2063
        %v2065 = vpop.f32.mrb[0].mxu0
        %v2066 = vpop.f32.mrb[0].mxu0
        %v2067 = vadd.f32 0.0, %v2066
        %v2068 = vpop.f32.mrb[0].mxu0
        %2069 = vdwg.mxu0
        %v2071 = vsel %vm1833, %v2011, 0
        %2073 = vmatprep.subr.bf16.mxu0 0
        %2074 = vmatpush1.bf16.msra.mxu0 %v2019
        %2075 = vmatprep.subr.bf16.mxu0 0
        %2076 = vmatpush1.bf16.msra.mxu0 0
        %2077 = vmatprep.subr.bf16.mxu0 0
        %2078 = vmatpush1.bf16.msra.mxu0 0
        %2079 = vmatprep.subr.bf16.mxu0 0
        %2080 = vmatpush1.bf16.msra.mxu0 0
        %2081 = vmatprep.subr.bf16.mxu0 0
        %2082 = vmatpush1.bf16.msra.mxu0 0
        %2083 = vmatprep.subr.bf16.mxu0 0
        %2084 = vmatpush1.bf16.msra.mxu0 0
        %2085 = vmatprep.subr.bf16.mxu0 0
        %2086 = vmatpush1.bf16.msra.mxu0 0
        %2087 = vmatprep.subr.bf16.mxu0 0
        %2088 = vmatpush1.bf16.msra.mxu0 0
        %2089 = vmatprep.subr.bf16.mxu0 0
        %2090 = vmatpush1.bf16.msra.mxu0 0
        %2091 = vmatprep.subr.bf16.mxu0 0
        %2092 = vmatpush1.bf16.msra.mxu0 0
        %2093 = vmatprep.subr.bf16.mxu0 0
        %2094 = vmatpush1.bf16.msra.mxu0 0
        %2095 = vmatprep.subr.bf16.mxu0 0
        %2096 = vmatpush1.bf16.msra.mxu0 0
        %2097 = vmatprep.subr.bf16.mxu0 0
        %2098 = vmatpush1.bf16.msra.mxu0 0
        %2099 = vmatprep.subr.bf16.mxu0 0
        %2100 = vmatpush1.bf16.msra.mxu0 0
        %2101 = vmatprep.subr.bf16.mxu0 0
        %2102 = vmatpush1.bf16.msra.mxu0 0
        %2103 = vmatprep.subr.bf16.mxu0 0
        %2104 = vmatpush1.bf16.msra.mxu0 0
        %2105 = vmatprep.mubr.bf16.mxu0 0
        %2106 = vmatmul.mubr.bf16.gmra.mrb[0].mxu0 %v2071
        %v2107 = vpop.f32.mrb[0].mxu0
        %v2108 = vadd.f32 0.0, %v2107
        %v2109 = vpop.f32.mrb[0].mxu0
        %v2110 = vpop.f32.mrb[0].mxu0
        %v2111 = vadd.f32 0.0, %v2110
        %v2112 = vpop.f32.mrb[0].mxu0
        %2113 = vdwg.mxu0
        %v2115 = vsel %vm1833, %v2012, 0
        %2117 = vmatprep.subr.bf16.mxu0 0
        %2118 = vmatpush1.bf16.msra.mxu0 %v2020
        %2119 = vmatprep.subr.bf16.mxu0 0
        %2120 = vmatpush1.bf16.msra.mxu0 0
        %2121 = vmatprep.subr.bf16.mxu0 0
        %2122 = vmatpush1.bf16.msra.mxu0 0
        %2123 = vmatprep.subr.bf16.mxu0 0
        %2124 = vmatpush1.bf16.msra.mxu0 0
        %2125 = vmatprep.subr.bf16.mxu0 0
        %2126 = vmatpush1.bf16.msra.mxu0 0
        %2127 = vmatprep.subr.bf16.mxu0 0
        %2128 = vmatpush1.bf16.msra.mxu0 0
        %2129 = vmatprep.subr.bf16.mxu0 0
        %2130 = vmatpush1.bf16.msra.mxu0 0
        %2131 = vmatprep.subr.bf16.mxu0 0
        %2132 = vmatpush1.bf16.msra.mxu0 0
        %2133 = vmatprep.subr.bf16.mxu0 0
        %2134 = vmatpush1.bf16.msra.mxu0 0
        %2135 = vmatprep.subr.bf16.mxu0 0
        %2136 = vmatpush1.bf16.msra.mxu0 0
        %2137 = vmatprep.subr.bf16.mxu0 0
        %2138 = vmatpush1.bf16.msra.mxu0 0
        %2139 = vmatprep.subr.bf16.mxu0 0
        %2140 = vmatpush1.bf16.msra.mxu0 0
        %2141 = vmatprep.subr.bf16.mxu0 0
        %2142 = vmatpush1.bf16.msra.mxu0 0
        %2143 = vmatprep.subr.bf16.mxu0 0
        %2144 = vmatpush1.bf16.msra.mxu0 0
        %2145 = vmatprep.subr.bf16.mxu0 0
        %2146 = vmatpush1.bf16.msra.mxu0 0
        %2147 = vmatprep.subr.bf16.mxu0 0
        %2148 = vmatpush1.bf16.msra.mxu0 0
        %2149 = vmatprep.mubr.bf16.mxu0 0
        %2150 = vmatmul.mubr.bf16.gmra.mrb[0].mxu0 %v2115
        %v2151 = vpop.f32.mrb[0].mxu0
        %v2152 = vadd.f32 0.0, %v2151
        %v2153 = vpop.f32.mrb[0].mxu0
        %v2154 = vpop.f32.mrb[0].mxu0
        %v2155 = vadd.f32 0.0, %v2154
        %v2156 = vpop.f32.mrb[0].mxu0
        %2157 = vdwg.mxu0
        %v2159 = vsel %vm1833, %v2013, 0
        %2161 = vmatprep.subr.bf16.mxu0 0
        %2162 = vmatpush1.bf16.msra.mxu0 %v2021
        %2163 = vmatprep.subr.bf16.mxu0 0
        %2164 = vmatpush1.bf16.msra.mxu0 0
        %2165 = vmatprep.subr.bf16.mxu0 0
        %2166 = vmatpush1.bf16.msra.mxu0 0
        %2167 = vmatprep.subr.bf16.mxu0 0
        %2168 = vmatpush1.bf16.msra.mxu0 0
        %2169 = vmatprep.subr.bf16.mxu0 0
        %2170 = vmatpush1.bf16.msra.mxu0 0
        %2171 = vmatprep.subr.bf16.mxu0 0
        %2172 = vmatpush1.bf16.msra.mxu0 0
        %2173 = vmatprep.subr.bf16.mxu0 0
        %2174 = vmatpush1.bf16.msra.mxu0 0
        %2175 = vmatprep.subr.bf16.mxu0 0
        %2176 = vmatpush1.bf16.msra.mxu0 0
        %2177 = vmatprep.subr.bf16.mxu0 0
        %2178 = vmatpush1.bf16.msra.mxu0 0
        %2179 = vmatprep.subr.bf16.mxu0 0
        %2180 = vmatpush1.bf16.msra.mxu0 0
        %2181 = vmatprep.subr.bf16.mxu0 0
        %2182 = vmatpush1.bf16.msra.mxu0 0
        %2183 = vmatprep.subr.bf16.mxu0 0
        %2184 = vmatpush1.bf16.msra.mxu0 0
        %2185 = vmatprep.subr.bf16.mxu0 0
        %2186 = vmatpush1.bf16.msra.mxu0 0
        %2187 = vmatprep.subr.bf16.mxu0 0
        %2188 = vmatpush1.bf16.msra.mxu0 0
        %2189 = vmatprep.subr.bf16.mxu0 0
        %2190 = vmatpush1.bf16.msra.mxu0 0
        %2191 = vmatprep.subr.bf16.mxu0 0
        %2192 = vmatpush1.bf16.msra.mxu0 0
        %2193 = vmatprep.mubr.bf16.mxu0 0
        %2194 = vmatmul.mubr.bf16.gmra.mrb[0].mxu0 %v2159
        %v2195 = vpop.f32.mrb[0].mxu0
        %v2196 = vadd.f32 0.0, %v2195
        %v2197 = vpop.f32.mrb[0].mxu0
        %v2198 = vpop.f32.mrb[0].mxu0
        %v2199 = vadd.f32 0.0, %v2198
        %v2200 = vpop.f32.mrb[0].mxu0
        %2201 = vdwg.mxu0
        %v2203 = vsel %vm1833, %v2014, 0
        %2205 = vmatprep.subr.bf16.mxu0 0
        %2206 = vmatpush1.bf16.msra.mxu0 %v2022
        %2207 = vmatprep.subr.bf16.mxu0 0
        %2208 = vmatpush1.bf16.msra.mxu0 0
        %2209 = vmatprep.subr.bf16.mxu0 0
        %2210 = vmatpush1.bf16.msra.mxu0 0
        %2211 = vmatprep.subr.bf16.mxu0 0
        %2212 = vmatpush1.bf16.msra.mxu0 0
        %2213 = vmatprep.subr.bf16.mxu0 0
        %2214 = vmatpush1.bf16.msra.mxu0 0
        %2215 = vmatprep.subr.bf16.mxu0 0
        %2216 = vmatpush1.bf16.msra.mxu0 0
        %2217 = vmatprep.subr.bf16.mxu0 0
        %2218 = vmatpush1.bf16.msra.mxu0 0
        %2219 = vmatprep.subr.bf16.mxu0 0
        %2220 = vmatpush1.bf16.msra.mxu0 0
        %2221 = vmatprep.subr.bf16.mxu0 0
        %2222 = vmatpush1.bf16.msra.mxu0 0
        %2223 = vmatprep.subr.bf16.mxu0 0
        %2224 = vmatpush1.bf16.msra.mxu0 0
        %2225 = vmatprep.subr.bf16.mxu0 0
        %2226 = vmatpush1.bf16.msra.mxu0 0
        %2227 = vmatprep.subr.bf16.mxu0 0
        %2228 = vmatpush1.bf16.msra.mxu0 0
        %2229 = vmatprep.subr.bf16.mxu0 0
        %2230 = vmatpush1.bf16.msra.mxu0 0
        %2231 = vmatprep.subr.bf16.mxu0 0
        %2232 = vmatpush1.bf16.msra.mxu0 0
        %2233 = vmatprep.subr.bf16.mxu0 0
        %2234 = vmatpush1.bf16.msra.mxu0 0
        %2235 = vmatprep.subr.bf16.mxu0 0
        %2236 = vmatpush1.bf16.msra.mxu0 0
        %2237 = vmatprep.mubr.bf16.mxu0 0
        %2238 = vmatmul.mubr.bf16.gmra.mrb[0].mxu0 %v2203
        %v2239 = vpop.f32.mrb[0].mxu0
        %v2240 = vadd.f32 0.0, %v2239
        %v2241 = vpop.f32.mrb[0].mxu0
        %v2242 = vpop.f32.mrb[0].mxu0
        %v2243 = vadd.f32 0.0, %v2242
        %v2244 = vpop.f32.mrb[0].mxu0
        %2245 = vdwg.mxu0
        %v2247 = vsel %vm1833, %v2015, 0
        %2249 = vmatprep.subr.bf16.mxu0 0
        %2250 = vmatpush1.bf16.msra.mxu0 %v2023
        %2251 = vmatprep.subr.bf16.mxu0 0
        %2252 = vmatpush1.bf16.msra.mxu0 0
        %2253 = vmatprep.subr.bf16.mxu0 0
        %2254 = vmatpush1.bf16.msra.mxu0 0
        %2255 = vmatprep.subr.bf16.mxu0 0
        %2256 = vmatpush1.bf16.msra.mxu0 0
        %2257 = vmatprep.subr.bf16.mxu0 0
        %2258 = vmatpush1.bf16.msra.mxu0 0
        %2259 = vmatprep.subr.bf16.mxu0 0
        %2260 = vmatpush1.bf16.msra.mxu0 0
        %2261 = vmatprep.subr.bf16.mxu0 0
        %2262 = vmatpush1.bf16.msra.mxu0 0
        %2263 = vmatprep.subr.bf16.mxu0 0
        %2264 = vmatpush1.bf16.msra.mxu0 0
        %2265 = vmatprep.subr.bf16.mxu0 0
        %2266 = vmatpush1.bf16.msra.mxu0 0
        %2267 = vmatprep.subr.bf16.mxu0 0
        %2268 = vmatpush1.bf16.msra.mxu0 0
        %2269 = vmatprep.subr.bf16.mxu0 0
        %2270 = vmatpush1.bf16.msra.mxu0 0
        %2271 = vmatprep.subr.bf16.mxu0 0
        %2272 = vmatpush1.bf16.msra.mxu0 0
        %2273 = vmatprep.subr.bf16.mxu0 0
        %2274 = vmatpush1.bf16.msra.mxu0 0
        %2275 = vmatprep.subr.bf16.mxu0 0
        %2276 = vmatpush1.bf16.msra.mxu0 0
        %2277 = vmatprep.subr.bf16.mxu0 0
        %2278 = vmatpush1.bf16.msra.mxu0 0
        %2279 = vmatprep.subr.bf16.mxu0 0
        %2280 = vmatpush1.bf16.msra.mxu0 0
        %2281 = vmatprep.mubr.bf16.mxu0 0
        %2282 = vmatmul.mubr.bf16.gmra.mrb[0].mxu0 %v2247
        %v2283 = vpop.f32.mrb[0].mxu0
        %v2284 = vadd.f32 0.0, %v2283
        %v2285 = vpop.f32.mrb[0].mxu0
        %v2286 = vpop.f32.mrb[0].mxu0
        %v2287 = vadd.f32 0.0, %v2286
        %v2288 = vpop.f32.mrb[0].mxu0
        %2289 = vdwg.mxu0
        %v2291 = vsel %vm1833, %v2016, 0
        %2293 = vmatprep.subr.bf16.mxu0 0
        %2294 = vmatpush1.bf16.msra.mxu0 %v2024
        %2295 = vmatprep.subr.bf16.mxu0 0
        %2296 = vmatpush1.bf16.msra.mxu0 0
        %2297 = vmatprep.subr.bf16.mxu0 0
        %2298 = vmatpush1.bf16.msra.mxu0 0
        %2299 = vmatprep.subr.bf16.mxu0 0
        %2300 = vmatpush1.bf16.msra.mxu0 0
        %2301 = vmatprep.subr.bf16.mxu0 0
        %2302 = vmatpush1.bf16.msra.mxu0 0
        %2303 = vmatprep.subr.bf16.mxu0 0
        %2304 = vmatpush1.bf16.msra.mxu0 0
        %2305 = vmatprep.subr.bf16.mxu0 0
        %2306 = vmatpush1.bf16.msra.mxu0 0
        %2307 = vmatprep.subr.bf16.mxu0 0
        %2308 = vmatpush1.bf16.msra.mxu0 0
        %2309 = vmatprep.subr.bf16.mxu0 0
        %2310 = vmatpush1.bf16.msra.mxu0 0
        %2311 = vmatprep.subr.bf16.mxu0 0
        %2312 = vmatpush1.bf16.msra.mxu0 0
        %2313 = vmatprep.subr.bf16.mxu0 0
        %2314 = vmatpush1.bf16.msra.mxu0 0
        %2315 = vmatprep.subr.bf16.mxu0 0
        %2316 = vmatpush1.bf16.msra.mxu0 0
        %2317 = vmatprep.subr.bf16.mxu0 0
        %2318 = vmatpush1.bf16.msra.mxu0 0
        %2319 = vmatprep.subr.bf16.mxu0 0
        %2320 = vmatpush1.bf16.msra.mxu0 0
        %2321 = vmatprep.subr.bf16.mxu0 0
        %2322 = vmatpush1.bf16.msra.mxu0 0
        %2323 = vmatprep.subr.bf16.mxu0 0
        %2324 = vmatpush1.bf16.msra.mxu0 0
        %2325 = vmatprep.mubr.bf16.mxu0 0
        %2326 = vmatmul.mubr.bf16.gmra.mrb[0].mxu0 %v2291
        %v2327 = vpop.f32.mrb[0].mxu0
        %v2328 = vadd.f32 0.0, %v2327
        %v2329 = vpop.f32.mrb[0].mxu0
        %v2330 = vpop.f32.mrb[0].mxu0
        %v2331 = vadd.f32 0.0, %v2330
        %v2332 = vpop.f32.mrb[0].mxu0
        %2333 = vdwg.mxu0
        %v2335 = vsel %vm1833, %v2017, 0
        %2337 = vmatprep.subr.bf16.mxu0 0
        %2338 = vmatpush1.bf16.msra.mxu0 %v2025
        %2339 = vmatprep.subr.bf16.mxu0 0
        %2340 = vmatpush1.bf16.msra.mxu0 0
        %2341 = vmatprep.subr.bf16.mxu0 0
        %2342 = vmatpush1.bf16.msra.mxu0 0
        %2343 = vmatprep.subr.bf16.mxu0 0
        %2344 = vmatpush1.bf16.msra.mxu0 0
        %2345 = vmatprep.subr.bf16.mxu0 0
        %2346 = vmatpush1.bf16.msra.mxu0 0
        %2347 = vmatprep.subr.bf16.mxu0 0
        %2348 = vmatpush1.bf16.msra.mxu0 0
        %2349 = vmatprep.subr.bf16.mxu0 0
        %2350 = vmatpush1.bf16.msra.mxu0 0
        %2351 = vmatprep.subr.bf16.mxu0 0
        %2352 = vmatpush1.bf16.msra.mxu0 0
        %2353 = vmatprep.subr.bf16.mxu0 0
        %2354 = vmatpush1.bf16.msra.mxu0 0
        %2355 = vmatprep.subr.bf16.mxu0 0
        %2356 = vmatpush1.bf16.msra.mxu0 0
        %2357 = vmatprep.subr.bf16.mxu0 0
        %2358 = vmatpush1.bf16.msra.mxu0 0
        %2359 = vmatprep.subr.bf16.mxu0 0
        %2360 = vmatpush1.bf16.msra.mxu0 0
        %2361 = vmatprep.subr.bf16.mxu0 0
        %2362 = vmatpush1.bf16.msra.mxu0 0
        %2363 = vmatprep.subr.bf16.mxu0 0
        %2364 = vmatpush1.bf16.msra.mxu0 0
        %2365 = vmatprep.subr.bf16.mxu0 0
        %2366 = vmatpush1.bf16.msra.mxu0 0
        %2367 = vmatprep.subr.bf16.mxu0 0
        %2368 = vmatpush1.bf16.msra.mxu0 0
        %2369 = vmatprep.mubr.bf16.mxu0 0
        %2370 = vmatmul.mubr.bf16.gmra.mrb[0].mxu0 %v2335
        %v2371 = vpop.f32.mrb[0].mxu0
        %v2372 = vadd.f32 0.0, %v2371
        %v2373 = vpop.f32.mrb[0].mxu0
        %v2374 = vpop.f32.mrb[0].mxu0
        %v2375 = vadd.f32 0.0, %v2374
        %v2376 = vpop.f32.mrb[0].mxu0
        %2377 = vdwg.mxu0
        %v2378 = vpack.c.bf16 %v2067, %v2064
        %v2379 = vpack.c.bf16 %v2111, %v2108
        %v2380 = vpack.c.bf16 %v2155, %v2152
        %v2381 = vpack.c.bf16 %v2199, %v2196
        %v2382 = vpack.c.bf16 %v2243, %v2240
        %v2383 = vpack.c.bf16 %v2287, %v2284
        %v2384 = vpack.c.bf16 %v2331, %v2328
        %v2385 = vpack.c.bf16 %v2375, %v2372
        %v2386 = vld [vmem:[#allocation7] sm:$0xf]
        %v2387 = vld [vmem:[#allocation7 + $0x4] sm:$0xf]
        %v2388 = vld [vmem:[#allocation7 + $0x8] sm:$0xf]
        %v2389 = vld [vmem:[#allocation7 + $0xc] sm:$0xf]
        %v2390 = vld [vmem:[#allocation7 + $0x10] sm:$0xf]
        %v2391 = vld [vmem:[#allocation7 + $0x14] sm:$0xf]
        %v2392 = vld [vmem:[#allocation7 + $0x18] sm:$0xf]
        %v2393 = vld [vmem:[#allocation7 + $0x1c] sm:$0xf]
        %v2394 = vld [vmem:[#allocation7 + $0x20] sm:$0xf]
        %v2395 = vld [vmem:[#allocation7 + $0x24] sm:$0xf]
        %v2396 = vld [vmem:[#allocation7 + $0x28] sm:$0xf]
        %v2397 = vld [vmem:[#allocation7 + $0x2c] sm:$0xf]
        %v2398 = vld [vmem:[#allocation7 + $0x30] sm:$0xf]
        %v2399 = vld [vmem:[#allocation7 + $0x34] sm:$0xf]
        %v2400 = vld [vmem:[#allocation7 + $0x38] sm:$0xf]
        %v2401 = vld [vmem:[#allocation7 + $0x3c] sm:$0xf]
        %v2402 = vlaneseq
        %v2403 = vshrl.u32 %v2402, 7
        %v2404 = vsub.s32 3, %v2403
        %v2405 = vrot.slane %v1050, %v2404
        %v2422 = vunpack.c.l.b16 %v2386
        %v2423 = vunpack.c.l.b16 %v2387
        %v2424 = vunpack.c.l.b16 %v2388
        %v2425 = vunpack.c.l.b16 %v2389
        %v2426 = vunpack.c.l.b16 %v2390
        %v2427 = vunpack.c.l.b16 %v2391
        %v2428 = vunpack.c.l.b16 %v2392
        %v2429 = vunpack.c.l.b16 %v2393
        %v2430 = vunpack.c.l.b16 %v2394
        %v2431 = vunpack.c.l.b16 %v2395
        %v2432 = vunpack.c.l.b16 %v2396
        %v2433 = vunpack.c.l.b16 %v2397
        %v2434 = vunpack.c.l.b16 %v2398
        %v2435 = vunpack.c.l.b16 %v2399
        %v2436 = vunpack.c.l.b16 %v2400
        %v2437 = vunpack.c.l.b16 %v2401
        %v2438 = vpack.c.b16 %v2423, %v2422
        %v2439 = vpack.c.b16 %v2425, %v2424
        %v2440 = vpack.c.b16 %v2427, %v2426
        %v2441 = vpack.c.b16 %v2429, %v2428
        %v2442 = vpack.c.b16 %v2431, %v2430
        %v2443 = vpack.c.b16 %v2433, %v2432
        %v2444 = vpack.c.b16 %v2435, %v2434
        %v2445 = vpack.c.b16 %v2437, %v2436
        %2454 = vmatprep.subr.bf16.mxu0 0
        %2455 = vmatpush1.bf16.msra.mxu0 %v2438
        %2456 = vmatprep.subr.bf16.mxu0 0
        %2457 = vmatpush1.bf16.msra.mxu0 %v2439
        %2458 = vmatprep.subr.bf16.mxu0 0
        %2459 = vmatpush1.bf16.msra.mxu0 %v2440
        %2460 = vmatprep.subr.bf16.mxu0 0
        %2461 = vmatpush1.bf16.msra.mxu0 %v2441
        %2462 = vmatprep.subr.bf16.mxu0 0
        %2463 = vmatpush1.bf16.msra.mxu0 %v2442
        %2464 = vmatprep.subr.bf16.mxu0 0
        %2465 = vmatpush1.bf16.msra.mxu0 %v2443
        %2466 = vmatprep.subr.bf16.mxu0 0
        %2467 = vmatpush1.bf16.msra.mxu0 %v2444
        %2468 = vmatprep.subr.bf16.mxu0 0
        %2469 = vmatpush1.bf16.msra.mxu0 %v2445
        %2470 = vmatprep.subr.bf16.mxu0 0
        %2471 = vmatpush1.bf16.msra.mxu0 0
        %2472 = vmatprep.subr.bf16.mxu0 0
        %2473 = vmatpush1.bf16.msra.mxu0 0
        %2474 = vmatprep.subr.bf16.mxu0 0
        %2475 = vmatpush1.bf16.msra.mxu0 0
        %2476 = vmatprep.subr.bf16.mxu0 0
        %2477 = vmatpush1.bf16.msra.mxu0 0
        %2478 = vmatprep.subr.bf16.mxu0 0
        %2479 = vmatpush1.bf16.msra.mxu0 0
        %2480 = vmatprep.subr.bf16.mxu0 0
        %2481 = vmatpush1.bf16.msra.mxu0 0
        %2482 = vmatprep.subr.bf16.mxu0 0
        %2483 = vmatpush1.bf16.msra.mxu0 0
        %2484 = vmatprep.subr.bf16.mxu0 0
        %2485 = vmatpush1.bf16.msra.mxu0 0
        %2486 = vmatprep.mubr.bf16.mxu0 0
        %2487 = vmatmul.mubr.bf16.gmra.mrb[0].mxu0 %v2378
        %v2488 = vpop.f32.mrb[0].mxu0
        %v2489 = vadd.f32 %v2405, %v2488
        %v2490 = vpop.f32.mrb[0].mxu0
        %v2491 = vpop.f32.mrb[0].mxu0
        %v2492 = vadd.f32 %v2405, %v2491
        %v2493 = vpop.f32.mrb[0].mxu0
        %2494 = vmatprep.mubr.bf16.mxu0 0
        %2495 = vmatmul.mubr.bf16.gmra.mrb[0].mxu0 %v2379
        %v2496 = vpop.f32.mrb[0].mxu0
        %v2497 = vadd.f32 %v2405, %v2496
        %v2498 = vpop.f32.mrb[0].mxu0
        %v2499 = vpop.f32.mrb[0].mxu0
        %v2500 = vadd.f32 %v2405, %v2499
        %v2501 = vpop.f32.mrb[0].mxu0
        %2502 = vmatprep.mubr.bf16.mxu0 0
        %2503 = vmatmul.mubr.bf16.gmra.mrb[0].mxu0 %v2380
        %v2504 = vpop.f32.mrb[0].mxu0
        %v2505 = vadd.f32 %v2405, %v2504
        %v2506 = vpop.f32.mrb[0].mxu0
        %v2507 = vpop.f32.mrb[0].mxu0
        %v2508 = vadd.f32 %v2405, %v2507
        %v2509 = vpop.f32.mrb[0].mxu0
        %2510 = vmatprep.mubr.bf16.mxu0 0
        %2511 = vmatmul.mubr.bf16.gmra.mrb[0].mxu0 %v2381
        %v2512 = vpop.f32.mrb[0].mxu0
        %v2513 = vadd.f32 %v2405, %v2512
        %v2514 = vpop.f32.mrb[0].mxu0
        %v2515 = vpop.f32.mrb[0].mxu0
        %v2516 = vadd.f32 %v2405, %v2515
        %v2517 = vpop.f32.mrb[0].mxu0
        %2518 = vmatprep.mubr.bf16.mxu0 0
        %2519 = vmatmul.mubr.bf16.gmra.mrb[0].mxu0 %v2382
        %v2520 = vpop.f32.mrb[0].mxu0
        %v2521 = vadd.f32 %v2405, %v2520
        %v2522 = vpop.f32.mrb[0].mxu0
        %v2523 = vpop.f32.mrb[0].mxu0
        %v2524 = vadd.f32 %v2405, %v2523
        %v2525 = vpop.f32.mrb[0].mxu0
        %2526 = vmatprep.mubr.bf16.mxu0 0
        %2527 = vmatmul.mubr.bf16.gmra.mrb[0].mxu0 %v2383
        %v2528 = vpop.f32.mrb[0].mxu0
        %v2529 = vadd.f32 %v2405, %v2528
        %v2530 = vpop.f32.mrb[0].mxu0
        %v2531 = vpop.f32.mrb[0].mxu0
        %v2532 = vadd.f32 %v2405, %v2531
        %v2533 = vpop.f32.mrb[0].mxu0
        %2534 = vmatprep.mubr.bf16.mxu0 0
        %2535 = vmatmul.mubr.bf16.gmra.mrb[0].mxu0 %v2384
        %v2536 = vpop.f32.mrb[0].mxu0
        %v2537 = vadd.f32 %v2405, %v2536
        %v2538 = vpop.f32.mrb[0].mxu0
        %v2539 = vpop.f32.mrb[0].mxu0
        %v2540 = vadd.f32 %v2405, %v2539
        %v2541 = vpop.f32.mrb[0].mxu0
        %2542 = vmatprep.mubr.bf16.mxu0 0
        %2543 = vmatmul.mubr.bf16.gmra.mrb[0].mxu0 %v2385
        %v2544 = vpop.f32.mrb[0].mxu0
        %v2545 = vadd.f32 %v2405, %v2544
        %v2546 = vpop.f32.mrb[0].mxu0
        %v2547 = vpop.f32.mrb[0].mxu0
        %v2548 = vadd.f32 %v2405, %v2547
        %v2549 = vpop.f32.mrb[0].mxu0
        %2550 = vdwg.mxu0
        %v2551 = vadd.f32 %v345, %v2489
        %v2552 = vadd.f32 %v346, %v2492
        %v2553 = vadd.f32 %v347, %v2497
        %v2554 = vadd.f32 %v348, %v2500
        %v2555 = vadd.f32 %v349, %v2505
        %v2556 = vadd.f32 %v350, %v2508
        %v2557 = vadd.f32 %v351, %v2513
        %v2558 = vadd.f32 %v352, %v2516
        %v2559 = vadd.f32 %v353, %v2521
        %v2560 = vadd.f32 %v354, %v2524
        %v2561 = vadd.f32 %v355, %v2529
        %v2562 = vadd.f32 %v356, %v2532
        %v2563 = vadd.f32 %v357, %v2537
        %v2564 = vadd.f32 %v358, %v2540
        %v2565 = vadd.f32 %v359, %v2545
        %v2566 = vadd.f32 %v360, %v2548
        %2567 = vst [vmem:[%s341] sm:$0xff] %v2551
        %2568 = vst [vmem:[%s341 + $0x8] sm:$0xff] %v2552
        %2569 = vst [vmem:[%s341 + $0x10] sm:$0xff] %v2553
        %2570 = vst [vmem:[%s341 + $0x18] sm:$0xff] %v2554
        %2571 = vst [vmem:[%s341 + $0x20] sm:$0xff] %v2555
        %2572 = vst [vmem:[%s341 + $0x28] sm:$0xff] %v2556
        %2573 = vst [vmem:[%s341 + $0x30] sm:$0xff] %v2557
        %2574 = vst [vmem:[%s341 + $0x38] sm:$0xff] %v2558
        %2575 = vst [vmem:[%s341 + $0x40] sm:$0xff] %v2559
        %2576 = vst [vmem:[%s341 + $0x48] sm:$0xff] %v2560
        %2577 = vst [vmem:[%s341 + $0x50] sm:$0xff] %v2561
        %2578 = vst [vmem:[%s341 + $0x58] sm:$0xff] %v2562
        %2579 = vst [vmem:[%s341 + $0x60] sm:$0xff] %v2563
        %2580 = vst [vmem:[%s341 + $0x68] sm:$0xff] %v2564
        %2581 = vst [vmem:[%s341 + $0x70] sm:$0xff] %v2565
        %2582 = vst [vmem:[%s341 + $0x78] sm:$0xff] %v2566
        %s2583 = sand.u32 %s165, 1
        %s2584 = scalar_lea.sflag [#allocation4], %s2583
        %s2585 = sand.u32 %s165, 1
        %s2586 = smul.addr %s2585, 128
        %s2587 = scalar_lea.vmem [#allocation13], %s2586
        // Predicated region
        $region69: #{tpu_custom_call.1} parent=43 // pred_check
          %p2588 = pneg %p175
        $region70: #{tpu_custom_call.1} parent=43 // pred_check_branch
          %2590 = sbr.rel (%p2588) target = $region72
        $region71: #{tpu_custom_call.1} parent=43 // pred_region
          %s2591 = smul.u32 8, %s26
          %s2593 = ssub.s32 2048, 2048
          %2594 = vsyncadd %s2584, %s2593
          %s2595 = smul.addr %s2591, 2
          %s2596 = smul.addr %s2595, 128
          %s2597 = scalar_lea.hbm %s6, %s2596
          %s2598 = sshll.u32 %s2587, 4
          %s2599 = int_to_ptr.vmem [resolvable:$true] %s2598
          %2604 = dma.vmem_to_hbm [thread:$0]  %s2599, 2048, %s2597, %s2584, 128, 128, 8
        $region72: #{tpu_custom_call.1} parent=43 // pred_fallthru
          _
      $region44: #{tpu_custom_call.1} parent=5 // pred_fallthru
        _
      %p2605 = scmp.le.s32.totalorder 2, %s21
      // Predicated region
      $region73: #{tpu_custom_call.1} parent=5 // pred_check
        %p2606 = pneg %p2605
      $region74: #{tpu_custom_call.1} parent=5 // pred_check_branch
        %2608 = sbr.rel (%p2606) target = $region76
      $region75: #{tpu_custom_call.1} parent=5 // pred_region
        %s2609 = ssub.s32 %s21, 2
        // Predicated region
        $region77: #{tpu_custom_call.1} parent=75 // pred_check
          %p2610 = pneg %p181
        $region78: #{tpu_custom_call.1} parent=75 // pred_check_branch
          %2612 = sbr.rel (%p2610) target = $region80
        $region79: #{tpu_custom_call.1} parent=75 // pred_region
          %s2613 = sand.u32 %s166, 1
          %s2614 = scalar_lea.sflag [#allocation4], %s2613
          %s2615 = sand.u32 %s166, 1
          %s2616 = smul.addr %s2615, 128
          %s2617 = scalar_lea.vmem [#allocation13], %s2616
          %2618 = dma.done %s2614, 2048
        $region80: #{tpu_custom_call.1} parent=75 // pred_fallthru
          _
      $region76: #{tpu_custom_call.1} parent=5 // pred_fallthru
        _
    $region6: #{tpu_custom_call.1} parent=1 // loop_footer
      %s25 = sadd.s32 1, %s21
    $region7: #{tpu_custom_call.1} parent=1 // loop_footer_branch
      %20 = sbr.rel target = $region3
    $region8: #{tpu_custom_call.1} parent=1 // loop_exit
      _
    %2619 = vsyncpa [#allocation3], 1
    %s2620 = scalar_lea.sflag [#allocation3], 1
    %2621 = vsyncpa %s2620, 1
    %2622 = vsyncpa [#allocation6], 1
    %2623 = vsyncpa [#allocation9], 1
    %2624 = vsyncpa [#allocation12], 1
    %2625 = vsyncpa [#allocation4], 1
    %s2626 = scalar_lea.sflag [#allocation4], 1
    %2627 = vsyncpa %s2626, 1

</llo_original>
